<compile_context>
chip_gen: v6e
topology: v6e:2x2x1
jax: 0.10.0
libtpu: 0.0.40
codegen_flags: <defaults>
</compile_context>

<pallas_src>
import jax
import jax.numpy as jnp
from jax.experimental import pallas as pl
from jax.experimental.pallas import tpu as pltpu

# ---------------- model hyper-parameters (small, self-consistent) -------------
BATCH = 2
SEQ = 8
HIDDEN = 128          # stands in for MiniLM's 384 (lane friendly)
NUM_HEADS = 4
HEAD_DIM = HIDDEN // NUM_HEADS
FFN = 256
NUM_LAYERS = 2
VOCAB = 64
LN_EPS = 1e-12        # BERT default
SCALE = 1.0 / (HEAD_DIM ** 0.5)


# ------------------------------- Pallas kernel --------------------------------
def _layernorm(x, gamma, beta):
    mu = jnp.mean(x, axis=-1, keepdims=True)
    var = jnp.mean((x - mu) ** 2, axis=-1, keepdims=True)
    return (x - mu) * jax.lax.rsqrt(var + LN_EPS) * gamma + beta


def encoder_stack_kernel(x_ref, mask_ref, wqkv_ref, bqkv_ref, wo_ref,
                         w1_ref, b1_ref, w2_ref, vec_ref, out_ref):
    """All NUM_LAYERS BERT encoder layers; batch flattened to (B*S, H) in VMEM."""
    x = x_ref[...]                  # (BS, H)   float32
    amask = mask_ref[...]           # (BS, BS)  additive block/padding mask

    for l in range(NUM_LAYERS):     # static unroll over layers (small L)
        vec = vec_ref[l]            # (8, H) packed small params
        bo, g1, be1 = vec[0:1], vec[1:2], vec[2:3]
        b2, g2, be2 = vec[3:4], vec[4:5], vec[5:6]

        # ---- fused Q/K/V projection: one lane-dense (BS,H)x(H,3H) MXU push ---
        qkv = jnp.dot(x.astype(jnp.bfloat16), wqkv_ref[l],
                      preferred_element_type=jnp.float32) + bqkv_ref[l]  # (BS,3H)

        # head-major views via static 32-lane slices (scale folded into Wq)
        def heads(off):
            return jnp.stack(
                [qkv[:, off + n * HEAD_DIM: off + (n + 1) * HEAD_DIM]
                 for n in range(NUM_HEADS)], axis=0)          # (NH, BS, dh)
        qh = heads(0)
        kh = heads(HIDDEN)
        vh = heads(2 * HIDDEN)

        # ---- attention over the flattened (B*S) axis (f32, tiny K) -----------
        # cross-batch pairs and padded keys are disabled by the additive mask
        s = jnp.einsum('nqd,nkd->nqk', qh, kh,
                       preferred_element_type=jnp.float32)    # (NH, BS, BS)
        s = s + amask                                         # broadcast over NH
        s = s - jnp.max(s, axis=-1, keepdims=True)
        p = jnp.exp(s)
        p = p * pl.reciprocal(jnp.sum(p, axis=-1, keepdims=True), approx=True)

        ctx = jnp.einsum('nqk,nkd->nqd', p, vh,
                         preferred_element_type=jnp.float32)  # (NH, BS, dh)

        # ---- output projection: merge heads on lanes, one (BS,H)x(H,H) push --
        ctx_flat = jnp.concatenate([ctx[n] for n in range(NUM_HEADS)], axis=-1)
        attn = jnp.dot(ctx_flat.astype(jnp.bfloat16), wo_ref[l],
                       preferred_element_type=jnp.float32) + bo          # (BS,H)

        h1 = _layernorm(x + attn, g1, be1)

        # ---- feed forward ------------------------------------------------------
        ff = jnp.dot(h1.astype(jnp.bfloat16), w1_ref[l],
                     preferred_element_type=jnp.float32) + b1_ref[l]
        # TODO(synk): HF MiniLM uses exact erf GELU; tanh approximation used here.
        ff = jax.nn.gelu(ff, approximate=True)
        ff = jnp.dot(ff.astype(jnp.bfloat16), w2_ref[l],
                     preferred_element_type=jnp.float32) + b2
        x = _layernorm(h1 + ff, g2, be2)

    out_ref[...] = x


def encoder_stack(x_flat, add_mask, kp):
    """Run the full encoder stack.  x_flat: (B*S, H), add_mask: (B*S, B*S)."""
    BS, H = x_flat.shape
    inputs = (x_flat, add_mask, kp["wqkv"], kp["bqkv"], kp["wo"],
              kp["w1"], kp["b1"], kp["w2"], kp["vec"])

    # Advisory cost hint for XLA scheduling around the custom call.
    flops = (2 * NUM_LAYERS * BS * HIDDEN * (3 * HIDDEN + HIDDEN + 2 * FFN)
             + 4 * NUM_LAYERS * NUM_HEADS * BS * BS * HEAD_DIM)
    transcendentals = NUM_LAYERS * (NUM_HEADS * BS * BS + BS * FFN)
    bytes_accessed = (sum(int(a.size) * jnp.dtype(a.dtype).itemsize for a in inputs)
                      + BS * H * 4)

    return pl.pallas_call(
        encoder_stack_kernel,
        out_shape=jax.ShapeDtypeStruct((BS, H), jnp.float32),
        # grid=() (single invocation): every operand is copied whole into VMEM
        # exactly once; no per-step pipeline overhead, no double buffering.
        in_specs=[pl.BlockSpec(memory_space=pltpu.MemorySpace.VMEM)] * len(inputs),
        out_specs=pl.BlockSpec(memory_space=pltpu.MemorySpace.VMEM),
        cost_estimate=pl.CostEstimate(flops=flops,
                                      transcendentals=transcendentals,
                                      bytes_accessed=bytes_accessed),
    )(*inputs)


# ----------------------------- parameter init ---------------------------------
def init_params(key):
    def nrm(k, shape):
        return (0.02 * jax.random.normal(k, shape)).astype(jnp.float32)

    keys = jax.random.split(key, 3 + NUM_LAYERS)
    params = {
        "word_emb": nrm(keys[0], (VOCAB, HIDDEN)),
        "pos_emb": nrm(keys[1], (SEQ, HIDDEN)),
        "type_emb": nrm(keys[2], (2, HIDDEN)),
        "emb_ln_g": jnp.ones((HIDDEN,), jnp.float32),
        "emb_ln_b": jnp.zeros((HIDDEN,), jnp.float32),
        "layers": [],
    }
    for l in range(NUM_LAYERS):
        lk = jax.random.split(keys[3 + l], 6)
        params["layers"].append({
            "wq": nrm(lk[0], (HIDDEN, HIDDEN)), "bq": jnp.zeros((HIDDEN,), jnp.float32),
            "wk": nrm(lk[1], (HIDDEN, HIDDEN)), "bk": jnp.zeros((HIDDEN,), jnp.float32),
            "wv": nrm(lk[2], (HIDDEN, HIDDEN)), "bv": jnp.zeros((HIDDEN,), jnp.float32),
            "wo": nrm(lk[3], (HIDDEN, HIDDEN)), "bo": jnp.zeros((HIDDEN,), jnp.float32),
            "ln1_g": jnp.ones((HIDDEN,), jnp.float32),
            "ln1_b": jnp.zeros((HIDDEN,), jnp.float32),
            "w1": nrm(lk[4], (HIDDEN, FFN)), "b1": jnp.zeros((FFN,), jnp.float32),
            "w2": nrm(lk[5], (FFN, HIDDEN)), "b2": jnp.zeros((HIDDEN,), jnp.float32),
            "ln2_g": jnp.ones((HIDDEN,), jnp.float32),
            "ln2_b": jnp.zeros((HIDDEN,), jnp.float32),
        })
    return params


def pack_kernel_params(params):
    """Repack per-layer BERT weights into the fused-kernel layouts (host side)."""
    wqkv, bqkv, wo, w1, b1, w2, vec = [], [], [], [], [], [], []
    for lp in params["layers"]:
        # Fold the 1/sqrt(dh) attention scale into the Q projection (free at init).
        wqkv.append(jnp.concatenate([lp["wq"] * SCALE, lp["wk"], lp["wv"]], axis=1))
        bqkv.append(jnp.concatenate([lp["bq"] * SCALE, lp["bk"], lp["bv"]]
                                    ).reshape(1, 3 * HIDDEN))
        wo.append(lp["wo"])                                  # (H, H) original layout
        w1.append(lp["w1"])
        b1.append(lp["b1"].reshape(1, FFN))
        w2.append(lp["w2"])
        pad = jnp.zeros_like(lp["bo"])
        vec.append(jnp.stack([lp["bo"], lp["ln1_g"], lp["ln1_b"],
                              lp["b2"], lp["ln2_g"], lp["ln2_b"], pad, pad]))
    return {
        "wqkv": jnp.stack(wqkv).astype(jnp.bfloat16),   # (L, H, 3H)
        "bqkv": jnp.stack(bqkv).astype(jnp.float32),    # (L, 1, 3H)
        "wo":   jnp.stack(wo).astype(jnp.bfloat16),     # (L, H, H)
        "w1":   jnp.stack(w1).astype(jnp.bfloat16),     # (L, H, F)
        "b1":   jnp.stack(b1).astype(jnp.float32),      # (L, 1, F)
        "w2":   jnp.stack(w2).astype(jnp.bfloat16),     # (L, F, H)
        "vec":  jnp.stack(vec).astype(jnp.float32),     # (L, 8, H)
    }


# ------------------------------- forward pass ----------------------------------
def us_encoder_forward(params, kernel_params, token_ids, attention_mask):
    """token_ids: (B, S) int32, attention_mask: (B, S) {0,1}.  Returns (B, H)."""
    B, S = token_ids.shape

    # Embedding lookup + LayerNorm (glue; gather has no natural tile pattern here).
    emb = (params["word_emb"][token_ids]
           + params["pos_emb"][None, :S, :]
           + params["type_emb"][0][None, None, :])
    mu = jnp.mean(emb, axis=-1, keepdims=True)
    var = jnp.mean((emb - mu) ** 2, axis=-1, keepdims=True)
    x = ((emb - mu) * jax.lax.rsqrt(var + LN_EPS)
         * params["emb_ln_g"] + params["emb_ln_b"]).astype(jnp.float32)
    x_flat = x.reshape(B * S, HIDDEN)

    # Combined additive mask over the flattened (B*S) token axis: disallow
    # attention across different batch elements and to padded key positions.
    batch_ids = jnp.repeat(jnp.arange(B), S)
    same_batch = batch_ids[:, None] == batch_ids[None, :]
    key_valid = attention_mask.reshape(B * S).astype(bool)[None, :]
    add_mask = jnp.where(same_batch & key_valid, 0.0, -1e9).astype(jnp.float32)

    # Transformer encoder stack: single fused Pallas kernel (hot path).
    y = encoder_stack(x_flat, add_mask, kernel_params).reshape(B, S, HIDDEN)

    # embeddings = outputs.last_hidden_state[:, 0, :]
    return y[:, 0, :]


# ----------------------------------- main --------------------------------------
if __name__ == "__main__":
    root = jax.random.PRNGKey(0)
    k_params, k_tok = jax.random.split(root)

    params = init_params(k_params)
    kernel_params = pack_kernel_params(params)

    # Synthetic "tokenized sentences": token ids + padding mask (second sentence padded).
    token_ids = jax.random.randint(k_tok, (BATCH, SEQ), minval=0, maxval=VOCAB,
                                   dtype=jnp.int32)
    attention_mask = jnp.array([[1, 1, 1, 1, 1, 1, 1, 1],
                                [1, 1, 1, 1, 1, 0, 0, 0]], dtype=jnp.int32)

    embeddings = us_encoder_forward(params, kernel_params, token_ids, attention_mask)
    embeddings = jax.block_until_ready(embeddings)

    assert embeddings.shape == (BATCH, HIDDEN)
    assert jnp.all(jnp.isfinite(embeddings))
    print("KERNEL_OK")
</pallas_src>

<mosaic_0001>
module attributes {stable_mosaic.version = 11 : i64} {
  func.func @encoder_stack_kernel(%arg0: memref<16x128xf32, #tpu.memory_space<vmem>>, %arg1: memref<16x16xf32, #tpu.memory_space<vmem>>, %arg2: memref<2x128x384xbf16, #tpu.memory_space<vmem>>, %arg3: memref<2x1x384xf32, #tpu.memory_space<vmem>>, %arg4: memref<2x128x128xbf16, #tpu.memory_space<vmem>>, %arg5: memref<2x128x256xbf16, #tpu.memory_space<vmem>>, %arg6: memref<2x1x256xf32, #tpu.memory_space<vmem>>, %arg7: memref<2x256x128xbf16, #tpu.memory_space<vmem>>, %arg8: memref<2x8x128xf32, #tpu.memory_space<vmem>>, %arg9: memref<16x128xf32, #tpu.memory_space<vmem>>) attributes {dimension_semantics = [], scalar_prefetch = 0 : i64, scratch_operands = 0 : i64, tpu.core_type = #tpu.core_type<tc>} {
    %c0 = arith.constant 0 : index
    %c0_0 = arith.constant 0 : index
    %0 = vector.load %arg0[%c0, %c0_0] : memref<16x128xf32, #tpu.memory_space<vmem>>, vector<16x128xf32>
    %c0_1 = arith.constant 0 : index
    %c0_2 = arith.constant 0 : index
    %1 = vector.load %arg1[%c0_1, %c0_2] : memref<16x16xf32, #tpu.memory_space<vmem>>, vector<16x16xf32>
    %c0_3 = arith.constant 0 : index
    %c0_4 = arith.constant 0 : index
    %c0_5 = arith.constant 0 : index
    %2 = vector.load %arg8[%c0_3, %c0_4, %c0_5] : memref<2x8x128xf32, #tpu.memory_space<vmem>>, vector<1x8x128xf32>
    %3 = vector.shape_cast %2 : vector<1x8x128xf32> to vector<8x128xf32>
    %4 = vector.extract_strided_slice %3 {offsets = [0, 0], sizes = [1, 128], strides = [1, 1]} : vector<8x128xf32> to vector<1x128xf32>
    %5 = vector.extract_strided_slice %3 {offsets = [1, 0], sizes = [1, 128], strides = [1, 1]} : vector<8x128xf32> to vector<1x128xf32>
    %6 = vector.extract_strided_slice %3 {offsets = [2, 0], sizes = [1, 128], strides = [1, 1]} : vector<8x128xf32> to vector<1x128xf32>
    %7 = vector.extract_strided_slice %3 {offsets = [3, 0], sizes = [1, 128], strides = [1, 1]} : vector<8x128xf32> to vector<1x128xf32>
    %8 = vector.extract_strided_slice %3 {offsets = [4, 0], sizes = [1, 128], strides = [1, 1]} : vector<8x128xf32> to vector<1x128xf32>
    %9 = vector.extract_strided_slice %3 {offsets = [5, 0], sizes = [1, 128], strides = [1, 1]} : vector<8x128xf32> to vector<1x128xf32>
    %10 = arith.truncf %0 : vector<16x128xf32> to vector<16x128xbf16>
    %c0_6 = arith.constant 0 : index
    %c0_7 = arith.constant 0 : index
    %c0_8 = arith.constant 0 : index
    %11 = vector.load %arg2[%c0_6, %c0_7, %c0_8] : memref<2x128x384xbf16, #tpu.memory_space<vmem>>, vector<1x128x384xbf16>
    %12 = vector.shape_cast %11 : vector<1x128x384xbf16> to vector<128x384xbf16>
    %cst = arith.constant dense<0.000000e+00> : vector<16x384xf32>
    %13 = tpu.matmul %10, %12, %cst {dimension_numbers = #tpu.dot_dimension_numbers<[1], [0], [0], [1], [0, 0, 1, 1], [], []>} : vector<16x128xbf16>, vector<128x384xbf16>, vector<16x384xf32> -> vector<16x384xf32>
    %c0_9 = arith.constant 0 : index
    %c0_10 = arith.constant 0 : index
    %c0_11 = arith.constant 0 : index
    %14 = vector.load %arg3[%c0_9, %c0_10, %c0_11] : memref<2x1x384xf32, #tpu.memory_space<vmem>>, vector<1x1x384xf32>
    %15 = vector.shape_cast %14 : vector<1x1x384xf32> to vector<1x384xf32>
    %16 = vector.broadcast %15 : vector<1x384xf32> to vector<16x384xf32>
    %17 = arith.addf %13, %16 : vector<16x384xf32>
    %18 = vector.extract_strided_slice %17 {offsets = [0, 0], sizes = [16, 32], strides = [1, 1]} : vector<16x384xf32> to vector<16x32xf32>
    %19 = vector.extract_strided_slice %17 {offsets = [0, 32], sizes = [16, 32], strides = [1, 1]} : vector<16x384xf32> to vector<16x32xf32>
    %20 = vector.extract_strided_slice %17 {offsets = [0, 64], sizes = [16, 32], strides = [1, 1]} : vector<16x384xf32> to vector<16x32xf32>
    %21 = vector.extract_strided_slice %17 {offsets = [0, 96], sizes = [16, 32], strides = [1, 1]} : vector<16x384xf32> to vector<16x32xf32>
    %22 = vector.shape_cast %18 : vector<16x32xf32> to vector<1x16x32xf32>
    %23 = vector.shape_cast %19 : vector<16x32xf32> to vector<1x16x32xf32>
    %24 = vector.shape_cast %20 : vector<16x32xf32> to vector<1x16x32xf32>
    %25 = vector.shape_cast %21 : vector<16x32xf32> to vector<1x16x32xf32>
    %26 = tpu.concatenate %22, %23, %24, %25 in 0 : vector<1x16x32xf32>, vector<1x16x32xf32>, vector<1x16x32xf32>, vector<1x16x32xf32> -> vector<4x16x32xf32>
    %27 = vector.extract_strided_slice %17 {offsets = [0, 128], sizes = [16, 32], strides = [1, 1]} : vector<16x384xf32> to vector<16x32xf32>
    %28 = vector.extract_strided_slice %17 {offsets = [0, 160], sizes = [16, 32], strides = [1, 1]} : vector<16x384xf32> to vector<16x32xf32>
    %29 = vector.extract_strided_slice %17 {offsets = [0, 192], sizes = [16, 32], strides = [1, 1]} : vector<16x384xf32> to vector<16x32xf32>
    %30 = vector.extract_strided_slice %17 {offsets = [0, 224], sizes = [16, 32], strides = [1, 1]} : vector<16x384xf32> to vector<16x32xf32>
    %31 = vector.shape_cast %27 : vector<16x32xf32> to vector<1x16x32xf32>
    %32 = vector.shape_cast %28 : vector<16x32xf32> to vector<1x16x32xf32>
    %33 = vector.shape_cast %29 : vector<16x32xf32> to vector<1x16x32xf32>
    %34 = vector.shape_cast %30 : vector<16x32xf32> to vector<1x16x32xf32>
    %35 = tpu.concatenate %31, %32, %33, %34 in 0 : vector<1x16x32xf32>, vector<1x16x32xf32>, vector<1x16x32xf32>, vector<1x16x32xf32> -> vector<4x16x32xf32>
    %36 = vector.extract_strided_slice %17 {offsets = [0, 256], sizes = [16, 32], strides = [1, 1]} : vector<16x384xf32> to vector<16x32xf32>
    %37 = vector.extract_strided_slice %17 {offsets = [0, 288], sizes = [16, 32], strides = [1, 1]} : vector<16x384xf32> to vector<16x32xf32>
    %38 = vector.extract_strided_slice %17 {offsets = [0, 320], sizes = [16, 32], strides = [1, 1]} : vector<16x384xf32> to vector<16x32xf32>
    %39 = vector.extract_strided_slice %17 {offsets = [0, 352], sizes = [16, 32], strides = [1, 1]} : vector<16x384xf32> to vector<16x32xf32>
    %40 = vector.shape_cast %36 : vector<16x32xf32> to vector<1x16x32xf32>
    %41 = vector.shape_cast %37 : vector<16x32xf32> to vector<1x16x32xf32>
    %42 = vector.shape_cast %38 : vector<16x32xf32> to vector<1x16x32xf32>
    %43 = vector.shape_cast %39 : vector<16x32xf32> to vector<1x16x32xf32>
    %44 = tpu.concatenate %40, %41, %42, %43 in 0 : vector<1x16x32xf32>, vector<1x16x32xf32>, vector<1x16x32xf32>, vector<1x16x32xf32> -> vector<4x16x32xf32>
    "tpu.trace_start"() <{level = 10 : i32, message = "nqd,nkd->nqk"}> : () -> ()
    %cst_12 = arith.constant dense<0.000000e+00> : vector<4x16x16xf32>
    %45 = tpu.matmul %26, %35, %cst_12 {dimension_numbers = #tpu.dot_dimension_numbers<[2], [2], [1], [1], [0, 0, 0, 1, 1, 1], [0], [0]>} : vector<4x16x32xf32>, vector<4x16x32xf32>, vector<4x16x16xf32> -> vector<4x16x16xf32>
    "tpu.trace_stop"() : () -> ()
    %46 = vector.shape_cast %1 : vector<16x16xf32> to vector<1x16x16xf32>
    %47 = vector.broadcast %46 : vector<1x16x16xf32> to vector<4x16x16xf32>
    %48 = arith.addf %45, %47 : vector<4x16x16xf32>
    %cst_13 = arith.constant dense<0xFF800000> : vector<4x16xf32>
    %49 = vector.multi_reduction <maximumf>, %48, %cst_13 [2] : vector<4x16x16xf32> to vector<4x16xf32>
    %50 = vector.shape_cast %49 : vector<4x16xf32> to vector<4x16x1xf32>
    %51 = vector.broadcast %50 : vector<4x16x1xf32> to vector<4x16x16xf32>
    %52 = arith.subf %48, %51 : vector<4x16x16xf32>
    %53 = math.exp %52 : vector<4x16x16xf32>
    %cst_14 = arith.constant dense<0.000000e+00> : vector<4x16xf32>
    %54 = vector.multi_reduction <add>, %53, %cst_14 [2] : vector<4x16x16xf32> to vector<4x16xf32>
    %55 = vector.shape_cast %54 : vector<4x16xf32> to vector<4x16x1xf32>
    %56 = tpu.reciprocal %55 {approx = true} : vector<4x16x1xf32> -> vector<4x16x1xf32>
    %57 = vector.broadcast %56 : vector<4x16x1xf32> to vector<4x16x16xf32>
    %58 = arith.mulf %53, %57 : vector<4x16x16xf32>
    "tpu.trace_start"() <{level = 10 : i32, message = "nqk,nkd->nqd"}> : () -> ()
    %cst_15 = arith.constant dense<0.000000e+00> : vector<4x16x32xf32>
    %59 = tpu.matmul %58, %44, %cst_15 {dimension_numbers = #tpu.dot_dimension_numbers<[2], [1], [1], [2], [0, 0, 0, 1, 1, 2], [0], [0]>} : vector<4x16x16xf32>, vector<4x16x32xf32>, vector<4x16x32xf32> -> vector<4x16x32xf32>
    "tpu.trace_stop"() : () -> ()
    %60 = vector.extract_strided_slice %59 {offsets = [0, 0, 0], sizes = [1, 16, 32], strides = [1, 1, 1]} : vector<4x16x32xf32> to vector<1x16x32xf32>
    %61 = vector.shape_cast %60 : vector<1x16x32xf32> to vector<16x32xf32>
    %62 = vector.extract_strided_slice %59 {offsets = [1, 0, 0], sizes = [1, 16, 32], strides = [1, 1, 1]} : vector<4x16x32xf32> to vector<1x16x32xf32>
    %63 = vector.shape_cast %62 : vector<1x16x32xf32> to vector<16x32xf32>
    %64 = vector.extract_strided_slice %59 {offsets = [2, 0, 0], sizes = [1, 16, 32], strides = [1, 1, 1]} : vector<4x16x32xf32> to vector<1x16x32xf32>
    %65 = vector.shape_cast %64 : vector<1x16x32xf32> to vector<16x32xf32>
    %66 = vector.extract_strided_slice %59 {offsets = [3, 0, 0], sizes = [1, 16, 32], strides = [1, 1, 1]} : vector<4x16x32xf32> to vector<1x16x32xf32>
    %67 = vector.shape_cast %66 : vector<1x16x32xf32> to vector<16x32xf32>
    %68 = tpu.concatenate %61, %63, %65, %67 in 1 : vector<16x32xf32>, vector<16x32xf32>, vector<16x32xf32>, vector<16x32xf32> -> vector<16x128xf32>
    %69 = arith.truncf %68 : vector<16x128xf32> to vector<16x128xbf16>
    %c0_16 = arith.constant 0 : index
    %c0_17 = arith.constant 0 : index
    %c0_18 = arith.constant 0 : index
    %70 = vector.load %arg4[%c0_16, %c0_17, %c0_18] : memref<2x128x128xbf16, #tpu.memory_space<vmem>>, vector<1x128x128xbf16>
    %71 = vector.shape_cast %70 : vector<1x128x128xbf16> to vector<128x128xbf16>
    %cst_19 = arith.constant dense<0.000000e+00> : vector<16x128xf32>
    %72 = tpu.matmul %69, %71, %cst_19 {dimension_numbers = #tpu.dot_dimension_numbers<[1], [0], [0], [1], [0, 0, 1, 1], [], []>} : vector<16x128xbf16>, vector<128x128xbf16>, vector<16x128xf32> -> vector<16x128xf32>
    %73 = vector.broadcast %4 : vector<1x128xf32> to vector<16x128xf32>
    %74 = arith.addf %72, %73 : vector<16x128xf32>
    %75 = arith.addf %0, %74 : vector<16x128xf32>
    %cst_20 = arith.constant dense<0.000000e+00> : vector<16xf32>
    %76 = vector.multi_reduction <add>, %75, %cst_20 [1] : vector<16x128xf32> to vector<16xf32>
    %77 = vector.shape_cast %76 : vector<16xf32> to vector<16x1xf32>
    %cst_21 = arith.constant 1.280000e+02 : f32
    %78 = vector.broadcast %cst_21 : f32 to vector<16x1xf32>
    %79 = arith.divf %77, %78 : vector<16x1xf32>
    %80 = vector.broadcast %79 : vector<16x1xf32> to vector<16x128xf32>
    %81 = arith.subf %75, %80 : vector<16x128xf32>
    %82 = arith.mulf %81, %81 : vector<16x128xf32>
    %cst_22 = arith.constant dense<0.000000e+00> : vector<16xf32>
    %83 = vector.multi_reduction <add>, %82, %cst_22 [1] : vector<16x128xf32> to vector<16xf32>
    %84 = vector.shape_cast %83 : vector<16xf32> to vector<16x1xf32>
    %cst_23 = arith.constant 1.280000e+02 : f32
    %85 = vector.broadcast %cst_23 : f32 to vector<16x1xf32>
    %86 = arith.divf %84, %85 : vector<16x1xf32>
    %87 = vector.broadcast %79 : vector<16x1xf32> to vector<16x128xf32>
    %88 = arith.subf %75, %87 : vector<16x128xf32>
    %cst_24 = arith.constant 9.99999996E-13 : f32
    %89 = vector.broadcast %cst_24 : f32 to vector<16x1xf32>
    %90 = arith.addf %86, %89 : vector<16x1xf32>
    %91 = math.rsqrt %90 : vector<16x1xf32>
    %92 = vector.broadcast %91 : vector<16x1xf32> to vector<16x128xf32>
    %93 = arith.mulf %88, %92 : vector<16x128xf32>
    %94 = vector.broadcast %5 : vector<1x128xf32> to vector<16x128xf32>
    %95 = arith.mulf %93, %94 : vector<16x128xf32>
    %96 = vector.broadcast %6 : vector<1x128xf32> to vector<16x128xf32>
    %97 = arith.addf %95, %96 : vector<16x128xf32>
    %98 = arith.truncf %97 : vector<16x128xf32> to vector<16x128xbf16>
    %c0_25 = arith.constant 0 : index
    %c0_26 = arith.constant 0 : index
    %c0_27 = arith.constant 0 : index
    %99 = vector.load %arg5[%c0_25, %c0_26, %c0_27] : memref<2x128x256xbf16, #tpu.memory_space<vmem>>, vector<1x128x256xbf16>
    %100 = vector.shape_cast %99 : vector<1x128x256xbf16> to vector<128x256xbf16>
    %cst_28 = arith.constant dense<0.000000e+00> : vector<16x256xf32>
    %101 = tpu.matmul %98, %100, %cst_28 {dimension_numbers = #tpu.dot_dimension_numbers<[1], [0], [0], [1], [0, 0, 1, 1], [], []>} : vector<16x128xbf16>, vector<128x256xbf16>, vector<16x256xf32> -> vector<16x256xf32>
    %c0_29 = arith.constant 0 : index
    %c0_30 = arith.constant 0 : index
    %c0_31 = arith.constant 0 : index
    %102 = vector.load %arg6[%c0_29, %c0_30, %c0_31] : memref<2x1x256xf32, #tpu.memory_space<vmem>>, vector<1x1x256xf32>
    %103 = vector.shape_cast %102 : vector<1x1x256xf32> to vector<1x256xf32>
    %104 = vector.broadcast %103 : vector<1x256xf32> to vector<16x256xf32>
    %105 = arith.addf %101, %104 : vector<16x256xf32>
    %106 = arith.mulf %105, %105 : vector<16x256xf32>
    %107 = arith.mulf %105, %106 : vector<16x256xf32>
    %cst_32 = arith.constant 4.471500e-02 : f32
    %108 = vector.broadcast %cst_32 : f32 to vector<16x256xf32>
    %109 = arith.mulf %108, %107 : vector<16x256xf32>
    %110 = arith.addf %105, %109 : vector<16x256xf32>
    %cst_33 = arith.constant 0.797884583 : f32
    %111 = vector.broadcast %cst_33 : f32 to vector<16x256xf32>
    %112 = arith.mulf %111, %110 : vector<16x256xf32>
    %113 = math.tanh %112 : vector<16x256xf32>
    %cst_34 = arith.constant 1.000000e+00 : f32
    %114 = vector.broadcast %cst_34 : f32 to vector<16x256xf32>
    %115 = arith.addf %114, %113 : vector<16x256xf32>
    %cst_35 = arith.constant 5.000000e-01 : f32
    %116 = vector.broadcast %cst_35 : f32 to vector<16x256xf32>
    %117 = arith.mulf %116, %115 : vector<16x256xf32>
    %118 = arith.mulf %105, %117 : vector<16x256xf32>
    %119 = arith.truncf %118 : vector<16x256xf32> to vector<16x256xbf16>
    %c0_36 = arith.constant 0 : index
    %c0_37 = arith.constant 0 : index
    %c0_38 = arith.constant 0 : index
    %120 = vector.load %arg7[%c0_36, %c0_37, %c0_38] : memref<2x256x128xbf16, #tpu.memory_space<vmem>>, vector<1x256x128xbf16>
    %121 = vector.shape_cast %120 : vector<1x256x128xbf16> to vector<256x128xbf16>
    %cst_39 = arith.constant dense<0.000000e+00> : vector<16x128xf32>
    %122 = tpu.matmul %119, %121, %cst_39 {dimension_numbers = #tpu.dot_dimension_numbers<[1], [0], [0], [1], [0, 0, 1, 1], [], []>} : vector<16x256xbf16>, vector<256x128xbf16>, vector<16x128xf32> -> vector<16x128xf32>
    %123 = vector.broadcast %7 : vector<1x128xf32> to vector<16x128xf32>
    %124 = arith.addf %122, %123 : vector<16x128xf32>
    %125 = arith.addf %97, %124 : vector<16x128xf32>
    %cst_40 = arith.constant dense<0.000000e+00> : vector<16xf32>
    %126 = vector.multi_reduction <add>, %125, %cst_40 [1] : vector<16x128xf32> to vector<16xf32>
    %127 = vector.shape_cast %126 : vector<16xf32> to vector<16x1xf32>
    %cst_41 = arith.constant 1.280000e+02 : f32
    %128 = vector.broadcast %cst_41 : f32 to vector<16x1xf32>
    %129 = arith.divf %127, %128 : vector<16x1xf32>
    %130 = vector.broadcast %129 : vector<16x1xf32> to vector<16x128xf32>
    %131 = arith.subf %125, %130 : vector<16x128xf32>
    %132 = arith.mulf %131, %131 : vector<16x128xf32>
    %cst_42 = arith.constant dense<0.000000e+00> : vector<16xf32>
    %133 = vector.multi_reduction <add>, %132, %cst_42 [1] : vector<16x128xf32> to vector<16xf32>
    %134 = vector.shape_cast %133 : vector<16xf32> to vector<16x1xf32>
    %cst_43 = arith.constant 1.280000e+02 : f32
    %135 = vector.broadcast %cst_43 : f32 to vector<16x1xf32>
    %136 = arith.divf %134, %135 : vector<16x1xf32>
    %137 = vector.broadcast %129 : vector<16x1xf32> to vector<16x128xf32>
    %138 = arith.subf %125, %137 : vector<16x128xf32>
    %cst_44 = arith.constant 9.99999996E-13 : f32
    %139 = vector.broadcast %cst_44 : f32 to vector<16x1xf32>
    %140 = arith.addf %136, %139 : vector<16x1xf32>
    %141 = math.rsqrt %140 : vector<16x1xf32>
    %142 = vector.broadcast %141 : vector<16x1xf32> to vector<16x128xf32>
    %143 = arith.mulf %138, %142 : vector<16x128xf32>
    %144 = vector.broadcast %8 : vector<1x128xf32> to vector<16x128xf32>
    %145 = arith.mulf %143, %144 : vector<16x128xf32>
    %146 = vector.broadcast %9 : vector<1x128xf32> to vector<16x128xf32>
    %147 = arith.addf %145, %146 : vector<16x128xf32>
    %c1 = arith.constant 1 : index
    %c0_45 = arith.constant 0 : index
    %c0_46 = arith.constant 0 : index
    %148 = vector.load %arg8[%c1, %c0_45, %c0_46] : memref<2x8x128xf32, #tpu.memory_space<vmem>>, vector<1x8x128xf32>
    %149 = vector.shape_cast %148 : vector<1x8x128xf32> to vector<8x128xf32>
    %150 = vector.extract_strided_slice %149 {offsets = [0, 0], sizes = [1, 128], strides = [1, 1]} : vector<8x128xf32> to vector<1x128xf32>
    %151 = vector.extract_strided_slice %149 {offsets = [1, 0], sizes = [1, 128], strides = [1, 1]} : vector<8x128xf32> to vector<1x128xf32>
    %152 = vector.extract_strided_slice %149 {offsets = [2, 0], sizes = [1, 128], strides = [1, 1]} : vector<8x128xf32> to vector<1x128xf32>
    %153 = vector.extract_strided_slice %149 {offsets = [3, 0], sizes = [1, 128], strides = [1, 1]} : vector<8x128xf32> to vector<1x128xf32>
    %154 = vector.extract_strided_slice %149 {offsets = [4, 0], sizes = [1, 128], strides = [1, 1]} : vector<8x128xf32> to vector<1x128xf32>
    %155 = vector.extract_strided_slice %149 {offsets = [5, 0], sizes = [1, 128], strides = [1, 1]} : vector<8x128xf32> to vector<1x128xf32>
    %156 = arith.truncf %147 : vector<16x128xf32> to vector<16x128xbf16>
    %c1_47 = arith.constant 1 : index
    %c0_48 = arith.constant 0 : index
    %c0_49 = arith.constant 0 : index
    %157 = vector.load %arg2[%c1_47, %c0_48, %c0_49] : memref<2x128x384xbf16, #tpu.memory_space<vmem>>, vector<1x128x384xbf16>
    %158 = vector.shape_cast %157 : vector<1x128x384xbf16> to vector<128x384xbf16>
    %cst_50 = arith.constant dense<0.000000e+00> : vector<16x384xf32>
    %159 = tpu.matmul %156, %158, %cst_50 {dimension_numbers = #tpu.dot_dimension_numbers<[1], [0], [0], [1], [0, 0, 1, 1], [], []>} : vector<16x128xbf16>, vector<128x384xbf16>, vector<16x384xf32> -> vector<16x384xf32>
    %c1_51 = arith.constant 1 : index
    %c0_52 = arith.constant 0 : index
    %c0_53 = arith.constant 0 : index
    %160 = vector.load %arg3[%c1_51, %c0_52, %c0_53] : memref<2x1x384xf32, #tpu.memory_space<vmem>>, vector<1x1x384xf32>
    %161 = vector.shape_cast %160 : vector<1x1x384xf32> to vector<1x384xf32>
    %162 = vector.broadcast %161 : vector<1x384xf32> to vector<16x384xf32>
    %163 = arith.addf %159, %162 : vector<16x384xf32>
    %164 = vector.extract_strided_slice %163 {offsets = [0, 0], sizes = [16, 32], strides = [1, 1]} : vector<16x384xf32> to vector<16x32xf32>
    %165 = vector.extract_strided_slice %163 {offsets = [0, 32], sizes = [16, 32], strides = [1, 1]} : vector<16x384xf32> to vector<16x32xf32>
    %166 = vector.extract_strided_slice %163 {offsets = [0, 64], sizes = [16, 32], strides = [1, 1]} : vector<16x384xf32> to vector<16x32xf32>
    %167 = vector.extract_strided_slice %163 {offsets = [0, 96], sizes = [16, 32], strides = [1, 1]} : vector<16x384xf32> to vector<16x32xf32>
    %168 = vector.shape_cast %164 : vector<16x32xf32> to vector<1x16x32xf32>
    %169 = vector.shape_cast %165 : vector<16x32xf32> to vector<1x16x32xf32>
    %170 = vector.shape_cast %166 : vector<16x32xf32> to vector<1x16x32xf32>
    %171 = vector.shape_cast %167 : vector<16x32xf32> to vector<1x16x32xf32>
    %172 = tpu.concatenate %168, %169, %170, %171 in 0 : vector<1x16x32xf32>, vector<1x16x32xf32>, vector<1x16x32xf32>, vector<1x16x32xf32> -> vector<4x16x32xf32>
    %173 = vector.extract_strided_slice %163 {offsets = [0, 128], sizes = [16, 32], strides = [1, 1]} : vector<16x384xf32> to vector<16x32xf32>
    %174 = vector.extract_strided_slice %163 {offsets = [0, 160], sizes = [16, 32], strides = [1, 1]} : vector<16x384xf32> to vector<16x32xf32>
    %175 = vector.extract_strided_slice %163 {offsets = [0, 192], sizes = [16, 32], strides = [1, 1]} : vector<16x384xf32> to vector<16x32xf32>
    %176 = vector.extract_strided_slice %163 {offsets = [0, 224], sizes = [16, 32], strides = [1, 1]} : vector<16x384xf32> to vector<16x32xf32>
    %177 = vector.shape_cast %173 : vector<16x32xf32> to vector<1x16x32xf32>
    %178 = vector.shape_cast %174 : vector<16x32xf32> to vector<1x16x32xf32>
    %179 = vector.shape_cast %175 : vector<16x32xf32> to vector<1x16x32xf32>
    %180 = vector.shape_cast %176 : vector<16x32xf32> to vector<1x16x32xf32>
    %181 = tpu.concatenate %177, %178, %179, %180 in 0 : vector<1x16x32xf32>, vector<1x16x32xf32>, vector<1x16x32xf32>, vector<1x16x32xf32> -> vector<4x16x32xf32>
    %182 = vector.extract_strided_slice %163 {offsets = [0, 256], sizes = [16, 32], strides = [1, 1]} : vector<16x384xf32> to vector<16x32xf32>
    %183 = vector.extract_strided_slice %163 {offsets = [0, 288], sizes = [16, 32], strides = [1, 1]} : vector<16x384xf32> to vector<16x32xf32>
    %184 = vector.extract_strided_slice %163 {offsets = [0, 320], sizes = [16, 32], strides = [1, 1]} : vector<16x384xf32> to vector<16x32xf32>
    %185 = vector.extract_strided_slice %163 {offsets = [0, 352], sizes = [16, 32], strides = [1, 1]} : vector<16x384xf32> to vector<16x32xf32>
    %186 = vector.shape_cast %182 : vector<16x32xf32> to vector<1x16x32xf32>
    %187 = vector.shape_cast %183 : vector<16x32xf32> to vector<1x16x32xf32>
    %188 = vector.shape_cast %184 : vector<16x32xf32> to vector<1x16x32xf32>
    %189 = vector.shape_cast %185 : vector<16x32xf32> to vector<1x16x32xf32>
    %190 = tpu.concatenate %186, %187, %188, %189 in 0 : vector<1x16x32xf32>, vector<1x16x32xf32>, vector<1x16x32xf32>, vector<1x16x32xf32> -> vector<4x16x32xf32>
    "tpu.trace_start"() <{level = 10 : i32, message = "nqd,nkd->nqk"}> : () -> ()
    %cst_54 = arith.constant dense<0.000000e+00> : vector<4x16x16xf32>
    %191 = tpu.matmul %172, %181, %cst_54 {dimension_numbers = #tpu.dot_dimension_numbers<[2], [2], [1], [1], [0, 0, 0, 1, 1, 1], [0], [0]>} : vector<4x16x32xf32>, vector<4x16x32xf32>, vector<4x16x16xf32> -> vector<4x16x16xf32>
    "tpu.trace_stop"() : () -> ()
    %192 = vector.shape_cast %1 : vector<16x16xf32> to vector<1x16x16xf32>
    %193 = vector.broadcast %192 : vector<1x16x16xf32> to vector<4x16x16xf32>
    %194 = arith.addf %191, %193 : vector<4x16x16xf32>
    %cst_55 = arith.constant dense<0xFF800000> : vector<4x16xf32>
    %195 = vector.multi_reduction <maximumf>, %194, %cst_55 [2] : vector<4x16x16xf32> to vector<4x16xf32>
    %196 = vector.shape_cast %195 : vector<4x16xf32> to vector<4x16x1xf32>
    %197 = vector.broadcast %196 : vector<4x16x1xf32> to vector<4x16x16xf32>
    %198 = arith.subf %194, %197 : vector<4x16x16xf32>
    %199 = math.exp %198 : vector<4x16x16xf32>
    %cst_56 = arith.constant dense<0.000000e+00> : vector<4x16xf32>
    %200 = vector.multi_reduction <add>, %199, %cst_56 [2] : vector<4x16x16xf32> to vector<4x16xf32>
    %201 = vector.shape_cast %200 : vector<4x16xf32> to vector<4x16x1xf32>
    %202 = tpu.reciprocal %201 {approx = true} : vector<4x16x1xf32> -> vector<4x16x1xf32>
    %203 = vector.broadcast %202 : vector<4x16x1xf32> to vector<4x16x16xf32>
    %204 = arith.mulf %199, %203 : vector<4x16x16xf32>
    "tpu.trace_start"() <{level = 10 : i32, message = "nqk,nkd->nqd"}> : () -> ()
    %cst_57 = arith.constant dense<0.000000e+00> : vector<4x16x32xf32>
    %205 = tpu.matmul %204, %190, %cst_57 {dimension_numbers = #tpu.dot_dimension_numbers<[2], [1], [1], [2], [0, 0, 0, 1, 1, 2], [0], [0]>} : vector<4x16x16xf32>, vector<4x16x32xf32>, vector<4x16x32xf32> -> vector<4x16x32xf32>
    "tpu.trace_stop"() : () -> ()
    %206 = vector.extract_strided_slice %205 {offsets = [0, 0, 0], sizes = [1, 16, 32], strides = [1, 1, 1]} : vector<4x16x32xf32> to vector<1x16x32xf32>
    %207 = vector.shape_cast %206 : vector<1x16x32xf32> to vector<16x32xf32>
    %208 = vector.extract_strided_slice %205 {offsets = [1, 0, 0], sizes = [1, 16, 32], strides = [1, 1, 1]} : vector<4x16x32xf32> to vector<1x16x32xf32>
    %209 = vector.shape_cast %208 : vector<1x16x32xf32> to vector<16x32xf32>
    %210 = vector.extract_strided_slice %205 {offsets = [2, 0, 0], sizes = [1, 16, 32], strides = [1, 1, 1]} : vector<4x16x32xf32> to vector<1x16x32xf32>
    %211 = vector.shape_cast %210 : vector<1x16x32xf32> to vector<16x32xf32>
    %212 = vector.extract_strided_slice %205 {offsets = [3, 0, 0], sizes = [1, 16, 32], strides = [1, 1, 1]} : vector<4x16x32xf32> to vector<1x16x32xf32>
    %213 = vector.shape_cast %212 : vector<1x16x32xf32> to vector<16x32xf32>
    %214 = tpu.concatenate %207, %209, %211, %213 in 1 : vector<16x32xf32>, vector<16x32xf32>, vector<16x32xf32>, vector<16x32xf32> -> vector<16x128xf32>
    %215 = arith.truncf %214 : vector<16x128xf32> to vector<16x128xbf16>
    %c1_58 = arith.constant 1 : index
    %c0_59 = arith.constant 0 : index
    %c0_60 = arith.constant 0 : index
    %216 = vector.load %arg4[%c1_58, %c0_59, %c0_60] : memref<2x128x128xbf16, #tpu.memory_space<vmem>>, vector<1x128x128xbf16>
    %217 = vector.shape_cast %216 : vector<1x128x128xbf16> to vector<128x128xbf16>
    %cst_61 = arith.constant dense<0.000000e+00> : vector<16x128xf32>
    %218 = tpu.matmul %215, %217, %cst_61 {dimension_numbers = #tpu.dot_dimension_numbers<[1], [0], [0], [1], [0, 0, 1, 1], [], []>} : vector<16x128xbf16>, vector<128x128xbf16>, vector<16x128xf32> -> vector<16x128xf32>
    %219 = vector.broadcast %150 : vector<1x128xf32> to vector<16x128xf32>
    %220 = arith.addf %218, %219 : vector<16x128xf32>
    %221 = arith.addf %147, %220 : vector<16x128xf32>
    %cst_62 = arith.constant dense<0.000000e+00> : vector<16xf32>
    %222 = vector.multi_reduction <add>, %221, %cst_62 [1] : vector<16x128xf32> to vector<16xf32>
    %223 = vector.shape_cast %222 : vector<16xf32> to vector<16x1xf32>
    %cst_63 = arith.constant 1.280000e+02 : f32
    %224 = vector.broadcast %cst_63 : f32 to vector<16x1xf32>
    %225 = arith.divf %223, %224 : vector<16x1xf32>
    %226 = vector.broadcast %225 : vector<16x1xf32> to vector<16x128xf32>
    %227 = arith.subf %221, %226 : vector<16x128xf32>
    %228 = arith.mulf %227, %227 : vector<16x128xf32>
    %cst_64 = arith.constant dense<0.000000e+00> : vector<16xf32>
    %229 = vector.multi_reduction <add>, %228, %cst_64 [1] : vector<16x128xf32> to vector<16xf32>
    %230 = vector.shape_cast %229 : vector<16xf32> to vector<16x1xf32>
    %cst_65 = arith.constant 1.280000e+02 : f32
    %231 = vector.broadcast %cst_65 : f32 to vector<16x1xf32>
    %232 = arith.divf %230, %231 : vector<16x1xf32>
    %233 = vector.broadcast %225 : vector<16x1xf32> to vector<16x128xf32>
    %234 = arith.subf %221, %233 : vector<16x128xf32>
    %cst_66 = arith.constant 9.99999996E-13 : f32
    %235 = vector.broadcast %cst_66 : f32 to vector<16x1xf32>
    %236 = arith.addf %232, %235 : vector<16x1xf32>
    %237 = math.rsqrt %236 : vector<16x1xf32>
    %238 = vector.broadcast %237 : vector<16x1xf32> to vector<16x128xf32>
    %239 = arith.mulf %234, %238 : vector<16x128xf32>
    %240 = vector.broadcast %151 : vector<1x128xf32> to vector<16x128xf32>
    %241 = arith.mulf %239, %240 : vector<16x128xf32>
    %242 = vector.broadcast %152 : vector<1x128xf32> to vector<16x128xf32>
    %243 = arith.addf %241, %242 : vector<16x128xf32>
    %244 = arith.truncf %243 : vector<16x128xf32> to vector<16x128xbf16>
    %c1_67 = arith.constant 1 : index
    %c0_68 = arith.constant 0 : index
    %c0_69 = arith.constant 0 : index
    %245 = vector.load %arg5[%c1_67, %c0_68, %c0_69] : memref<2x128x256xbf16, #tpu.memory_space<vmem>>, vector<1x128x256xbf16>
    %246 = vector.shape_cast %245 : vector<1x128x256xbf16> to vector<128x256xbf16>
    %cst_70 = arith.constant dense<0.000000e+00> : vector<16x256xf32>
    %247 = tpu.matmul %244, %246, %cst_70 {dimension_numbers = #tpu.dot_dimension_numbers<[1], [0], [0], [1], [0, 0, 1, 1], [], []>} : vector<16x128xbf16>, vector<128x256xbf16>, vector<16x256xf32> -> vector<16x256xf32>
    %c1_71 = arith.constant 1 : index
    %c0_72 = arith.constant 0 : index
    %c0_73 = arith.constant 0 : index
    %248 = vector.load %arg6[%c1_71, %c0_72, %c0_73] : memref<2x1x256xf32, #tpu.memory_space<vmem>>, vector<1x1x256xf32>
    %249 = vector.shape_cast %248 : vector<1x1x256xf32> to vector<1x256xf32>
    %250 = vector.broadcast %249 : vector<1x256xf32> to vector<16x256xf32>
    %251 = arith.addf %247, %250 : vector<16x256xf32>
    %252 = arith.mulf %251, %251 : vector<16x256xf32>
    %253 = arith.mulf %251, %252 : vector<16x256xf32>
    %cst_74 = arith.constant 4.471500e-02 : f32
    %254 = vector.broadcast %cst_74 : f32 to vector<16x256xf32>
    %255 = arith.mulf %254, %253 : vector<16x256xf32>
    %256 = arith.addf %251, %255 : vector<16x256xf32>
    %cst_75 = arith.constant 0.797884583 : f32
    %257 = vector.broadcast %cst_75 : f32 to vector<16x256xf32>
    %258 = arith.mulf %257, %256 : vector<16x256xf32>
    %259 = math.tanh %258 : vector<16x256xf32>
    %cst_76 = arith.constant 1.000000e+00 : f32
    %260 = vector.broadcast %cst_76 : f32 to vector<16x256xf32>
    %261 = arith.addf %260, %259 : vector<16x256xf32>
    %cst_77 = arith.constant 5.000000e-01 : f32
    %262 = vector.broadcast %cst_77 : f32 to vector<16x256xf32>
    %263 = arith.mulf %262, %261 : vector<16x256xf32>
    %264 = arith.mulf %251, %263 : vector<16x256xf32>
    %265 = arith.truncf %264 : vector<16x256xf32> to vector<16x256xbf16>
    %c1_78 = arith.constant 1 : index
    %c0_79 = arith.constant 0 : index
    %c0_80 = arith.constant 0 : index
    %266 = vector.load %arg7[%c1_78, %c0_79, %c0_80] : memref<2x256x128xbf16, #tpu.memory_space<vmem>>, vector<1x256x128xbf16>
    %267 = vector.shape_cast %266 : vector<1x256x128xbf16> to vector<256x128xbf16>
    %cst_81 = arith.constant dense<0.000000e+00> : vector<16x128xf32>
    %268 = tpu.matmul %265, %267, %cst_81 {dimension_numbers = #tpu.dot_dimension_numbers<[1], [0], [0], [1], [0, 0, 1, 1], [], []>} : vector<16x256xbf16>, vector<256x128xbf16>, vector<16x128xf32> -> vector<16x128xf32>
    %269 = vector.broadcast %153 : vector<1x128xf32> to vector<16x128xf32>
    %270 = arith.addf %268, %269 : vector<16x128xf32>
    %271 = arith.addf %243, %270 : vector<16x128xf32>
    %cst_82 = arith.constant dense<0.000000e+00> : vector<16xf32>
    %272 = vector.multi_reduction <add>, %271, %cst_82 [1] : vector<16x128xf32> to vector<16xf32>
    %273 = vector.shape_cast %272 : vector<16xf32> to vector<16x1xf32>
    %cst_83 = arith.constant 1.280000e+02 : f32
    %274 = vector.broadcast %cst_83 : f32 to vector<16x1xf32>
    %275 = arith.divf %273, %274 : vector<16x1xf32>
    %276 = vector.broadcast %275 : vector<16x1xf32> to vector<16x128xf32>
    %277 = arith.subf %271, %276 : vector<16x128xf32>
    %278 = arith.mulf %277, %277 : vector<16x128xf32>
    %cst_84 = arith.constant dense<0.000000e+00> : vector<16xf32>
    %279 = vector.multi_reduction <add>, %278, %cst_84 [1] : vector<16x128xf32> to vector<16xf32>
    %280 = vector.shape_cast %279 : vector<16xf32> to vector<16x1xf32>
    %cst_85 = arith.constant 1.280000e+02 : f32
    %281 = vector.broadcast %cst_85 : f32 to vector<16x1xf32>
    %282 = arith.divf %280, %281 : vector<16x1xf32>
    %283 = vector.broadcast %275 : vector<16x1xf32> to vector<16x128xf32>
    %284 = arith.subf %271, %283 : vector<16x128xf32>
    %cst_86 = arith.constant 9.99999996E-13 : f32
    %285 = vector.broadcast %cst_86 : f32 to vector<16x1xf32>
    %286 = arith.addf %282, %285 : vector<16x1xf32>
    %287 = math.rsqrt %286 : vector<16x1xf32>
    %288 = vector.broadcast %287 : vector<16x1xf32> to vector<16x128xf32>
    %289 = arith.mulf %284, %288 : vector<16x128xf32>
    %290 = vector.broadcast %154 : vector<1x128xf32> to vector<16x128xf32>
    %291 = arith.mulf %289, %290 : vector<16x128xf32>
    %292 = vector.broadcast %155 : vector<1x128xf32> to vector<16x128xf32>
    %293 = arith.addf %291, %292 : vector<16x128xf32>
    %c0_87 = arith.constant 0 : index
    %c0_88 = arith.constant 0 : index
    %294 = vector.load %arg9[%c0_87, %c0_88] : memref<16x128xf32, #tpu.memory_space<vmem>>, vector<16x128xf32>
    tpu.vector_store %arg9[%c0_87, %c0_88], %293 {strides = array<i32>} : memref<16x128xf32, #tpu.memory_space<vmem>>, vector<16x128xf32>,
    return
  }
}

</mosaic_0001>

<llo_original>
// kernel: tpu_custom_call.1
$region0: #{tpu_custom_call.1}
  #allocation0 [shape = 'u32[]', space=smem, size = 0x4, offset = 0x4, fixed_abs, tag = 'smem constant byte address 0x4 - core index']
  #allocation1 [shape = 'u32[144,128]{1,0:T(1,128)}', space=vmem, size = 0x12000, scoped, tag = 'internal scratch']
  %s0 = inlined_call_operand.hbm [shape: f32[16,128], index: 0, kind: input, shape index: {}]
  %s1 = inlined_call_operand.hbm [shape: f32[16,16], index: 1, kind: input, shape index: {}]
  %s2 = inlined_call_operand.hbm [shape: bf16[2,128,384], index: 2, kind: input, shape index: {}]
  %s3 = inlined_call_operand.hbm [shape: f32[2,1,384], index: 3, kind: input, shape index: {}]
  %s4 = inlined_call_operand.hbm [shape: bf16[2,128,128], index: 4, kind: input, shape index: {}]
  %s5 = inlined_call_operand.hbm [shape: bf16[2,128,256], index: 5, kind: input, shape index: {}]
  %s6 = inlined_call_operand.vmem [shape: f32[2,1,256], index: 6, kind: input, shape index: {}]
  %s7 = inlined_call_operand.hbm [shape: bf16[2,256,128], index: 7, kind: input, shape index: {}]
  %s8 = inlined_call_operand.hbm [shape: f32[2,8,128], index: 8, kind: input, shape index: {}]
  %s9 = inlined_call_operand.hbm [shape: f32[16,128], index: 9, kind: output, shape index: {}]
  %s10 = sld [smem:[#allocation0]]
  $region78: #{tpu_custom_call.1} parent=0
    _
  %s12 = ssub.s32 1, %s10
  %s13 = scalar_select 0, %s12, %s10
  $region1: #{tpu_custom_call.1} parent=0
    #allocation2 [shape = 'u8[8192]{0}', space=vmem, size = 0x2000, scoped, tag = 'input window, operand 0, single buffered']
    #allocation3 [shape = 's32[1]{0}', space=sflag, size = 0x4, scoped, tag = 'scoped memory for tpu_custom_call.1']
    #allocation4 [shape = 's32[1]{0}', space=sflag, size = 0x4, scoped, tag = 'scoped memory for tpu_custom_call.1']
    #allocation5 [shape = 'u8[8192]{0}', space=vmem, size = 0x2000, scoped, tag = 'input window, operand 1, single buffered']
    #allocation6 [shape = 's32[1]{0}', space=sflag, size = 0x4, scoped, tag = 'scoped memory for tpu_custom_call.1']
    #allocation7 [shape = 'u8[196608]{0}', space=vmem, size = 0x30000, scoped, tag = 'input window, operand 2, single buffered']
    #allocation8 [shape = 'u8[3072]{0}', space=vmem, size = 0xc00, scoped, tag = 'input window, operand 3, single buffered']
    #allocation9 [shape = 's32[1]{0}', space=sflag, size = 0x4, scoped, tag = 'scoped memory for tpu_custom_call.1']
    #allocation10 [shape = 'u8[65536]{0}', space=vmem, size = 0x10000, scoped, tag = 'input window, operand 4, single buffered']
    #allocation11 [shape = 'u8[131072]{0}', space=vmem, size = 0x20000, scoped, tag = 'input window, operand 5, single buffered']
    #allocation12 [shape = 's32[1]{0}', space=sflag, size = 0x4, scoped, tag = 'scoped memory for tpu_custom_call.1']
    #allocation13 [shape = 'u8[131072]{0}', space=vmem, size = 0x20000, scoped, tag = 'input window, operand 7, single buffered']
    #allocation14 [shape = 'u8[8192]{0}', space=vmem, size = 0x2000, scoped, tag = 'input window, operand 8, single buffered']
    #allocation15 [shape = 's32[1]{0}', space=sflag, size = 0x4, scoped, tag = 'scoped memory for tpu_custom_call.1']
    #allocation16 [shape = 'u8[8192]{0}', space=vmem, size = 0x2000, scoped, tag = 'output window, operand 0, single buffered']
    %14 = vsyncpa [#allocation3], 0
    %15 = vsyncpa [#allocation6], 0
    %16 = vsyncpa [#allocation9], 0
    %17 = vsyncpa [#allocation12], 0
    %18 = vsyncpa [#allocation15], 0
    %19 = vsyncpa [#allocation4], 0
    // Predicated region
    $region2: #{tpu_custom_call.1} parent=1 // pred_check
      _
    $region3: #{tpu_custom_call.1} parent=1 // pred_check_branch
      %21 = sbr.rel (0) target = $region5
    $region4: #{tpu_custom_call.1} parent=1 // pred_region
      %s23 = ssub.s32 256, 256
      %24 = vsyncadd [#allocation3], %s23
      %s25 = sshll.u32 [#allocation2], 4
      %s26 = int_to_ptr.vmem [resolvable:$true] %s25
      %31 = dma.hbm_to_vmem [thread:$0]  %s0, 256, %s26, [#allocation3], 128, 128, 8
    $region5: #{tpu_custom_call.1} parent=1 // pred_fallthru
      _
    // Predicated region
    $region6: #{tpu_custom_call.1} parent=1 // pred_check
      _
    $region7: #{tpu_custom_call.1} parent=1 // pred_check_branch
      %33 = sbr.rel (0) target = $region9
    $region8: #{tpu_custom_call.1} parent=1 // pred_region
      %s35 = ssub.s32 256, 256
      %36 = vsyncadd [#allocation6], %s35
      %s37 = sshll.u32 [#allocation5], 4
      %s38 = int_to_ptr.vmem [resolvable:$true] %s37
      %43 = dma.hbm_to_vmem [thread:$0]  %s1, 256, %s38, [#allocation6], 128, 128, 8
    $region9: #{tpu_custom_call.1} parent=1 // pred_fallthru
      _
    // Predicated region
    $region10: #{tpu_custom_call.1} parent=1 // pred_check
      _
    $region11: #{tpu_custom_call.1} parent=1 // pred_check_branch
      %45 = sbr.rel (0) target = $region13
    $region12: #{tpu_custom_call.1} parent=1 // pred_region
      %s47 = ssub.s32 6144, 6144
      %48 = vsyncadd [#allocation6], %s47
      %s49 = sshll.u32 [#allocation7], 4
      %s50 = int_to_ptr.vmem [resolvable:$true] %s49
      %55 = dma.hbm_to_vmem [thread:$0]  %s2, 6144, %s50, [#allocation6], 192, 192, 12
    $region13: #{tpu_custom_call.1} parent=1 // pred_fallthru
      _
    // Predicated region
    $region14: #{tpu_custom_call.1} parent=1 // pred_check
      _
    $region15: #{tpu_custom_call.1} parent=1 // pred_check_branch
      %57 = sbr.rel (0) target = $region17
    $region16: #{tpu_custom_call.1} parent=1 // pred_region
      %s59 = ssub.s32 96, 96
      %60 = vsyncadd [#allocation9], %s59
      %s61 = sshll.u32 [#allocation8], 4
      %s62 = int_to_ptr.vmem [resolvable:$true] %s61
      %67 = dma.hbm_to_vmem [thread:$0]  %s3, 96, %s62, [#allocation9], 48, 48, 3
    $region17: #{tpu_custom_call.1} parent=1 // pred_fallthru
      _
    // Predicated region
    $region18: #{tpu_custom_call.1} parent=1 // pred_check
      _
    $region19: #{tpu_custom_call.1} parent=1 // pred_check_branch
      %69 = sbr.rel (0) target = $region21
    $region20: #{tpu_custom_call.1} parent=1 // pred_region
      %s71 = ssub.s32 2048, 2048
      %72 = vsyncadd [#allocation9], %s71
      %s73 = sshll.u32 [#allocation10], 4
      %s74 = int_to_ptr.vmem [resolvable:$true] %s73
      %79 = dma.hbm_to_vmem [thread:$0]  %s4, 2048, %s74, [#allocation9], 64, 64, 4
    $region21: #{tpu_custom_call.1} parent=1 // pred_fallthru
      _
    // Predicated region
    $region22: #{tpu_custom_call.1} parent=1 // pred_check
      _
    $region23: #{tpu_custom_call.1} parent=1 // pred_check_branch
      %81 = sbr.rel (0) target = $region25
    $region24: #{tpu_custom_call.1} parent=1 // pred_region
      %s83 = ssub.s32 4096, 4096
      %84 = vsyncadd [#allocation12], %s83
      %s85 = sshll.u32 [#allocation11], 4
      %s86 = int_to_ptr.vmem [resolvable:$true] %s85
      %91 = dma.hbm_to_vmem [thread:$0]  %s5, 4096, %s86, [#allocation12], 128, 128, 8
    $region25: #{tpu_custom_call.1} parent=1 // pred_fallthru
      _
    // Predicated region
    $region26: #{tpu_custom_call.1} parent=1 // pred_check
      _
    $region27: #{tpu_custom_call.1} parent=1 // pred_check_branch
      %93 = sbr.rel (0) target = $region29
    $region28: #{tpu_custom_call.1} parent=1 // pred_region
      _
    $region29: #{tpu_custom_call.1} parent=1 // pred_fallthru
      _
    // Predicated region
    $region30: #{tpu_custom_call.1} parent=1 // pred_check
      _
    $region31: #{tpu_custom_call.1} parent=1 // pred_check_branch
      %95 = sbr.rel (0) target = $region33
    $region32: #{tpu_custom_call.1} parent=1 // pred_region
      %s97 = ssub.s32 4096, 4096
      %98 = vsyncadd [#allocation12], %s97
      %s99 = sshll.u32 [#allocation13], 4
      %s100 = int_to_ptr.vmem [resolvable:$true] %s99
      %105 = dma.hbm_to_vmem [thread:$0]  %s7, 4096, %s100, [#allocation12], 64, 64, 4
    $region33: #{tpu_custom_call.1} parent=1 // pred_fallthru
      _
    // Predicated region
    $region34: #{tpu_custom_call.1} parent=1 // pred_check
      _
    $region35: #{tpu_custom_call.1} parent=1 // pred_check_branch
      %107 = sbr.rel (0) target = $region37
    $region36: #{tpu_custom_call.1} parent=1 // pred_region
      %s109 = ssub.s32 256, 256
      %110 = vsyncadd [#allocation15], %s109
      %s111 = sshll.u32 [#allocation14], 4
      %s112 = int_to_ptr.vmem [resolvable:$true] %s111
      %117 = dma.hbm_to_vmem [thread:$0]  %s8, 256, %s112, [#allocation15], 128, 128, 8
    $region37: #{tpu_custom_call.1} parent=1 // pred_fallthru
      _
    // Predicated region
    $region38: #{tpu_custom_call.1} parent=1 // pred_check
      _
    $region39: #{tpu_custom_call.1} parent=1 // pred_check_branch
      %119 = sbr.rel (0) target = $region41
    $region40: #{tpu_custom_call.1} parent=1 // pred_region
      %120 = dma.done [#allocation3], 256
    $region41: #{tpu_custom_call.1} parent=1 // pred_fallthru
      _
    // Predicated region
    $region42: #{tpu_custom_call.1} parent=1 // pred_check
      _
    $region43: #{tpu_custom_call.1} parent=1 // pred_check_branch
      %122 = sbr.rel (0) target = $region45
    $region44: #{tpu_custom_call.1} parent=1 // pred_region
      %123 = dma.done [#allocation6], 256
    $region45: #{tpu_custom_call.1} parent=1 // pred_fallthru
      _
    // Predicated region
    $region46: #{tpu_custom_call.1} parent=1 // pred_check
      _
    $region47: #{tpu_custom_call.1} parent=1 // pred_check_branch
      %125 = sbr.rel (0) target = $region49
    $region48: #{tpu_custom_call.1} parent=1 // pred_region
      %126 = dma.done [#allocation6], 6144
    $region49: #{tpu_custom_call.1} parent=1 // pred_fallthru
      _
    // Predicated region
    $region50: #{tpu_custom_call.1} parent=1 // pred_check
      _
    $region51: #{tpu_custom_call.1} parent=1 // pred_check_branch
      %128 = sbr.rel (0) target = $region53
    $region52: #{tpu_custom_call.1} parent=1 // pred_region
      %129 = dma.done [#allocation9], 96
    $region53: #{tpu_custom_call.1} parent=1 // pred_fallthru
      _
    // Predicated region
    $region54: #{tpu_custom_call.1} parent=1 // pred_check
      _
    $region55: #{tpu_custom_call.1} parent=1 // pred_check_branch
      %131 = sbr.rel (0) target = $region57
    $region56: #{tpu_custom_call.1} parent=1 // pred_region
      %132 = dma.done [#allocation9], 2048
    $region57: #{tpu_custom_call.1} parent=1 // pred_fallthru
      _
    // Predicated region
    $region58: #{tpu_custom_call.1} parent=1 // pred_check
      _
    $region59: #{tpu_custom_call.1} parent=1 // pred_check_branch
      %134 = sbr.rel (0) target = $region61
    $region60: #{tpu_custom_call.1} parent=1 // pred_region
      %135 = dma.done [#allocation12], 4096
    $region61: #{tpu_custom_call.1} parent=1 // pred_fallthru
      _
    // Predicated region
    $region62: #{tpu_custom_call.1} parent=1 // pred_check
      _
    $region63: #{tpu_custom_call.1} parent=1 // pred_check_branch
      %137 = sbr.rel (0) target = $region65
    $region64: #{tpu_custom_call.1} parent=1 // pred_region
      %138 = dma.done [#allocation12], 4096
    $region65: #{tpu_custom_call.1} parent=1 // pred_fallthru
      _
    // Predicated region
    $region66: #{tpu_custom_call.1} parent=1 // pred_check
      _
    $region67: #{tpu_custom_call.1} parent=1 // pred_check_branch
      %140 = sbr.rel (0) target = $region69
    $region68: #{tpu_custom_call.1} parent=1 // pred_region
      %141 = dma.done [#allocation15], 256
    $region69: #{tpu_custom_call.1} parent=1 // pred_fallthru
      _
    %v143 = vld [vmem:[#allocation2] sm:$0xff]
    %v144 = vld [vmem:[#allocation2 + $0x8] sm:$0xff]
    %v145 = vld [vmem:[#allocation5] sm:$0xff]
    %v146 = vld [vmem:[#allocation5 + $0x8] sm:$0xff]
    %v147 = vld [vmem:[#allocation14] sm:$0xff]
    %v148 = vpack.c.bf16 %v144, %v143
    %v149 = vld [vmem:[#allocation7] sm:$0xff]
    %v150 = vld [vmem:[#allocation7 + $0x8] sm:$0xf]
    %v151 = vld [vmem:[#allocation7 + $0xc] sm:$0xff]
    %v152 = vld [vmem:[#allocation7 + $0x14] sm:$0xf]
    %v153 = vld [vmem:[#allocation7 + $0x18] sm:$0xff]
    %v154 = vld [vmem:[#allocation7 + $0x20] sm:$0xf]
    %v155 = vld [vmem:[#allocation7 + $0x24] sm:$0xff]
    %v156 = vld [vmem:[#allocation7 + $0x2c] sm:$0xf]
    %v157 = vld [vmem:[#allocation7 + $0x30] sm:$0xff]
    %v158 = vld [vmem:[#allocation7 + $0x38] sm:$0xf]
    %v159 = vld [vmem:[#allocation7 + $0x3c] sm:$0xff]
    %v160 = vld [vmem:[#allocation7 + $0x44] sm:$0xf]
    %v161 = vld [vmem:[#allocation7 + $0x48] sm:$0xff]
    %v162 = vld [vmem:[#allocation7 + $0x50] sm:$0xf]
    %v163 = vld [vmem:[#allocation7 + $0x54] sm:$0xff]
    %v164 = vld [vmem:[#allocation7 + $0x5c] sm:$0xf]
    %v165 = vld [vmem:[#allocation7 + $0x60] sm:$0xff]
    %v166 = vld [vmem:[#allocation7 + $0x68] sm:$0xf]
    %v167 = vld [vmem:[#allocation7 + $0x6c] sm:$0xff]
    %v168 = vld [vmem:[#allocation7 + $0x74] sm:$0xf]
    %v169 = vld [vmem:[#allocation7 + $0x78] sm:$0xff]
    %v170 = vld [vmem:[#allocation7 + $0x80] sm:$0xf]
    %v171 = vld [vmem:[#allocation7 + $0x84] sm:$0xff]
    %v172 = vld [vmem:[#allocation7 + $0x8c] sm:$0xf]
    %v173 = vld [vmem:[#allocation7 + $0x90] sm:$0xff]
    %v174 = vld [vmem:[#allocation7 + $0x98] sm:$0xf]
    %v175 = vld [vmem:[#allocation7 + $0x9c] sm:$0xff]
    %v176 = vld [vmem:[#allocation7 + $0xa4] sm:$0xf]
    %v177 = vld [vmem:[#allocation7 + $0xa8] sm:$0xff]
    %v178 = vld [vmem:[#allocation7 + $0xb0] sm:$0xf]
    %v179 = vld [vmem:[#allocation7 + $0xb4] sm:$0xff]
    %v180 = vld [vmem:[#allocation7 + $0xbc] sm:$0xf]
    %v181 = vld [vmem:[#allocation8] sm:$0x7]
    %v183 = vlaneseq
    %v184 = vshrl.u32 %v183, 7
    %v185 = vsub.s32 0, %v184
    %v186 = vrot.slane %v181, %v185
    %v187 = vlaneseq
    %v188 = vshrl.u32 %v187, 7
    %v189 = vsub.s32 1, %v188
    %v190 = vrot.slane %v181, %v189
    %v191 = vlaneseq
    %v192 = vshrl.u32 %v191, 7
    %v193 = vsub.s32 2, %v192
    %v194 = vrot.slane %v181, %v193
    %v230 = vunpack.c.l.b16 %v149
    %v231 = vunpack.c.h.b16 %v149
    %v232 = vunpack.c.l.b16 %v150
    %v233 = vunpack.c.l.b16 %v151
    %v234 = vunpack.c.h.b16 %v151
    %v235 = vunpack.c.l.b16 %v152
    %v236 = vunpack.c.l.b16 %v153
    %v237 = vunpack.c.h.b16 %v153
    %v238 = vunpack.c.l.b16 %v154
    %v239 = vunpack.c.l.b16 %v155
    %v240 = vunpack.c.h.b16 %v155
    %v241 = vunpack.c.l.b16 %v156
    %v242 = vunpack.c.l.b16 %v157
    %v243 = vunpack.c.h.b16 %v157
    %v244 = vunpack.c.l.b16 %v158
    %v245 = vunpack.c.l.b16 %v159
    %v246 = vunpack.c.h.b16 %v159
    %v247 = vunpack.c.l.b16 %v160
    %v248 = vunpack.c.l.b16 %v161
    %v249 = vunpack.c.h.b16 %v161
    %v250 = vunpack.c.l.b16 %v162
    %v251 = vunpack.c.l.b16 %v163
    %v252 = vunpack.c.h.b16 %v163
    %v253 = vunpack.c.l.b16 %v164
    %v254 = vunpack.c.l.b16 %v165
    %v255 = vunpack.c.h.b16 %v165
    %v256 = vunpack.c.l.b16 %v166
    %v257 = vunpack.c.l.b16 %v167
    %v258 = vunpack.c.h.b16 %v167
    %v259 = vunpack.c.l.b16 %v168
    %v260 = vunpack.c.l.b16 %v169
    %v261 = vunpack.c.h.b16 %v169
    %v262 = vunpack.c.l.b16 %v170
    %v263 = vunpack.c.l.b16 %v171
    %v264 = vunpack.c.h.b16 %v171
    %v265 = vunpack.c.l.b16 %v172
    %v266 = vunpack.c.l.b16 %v173
    %v267 = vunpack.c.h.b16 %v173
    %v268 = vunpack.c.l.b16 %v174
    %v269 = vunpack.c.l.b16 %v175
    %v270 = vunpack.c.h.b16 %v175
    %v271 = vunpack.c.l.b16 %v176
    %v272 = vunpack.c.l.b16 %v177
    %v273 = vunpack.c.h.b16 %v177
    %v274 = vunpack.c.l.b16 %v178
    %v275 = vunpack.c.l.b16 %v179
    %v276 = vunpack.c.h.b16 %v179
    %v277 = vunpack.c.l.b16 %v180
    %v278 = vpack.c.b16 %v233, %v230
    %v279 = vpack.c.b16 %v234, %v231
    %v280 = vpack.c.b16 %v235, %v232
    %v281 = vpack.c.b16 %v239, %v236
    %v282 = vpack.c.b16 %v240, %v237
    %v283 = vpack.c.b16 %v241, %v238
    %v284 = vpack.c.b16 %v245, %v242
    %v285 = vpack.c.b16 %v246, %v243
    %v286 = vpack.c.b16 %v247, %v244
    %v287 = vpack.c.b16 %v251, %v248
    %v288 = vpack.c.b16 %v252, %v249
    %v289 = vpack.c.b16 %v253, %v250
    %v290 = vpack.c.b16 %v257, %v254
    %v291 = vpack.c.b16 %v258, %v255
    %v292 = vpack.c.b16 %v259, %v256
    %v293 = vpack.c.b16 %v263, %v260
    %v294 = vpack.c.b16 %v264, %v261
    %v295 = vpack.c.b16 %v265, %v262
    %v296 = vpack.c.b16 %v269, %v266
    %v297 = vpack.c.b16 %v270, %v267
    %v298 = vpack.c.b16 %v271, %v268
    %v299 = vpack.c.b16 %v275, %v272
    %v300 = vpack.c.b16 %v276, %v273
    %v301 = vpack.c.b16 %v277, %v274
    %326 = vmatprep.subr.bf16.mxu0 %v300
    %327 = vmatpush1.bf16.msra.mxu0 %v299
    %328 = vmatprep.subr.bf16.mxu0 %v297
    %329 = vmatpush1.bf16.msra.mxu0 %v296
    %330 = vmatprep.subr.bf16.mxu0 %v294
    %331 = vmatpush1.bf16.msra.mxu0 %v293
    %332 = vmatprep.subr.bf16.mxu0 %v291
    %333 = vmatpush1.bf16.msra.mxu0 %v290
    %334 = vmatprep.subr.bf16.mxu0 %v288
    %335 = vmatpush1.bf16.msra.mxu0 %v287
    %336 = vmatprep.subr.bf16.mxu0 %v285
    %337 = vmatpush1.bf16.msra.mxu0 %v284
    %338 = vmatprep.subr.bf16.mxu0 %v282
    %339 = vmatpush1.bf16.msra.mxu0 %v281
    %340 = vmatprep.subr.bf16.mxu0 %v279
    %341 = vmatpush1.bf16.msra.mxu0 %v278
    %342 = vmatprep.subr.bf16.mxu0 0
    %343 = vmatpush2.bf16.msra.mxu0 0
    %344 = vmatprep.subr.bf16.mxu0 0
    %345 = vmatpush2.bf16.msra.mxu0 0
    %346 = vmatprep.subr.bf16.mxu0 0
    %347 = vmatpush2.bf16.msra.mxu0 0
    %348 = vmatprep.subr.bf16.mxu0 0
    %349 = vmatpush2.bf16.msra.mxu0 0
    %350 = vmatprep.subr.bf16.mxu0 0
    %351 = vmatpush2.bf16.msra.mxu0 0
    %352 = vmatprep.subr.bf16.mxu0 0
    %353 = vmatpush2.bf16.msra.mxu0 0
    %354 = vmatprep.subr.bf16.mxu0 0
    %355 = vmatpush2.bf16.msra.mxu0 0
    %356 = vmatprep.subr.bf16.mxu0 0
    %357 = vmatpush2.bf16.msra.mxu0 0
    %358 = vmatprep.mubr.bf16.mxu0 0
    %359 = vmatmul.mubr.bf16.gmra.mxu0 %v148
    %v360 = vpop.f32.mrf.mxu0
    %v361 = vadd.f32 %v186, %v360
    %v362 = vpop.f32.mrf.mxu0
    %v363 = vadd.f32 %v190, %v362
    %v364 = vpop.f32.mrf.mxu0
    %v365 = vadd.f32 %v186, %v364
    %v366 = vpop.f32.mrf.mxu0
    %v367 = vadd.f32 %v190, %v366
    %368 = vdwg.mxu0
    %369 = vmatprep.subr.bf16.mxu0 0
    %370 = vmatpush1.bf16.msra.mxu0 %v301
    %371 = vmatprep.subr.bf16.mxu0 0
    %372 = vmatpush1.bf16.msra.mxu0 %v298
    %373 = vmatprep.subr.bf16.mxu0 0
    %374 = vmatpush1.bf16.msra.mxu0 %v295
    %375 = vmatprep.subr.bf16.mxu0 0
    %376 = vmatpush1.bf16.msra.mxu0 %v292
    %377 = vmatprep.subr.bf16.mxu0 0
    %378 = vmatpush1.bf16.msra.mxu0 %v289
    %379 = vmatprep.subr.bf16.mxu0 0
    %380 = vmatpush1.bf16.msra.mxu0 %v286
    %381 = vmatprep.subr.bf16.mxu0 0
    %382 = vmatpush1.bf16.msra.mxu0 %v283
    %383 = vmatprep.subr.bf16.mxu0 0
    %384 = vmatpush1.bf16.msra.mxu0 %v280
    %385 = vmatprep.subr.bf16.mxu0 0
    %386 = vmatpush2.bf16.msra.mxu0 0
    %387 = vmatprep.subr.bf16.mxu0 0
    %388 = vmatpush2.bf16.msra.mxu0 0
    %389 = vmatprep.subr.bf16.mxu0 0
    %390 = vmatpush2.bf16.msra.mxu0 0
    %391 = vmatprep.subr.bf16.mxu0 0
    %392 = vmatpush2.bf16.msra.mxu0 0
    %393 = vmatprep.subr.bf16.mxu0 0
    %394 = vmatpush2.bf16.msra.mxu0 0
    %395 = vmatprep.subr.bf16.mxu0 0
    %396 = vmatpush2.bf16.msra.mxu0 0
    %397 = vmatprep.subr.bf16.mxu0 0
    %398 = vmatpush2.bf16.msra.mxu0 0
    %399 = vmatprep.subr.bf16.mxu0 0
    %400 = vmatpush2.bf16.msra.mxu0 0
    %401 = vmatprep.mubr.bf16.mxu0 0
    %402 = vmatmul.mubr.bf16.gmra.mxu0 %v148
    %v403 = vpop.f32.mrf.mxu0
    %v404 = vadd.f32 %v194, %v403
    %v405 = vpop.f32.mrf.mxu0
    %v406 = vpop.f32.mrf.mxu0
    %v407 = vadd.f32 %v194, %v406
    %v408 = vpop.f32.mrf.mxu0
    %409 = vdwg.mxu0
    %412 = vrot.lane.b32.xlu0 %v361, 96
    %v413 = vpop.permute.xlu0 %412
    %414 = vrot.lane.b32.xlu0 %v365, 96
    %v415 = vpop.permute.xlu0 %414
    %416 = vrot.lane.b32.xlu0 %v361, 64
    %v417 = vpop.permute.xlu0 %416
    %418 = vrot.lane.b32.xlu0 %v365, 64
    %v419 = vpop.permute.xlu0 %418
    %420 = vrot.lane.b32.xlu0 %v361, 32
    %v421 = vpop.permute.xlu0 %420
    %422 = vrot.lane.b32.xlu0 %v365, 32
    %v423 = vpop.permute.xlu0 %422
    %426 = vrot.lane.b32.xlu0 %v363, 96
    %v427 = vpop.permute.xlu0 %426
    %428 = vrot.lane.b32.xlu0 %v367, 96
    %v429 = vpop.permute.xlu0 %428
    %430 = vrot.lane.b32.xlu0 %v363, 64
    %v431 = vpop.permute.xlu0 %430
    %432 = vrot.lane.b32.xlu0 %v367, 64
    %v433 = vpop.permute.xlu0 %432
    %434 = vrot.lane.b32.xlu0 %v363, 32
    %v435 = vpop.permute.xlu0 %434
    %436 = vrot.lane.b32.xlu0 %v367, 32
    %v437 = vpop.permute.xlu0 %436
    %440 = vrot.lane.b32.xlu0 %v404, 96
    %v441 = vpop.permute.xlu0 %440
    %442 = vrot.lane.b32.xlu0 %v407, 96
    %v443 = vpop.permute.xlu0 %442
    %446 = vrot.lane.b32.xlu0 %v404, 64
    %v447 = vpop.permute.xlu0 %446
    %448 = vrot.lane.b32.xlu0 %v407, 64
    %v449 = vpop.permute.xlu0 %448
    %452 = vrot.lane.b32.xlu0 %v404, 32
    %v453 = vpop.permute.xlu0 %452
    %454 = vrot.lane.b32.xlu0 %v407, 32
    %v455 = vpop.permute.xlu0 %454
    %vm458 = vcmask 261120
    %v459 = vsel %vm458, %v361, 0
    %v461 = vsel %vm458, %v365, 0
    %v463 = vsel %vm458, %v363, 0
    %v465 = vsel %vm458, %v367, 0
    %467 = vmatprep.subr.mxu0 0.0
    %468 = vmatpush1.xpose.msra.mxu0 0.0
    %469 = vmatprep.subr.mxu0 0.0
    %470 = vmatpush1.xpose.msra.mxu0 0.0
    %471 = vmatprep.subr.mxu0 0.0
    %472 = vmatpush1.xpose.msra.mxu0 0.0
    %473 = vmatprep.subr.mxu0 0.0
    %474 = vmatpush1.xpose.msra.mxu0 0.0
    %475 = vmatprep.subr.mxu0 0.0
    %476 = vmatpush1.xpose.msra.mxu0 0.0
    %477 = vmatprep.subr.mxu0 0.0
    %478 = vmatpush1.xpose.msra.mxu0 0.0
    %479 = vmatprep.subr.mxu0 0.0
    %480 = vmatpush1.xpose.msra.mxu0 0.0
    %481 = vmatprep.subr.mxu0 0.0
    %482 = vmatpush1.xpose.msra.mxu0 0.0
    %483 = vmatprep.subr.mxu0 0.0
    %484 = vmatpush1.xpose.msra.mxu0 0.0
    %485 = vmatprep.subr.mxu0 0.0
    %486 = vmatpush1.xpose.msra.mxu0 0.0
    %487 = vmatprep.subr.mxu0 0.0
    %488 = vmatpush1.xpose.msra.mxu0 0.0
    %489 = vmatprep.subr.mxu0 0.0
    %490 = vmatpush1.xpose.msra.mxu0 0.0
    %491 = vmatprep.subr.mxu0 0.0
    %492 = vmatpush1.xpose.msra.mxu0 0.0
    %493 = vmatprep.subr.mxu0 0.0
    %494 = vmatpush1.xpose.msra.mxu0 0.0
    %495 = vmatprep.subr.mxu0 0.0
    %496 = vmatpush1.xpose.msra.mxu0 %v465
    %497 = vmatprep.subr.mxu0 0.0
    %498 = vmatpush1.xpose.msra.mxu0 %v463
    %499 = vmatprep.subr.mxu0 0.0
    %500 = vmatpush2.xpose.msra.mxu0 0.0
    %501 = vmatprep.subr.mxu0 0.0
    %502 = vmatpush2.xpose.msra.mxu0 0.0
    %503 = vmatprep.subr.mxu0 0.0
    %504 = vmatpush2.xpose.msra.mxu0 0.0
    %505 = vmatprep.subr.mxu0 0.0
    %506 = vmatpush2.xpose.msra.mxu0 0.0
    %507 = vmatprep.subr.mxu0 0.0
    %508 = vmatpush2.xpose.msra.mxu0 0.0
    %509 = vmatprep.subr.mxu0 0.0
    %510 = vmatpush2.xpose.msra.mxu0 0.0
    %511 = vmatprep.subr.mxu0 0.0
    %512 = vmatpush2.xpose.msra.mxu0 0.0
    %513 = vmatprep.subr.mxu0 0.0
    %514 = vmatpush2.xpose.msra.mxu0 0.0
    %515 = vmatprep.subr.mxu0 0.0
    %516 = vmatpush2.xpose.msra.mxu0 0.0
    %517 = vmatprep.subr.mxu0 0.0
    %518 = vmatpush2.xpose.msra.mxu0 0.0
    %519 = vmatprep.subr.mxu0 0.0
    %520 = vmatpush2.xpose.msra.mxu0 0.0
    %521 = vmatprep.subr.mxu0 0.0
    %522 = vmatpush2.xpose.msra.mxu0 0.0
    %523 = vmatprep.subr.mxu0 0.0
    %524 = vmatpush2.xpose.msra.mxu0 0.0
    %525 = vmatprep.subr.mxu0 0.0
    %526 = vmatpush2.xpose.msra.mxu0 0.0
    %527 = vmatprep.subr.mxu0 0.0
    %528 = vmatpush2.xpose.msra.mxu0 0.0
    %529 = vmatprep.subr.mxu0 0.0
    %530 = vmatpush2.xpose.msra.mxu0 0.0
    %531 = vmatprep.mubr.f32.mxu0 0.0
    %532 = vmatmul.mubr.f32.gmra.mxu0 %v459
    %v533 = vpop.f32.mrf.mxu0
    %v534 = vadd.f32 %v145, %v533
    %v535 = vpop.f32.mrf.mxu0
    %536 = vmatprep.mubr.f32.mxu0 0.0
    %537 = vmatmul.mubr.f32.gmra.mxu0 %v461
    %v538 = vpop.f32.mrf.mxu0
    %v539 = vadd.f32 %v146, %v538
    %v540 = vpop.f32.mrf.mxu0
    %541 = vdwg.mxu0
    %v542 = vsel %vm458, %v413, 0
    %v544 = vsel %vm458, %v415, 0
    %v546 = vsel %vm458, %v427, 0
    %v548 = vsel %vm458, %v429, 0
    %550 = vmatprep.subr.mxu0 0.0
    %551 = vmatpush1.xpose.msra.mxu0 0.0
    %552 = vmatprep.subr.mxu0 0.0
    %553 = vmatpush1.xpose.msra.mxu0 0.0
    %554 = vmatprep.subr.mxu0 0.0
    %555 = vmatpush1.xpose.msra.mxu0 0.0
    %556 = vmatprep.subr.mxu0 0.0
    %557 = vmatpush1.xpose.msra.mxu0 0.0
    %558 = vmatprep.subr.mxu0 0.0
    %559 = vmatpush1.xpose.msra.mxu0 0.0
    %560 = vmatprep.subr.mxu0 0.0
    %561 = vmatpush1.xpose.msra.mxu0 0.0
    %562 = vmatprep.subr.mxu0 0.0
    %563 = vmatpush1.xpose.msra.mxu0 0.0
    %564 = vmatprep.subr.mxu0 0.0
    %565 = vmatpush1.xpose.msra.mxu0 0.0
    %566 = vmatprep.subr.mxu0 0.0
    %567 = vmatpush1.xpose.msra.mxu0 0.0
    %568 = vmatprep.subr.mxu0 0.0
    %569 = vmatpush1.xpose.msra.mxu0 0.0
    %570 = vmatprep.subr.mxu0 0.0
    %571 = vmatpush1.xpose.msra.mxu0 0.0
    %572 = vmatprep.subr.mxu0 0.0
    %573 = vmatpush1.xpose.msra.mxu0 0.0
    %574 = vmatprep.subr.mxu0 0.0
    %575 = vmatpush1.xpose.msra.mxu0 0.0
    %576 = vmatprep.subr.mxu0 0.0
    %577 = vmatpush1.xpose.msra.mxu0 0.0
    %578 = vmatprep.subr.mxu0 0.0
    %579 = vmatpush1.xpose.msra.mxu0 %v548
    %580 = vmatprep.subr.mxu0 0.0
    %581 = vmatpush1.xpose.msra.mxu0 %v546
    %582 = vmatprep.subr.mxu0 0.0
    %583 = vmatpush2.xpose.msra.mxu0 0.0
    %584 = vmatprep.subr.mxu0 0.0
    %585 = vmatpush2.xpose.msra.mxu0 0.0
    %586 = vmatprep.subr.mxu0 0.0
    %587 = vmatpush2.xpose.msra.mxu0 0.0
    %588 = vmatprep.subr.mxu0 0.0
    %589 = vmatpush2.xpose.msra.mxu0 0.0
    %590 = vmatprep.subr.mxu0 0.0
    %591 = vmatpush2.xpose.msra.mxu0 0.0
    %592 = vmatprep.subr.mxu0 0.0
    %593 = vmatpush2.xpose.msra.mxu0 0.0
    %594 = vmatprep.subr.mxu0 0.0
    %595 = vmatpush2.xpose.msra.mxu0 0.0
    %596 = vmatprep.subr.mxu0 0.0
    %597 = vmatpush2.xpose.msra.mxu0 0.0
    %598 = vmatprep.subr.mxu0 0.0
    %599 = vmatpush2.xpose.msra.mxu0 0.0
    %600 = vmatprep.subr.mxu0 0.0
    %601 = vmatpush2.xpose.msra.mxu0 0.0
    %602 = vmatprep.subr.mxu0 0.0
    %603 = vmatpush2.xpose.msra.mxu0 0.0
    %604 = vmatprep.subr.mxu0 0.0
    %605 = vmatpush2.xpose.msra.mxu0 0.0
    %606 = vmatprep.subr.mxu0 0.0
    %607 = vmatpush2.xpose.msra.mxu0 0.0
    %608 = vmatprep.subr.mxu0 0.0
    %609 = vmatpush2.xpose.msra.mxu0 0.0
    %610 = vmatprep.subr.mxu0 0.0
    %611 = vmatpush2.xpose.msra.mxu0 0.0
    %612 = vmatprep.subr.mxu0 0.0
    %613 = vmatpush2.xpose.msra.mxu0 0.0
    %614 = vmatprep.mubr.f32.mxu0 0.0
    %615 = vmatmul.mubr.f32.gmra.mxu0 %v542
    %v616 = vpop.f32.mrf.mxu0
    %v617 = vadd.f32 %v145, %v616
    %v618 = vpop.f32.mrf.mxu0
    %619 = vmatprep.mubr.f32.mxu0 0.0
    %620 = vmatmul.mubr.f32.gmra.mxu0 %v544
    %v621 = vpop.f32.mrf.mxu0
    %v622 = vadd.f32 %v146, %v621
    %v623 = vpop.f32.mrf.mxu0
    %624 = vdwg.mxu0
    %v625 = vsel %vm458, %v417, 0
    %v627 = vsel %vm458, %v419, 0
    %v629 = vsel %vm458, %v431, 0
    %v631 = vsel %vm458, %v433, 0
    %633 = vmatprep.subr.mxu0 0.0
    %634 = vmatpush1.xpose.msra.mxu0 0.0
    %635 = vmatprep.subr.mxu0 0.0
    %636 = vmatpush1.xpose.msra.mxu0 0.0
    %637 = vmatprep.subr.mxu0 0.0
    %638 = vmatpush1.xpose.msra.mxu0 0.0
    %639 = vmatprep.subr.mxu0 0.0
    %640 = vmatpush1.xpose.msra.mxu0 0.0
    %641 = vmatprep.subr.mxu0 0.0
    %642 = vmatpush1.xpose.msra.mxu0 0.0
    %643 = vmatprep.subr.mxu0 0.0
    %644 = vmatpush1.xpose.msra.mxu0 0.0
    %645 = vmatprep.subr.mxu0 0.0
    %646 = vmatpush1.xpose.msra.mxu0 0.0
    %647 = vmatprep.subr.mxu0 0.0
    %648 = vmatpush1.xpose.msra.mxu0 0.0
    %649 = vmatprep.subr.mxu0 0.0
    %650 = vmatpush1.xpose.msra.mxu0 0.0
    %651 = vmatprep.subr.mxu0 0.0
    %652 = vmatpush1.xpose.msra.mxu0 0.0
    %653 = vmatprep.subr.mxu0 0.0
    %654 = vmatpush1.xpose.msra.mxu0 0.0
    %655 = vmatprep.subr.mxu0 0.0
    %656 = vmatpush1.xpose.msra.mxu0 0.0
    %657 = vmatprep.subr.mxu0 0.0
    %658 = vmatpush1.xpose.msra.mxu0 0.0
    %659 = vmatprep.subr.mxu0 0.0
    %660 = vmatpush1.xpose.msra.mxu0 0.0
    %661 = vmatprep.subr.mxu0 0.0
    %662 = vmatpush1.xpose.msra.mxu0 %v631
    %663 = vmatprep.subr.mxu0 0.0
    %664 = vmatpush1.xpose.msra.mxu0 %v629
    %665 = vmatprep.subr.mxu0 0.0
    %666 = vmatpush2.xpose.msra.mxu0 0.0
    %667 = vmatprep.subr.mxu0 0.0
    %668 = vmatpush2.xpose.msra.mxu0 0.0
    %669 = vmatprep.subr.mxu0 0.0
    %670 = vmatpush2.xpose.msra.mxu0 0.0
    %671 = vmatprep.subr.mxu0 0.0
    %672 = vmatpush2.xpose.msra.mxu0 0.0
    %673 = vmatprep.subr.mxu0 0.0
    %674 = vmatpush2.xpose.msra.mxu0 0.0
    %675 = vmatprep.subr.mxu0 0.0
    %676 = vmatpush2.xpose.msra.mxu0 0.0
    %677 = vmatprep.subr.mxu0 0.0
    %678 = vmatpush2.xpose.msra.mxu0 0.0
    %679 = vmatprep.subr.mxu0 0.0
    %680 = vmatpush2.xpose.msra.mxu0 0.0
    %681 = vmatprep.subr.mxu0 0.0
    %682 = vmatpush2.xpose.msra.mxu0 0.0
    %683 = vmatprep.subr.mxu0 0.0
    %684 = vmatpush2.xpose.msra.mxu0 0.0
    %685 = vmatprep.subr.mxu0 0.0
    %686 = vmatpush2.xpose.msra.mxu0 0.0
    %687 = vmatprep.subr.mxu0 0.0
    %688 = vmatpush2.xpose.msra.mxu0 0.0
    %689 = vmatprep.subr.mxu0 0.0
    %690 = vmatpush2.xpose.msra.mxu0 0.0
    %691 = vmatprep.subr.mxu0 0.0
    %692 = vmatpush2.xpose.msra.mxu0 0.0
    %693 = vmatprep.subr.mxu0 0.0
    %694 = vmatpush2.xpose.msra.mxu0 0.0
    %695 = vmatprep.subr.mxu0 0.0
    %696 = vmatpush2.xpose.msra.mxu0 0.0
    %697 = vmatprep.mubr.f32.mxu0 0.0
    %698 = vmatmul.mubr.f32.gmra.mxu0 %v625
    %v699 = vpop.f32.mrf.mxu0
    %v700 = vadd.f32 %v145, %v699
    %v701 = vpop.f32.mrf.mxu0
    %702 = vmatprep.mubr.f32.mxu0 0.0
    %703 = vmatmul.mubr.f32.gmra.mxu0 %v627
    %v704 = vpop.f32.mrf.mxu0
    %v705 = vadd.f32 %v146, %v704
    %v706 = vpop.f32.mrf.mxu0
    %707 = vdwg.mxu0
    %v708 = vsel %vm458, %v421, 0
    %v710 = vsel %vm458, %v423, 0
    %v712 = vsel %vm458, %v435, 0
    %v714 = vsel %vm458, %v437, 0
    %716 = vmatprep.subr.mxu0 0.0
    %717 = vmatpush1.xpose.msra.mxu0 0.0
    %718 = vmatprep.subr.mxu0 0.0
    %719 = vmatpush1.xpose.msra.mxu0 0.0
    %720 = vmatprep.subr.mxu0 0.0
    %721 = vmatpush1.xpose.msra.mxu0 0.0
    %722 = vmatprep.subr.mxu0 0.0
    %723 = vmatpush1.xpose.msra.mxu0 0.0
    %724 = vmatprep.subr.mxu0 0.0
    %725 = vmatpush1.xpose.msra.mxu0 0.0
    %726 = vmatprep.subr.mxu0 0.0
    %727 = vmatpush1.xpose.msra.mxu0 0.0
    %728 = vmatprep.subr.mxu0 0.0
    %729 = vmatpush1.xpose.msra.mxu0 0.0
    %730 = vmatprep.subr.mxu0 0.0
    %731 = vmatpush1.xpose.msra.mxu0 0.0
    %732 = vmatprep.subr.mxu0 0.0
    %733 = vmatpush1.xpose.msra.mxu0 0.0
    %734 = vmatprep.subr.mxu0 0.0
    %735 = vmatpush1.xpose.msra.mxu0 0.0
    %736 = vmatprep.subr.mxu0 0.0
    %737 = vmatpush1.xpose.msra.mxu0 0.0
    %738 = vmatprep.subr.mxu0 0.0
    %739 = vmatpush1.xpose.msra.mxu0 0.0
    %740 = vmatprep.subr.mxu0 0.0
    %741 = vmatpush1.xpose.msra.mxu0 0.0
    %742 = vmatprep.subr.mxu0 0.0
    %743 = vmatpush1.xpose.msra.mxu0 0.0
    %744 = vmatprep.subr.mxu0 0.0
    %745 = vmatpush1.xpose.msra.mxu0 %v714
    %746 = vmatprep.subr.mxu0 0.0
    %747 = vmatpush1.xpose.msra.mxu0 %v712
    %748 = vmatprep.subr.mxu0 0.0
    %749 = vmatpush2.xpose.msra.mxu0 0.0
    %750 = vmatprep.subr.mxu0 0.0
    %751 = vmatpush2.xpose.msra.mxu0 0.0
    %752 = vmatprep.subr.mxu0 0.0
    %753 = vmatpush2.xpose.msra.mxu0 0.0
    %754 = vmatprep.subr.mxu0 0.0
    %755 = vmatpush2.xpose.msra.mxu0 0.0
    %756 = vmatprep.subr.mxu0 0.0
    %757 = vmatpush2.xpose.msra.mxu0 0.0
    %758 = vmatprep.subr.mxu0 0.0
    %759 = vmatpush2.xpose.msra.mxu0 0.0
    %760 = vmatprep.subr.mxu0 0.0
    %761 = vmatpush2.xpose.msra.mxu0 0.0
    %762 = vmatprep.subr.mxu0 0.0
    %763 = vmatpush2.xpose.msra.mxu0 0.0
    %764 = vmatprep.subr.mxu0 0.0
    %765 = vmatpush2.xpose.msra.mxu0 0.0
    %766 = vmatprep.subr.mxu0 0.0
    %767 = vmatpush2.xpose.msra.mxu0 0.0
    %768 = vmatprep.subr.mxu0 0.0
    %769 = vmatpush2.xpose.msra.mxu0 0.0
    %770 = vmatprep.subr.mxu0 0.0
    %771 = vmatpush2.xpose.msra.mxu0 0.0
    %772 = vmatprep.subr.mxu0 0.0
    %773 = vmatpush2.xpose.msra.mxu0 0.0
    %774 = vmatprep.subr.mxu0 0.0
    %775 = vmatpush2.xpose.msra.mxu0 0.0
    %776 = vmatprep.subr.mxu0 0.0
    %777 = vmatpush2.xpose.msra.mxu0 0.0
    %778 = vmatprep.subr.mxu0 0.0
    %779 = vmatpush2.xpose.msra.mxu0 0.0
    %780 = vmatprep.mubr.f32.mxu0 0.0
    %781 = vmatmul.mubr.f32.gmra.mxu0 %v708
    %v782 = vpop.f32.mrf.mxu0
    %v783 = vadd.f32 %v145, %v782
    %v784 = vpop.f32.mrf.mxu0
    %785 = vmatprep.mubr.f32.mxu0 0.0
    %786 = vmatmul.mubr.f32.gmra.mxu0 %v710
    %v787 = vpop.f32.mrf.mxu0
    %v788 = vadd.f32 %v146, %v787
    %v789 = vpop.f32.mrf.mxu0
    %790 = vdwg.mxu0
    %vm791 = vcmask 130048
    %v792 = vsel %vm791, %v534, -inf
    %793 = vmax.xlane.f32.xlu0 %v792
    %v794 = vpop.xlane.xlu0 %793
    %v795 = vsel %vm791, %v539, -inf
    %796 = vmax.xlane.f32.xlu0 %v795
    %v797 = vpop.xlane.xlu0 %796
    %v798 = vsel %vm791, %v617, -inf
    %799 = vmax.xlane.f32.xlu0 %v798
    %v800 = vpop.xlane.xlu0 %799
    %v801 = vsel %vm791, %v622, -inf
    %802 = vmax.xlane.f32.xlu0 %v801
    %v803 = vpop.xlane.xlu0 %802
    %v804 = vsel %vm791, %v700, -inf
    %805 = vmax.xlane.f32.xlu0 %v804
    %v806 = vpop.xlane.xlu0 %805
    %v807 = vsel %vm791, %v705, -inf
    %808 = vmax.xlane.f32.xlu0 %v807
    %v809 = vpop.xlane.xlu0 %808
    %v810 = vsel %vm791, %v783, -inf
    %811 = vmax.xlane.f32.xlu0 %v810
    %v812 = vpop.xlane.xlu0 %811
    %v813 = vsel %vm791, %v788, -inf
    %814 = vmax.xlane.f32.xlu0 %v813
    %v815 = vpop.xlane.xlu0 %814
    %v816 = vsub.f32 %v534, %v794
    %v817 = vsub.f32 %v539, %v797
    %v818 = vsub.f32 %v617, %v800
    %v819 = vsub.f32 %v622, %v803
    %v820 = vsub.f32 %v700, %v806
    %v821 = vsub.f32 %v705, %v809
    %v822 = vsub.f32 %v783, %v812
    %v823 = vsub.f32 %v788, %v815
    %v824 = vmul.f32 %v816, 1.442695
    %v825 = vpow.pop %v824
    %v826 = vmul.f32 %v817, 1.442695
    %v827 = vpow.pop %v826
    %v828 = vmul.f32 %v818, 1.442695
    %v829 = vpow.pop %v828
    %v830 = vmul.f32 %v819, 1.442695
    %v831 = vpow.pop %v830
    %v832 = vmul.f32 %v820, 1.442695
    %v833 = vpow.pop %v832
    %v834 = vmul.f32 %v821, 1.442695
    %v835 = vpow.pop %v834
    %v836 = vmul.f32 %v822, 1.442695
    %v837 = vpow.pop %v836
    %v838 = vmul.f32 %v823, 1.442695
    %v839 = vpow.pop %v838
    %v840 = vsel %vm791, %v825, 0.0
    %841 = vadd.xlane.f32.xlu0 %v840
    %v842 = vpop.xlane.xlu0 %841
    %v843 = vsel %vm791, %v827, 0.0
    %844 = vadd.xlane.f32.xlu0 %v843
    %v845 = vpop.xlane.xlu0 %844
    %v846 = vsel %vm791, %v829, 0.0
    %847 = vadd.xlane.f32.xlu0 %v846
    %v848 = vpop.xlane.xlu0 %847
    %v849 = vsel %vm791, %v831, 0.0
    %850 = vadd.xlane.f32.xlu0 %v849
    %v851 = vpop.xlane.xlu0 %850
    %v852 = vsel %vm791, %v833, 0.0
    %853 = vadd.xlane.f32.xlu0 %v852
    %v854 = vpop.xlane.xlu0 %853
    %v855 = vsel %vm791, %v835, 0.0
    %856 = vadd.xlane.f32.xlu0 %v855
    %v857 = vpop.xlane.xlu0 %856
    %v858 = vsel %vm791, %v837, 0.0
    %859 = vadd.xlane.f32.xlu0 %v858
    %v860 = vpop.xlane.xlu0 %859
    %v861 = vsel %vm791, %v839, 0.0
    %862 = vadd.xlane.f32.xlu0 %v861
    %v863 = vpop.xlane.xlu0 %862
    %v864 = vrcp.pop %v842
    %v865 = vrcp.pop %v845
    %v866 = vrcp.pop %v848
    %v867 = vrcp.pop %v851
    %v868 = vrcp.pop %v854
    %v869 = vrcp.pop %v857
    %v870 = vrcp.pop %v860
    %v871 = vrcp.pop %v863
    %v872 = vmul.f32 %v825, %v864
    %v873 = vmul.f32 %v827, %v865
    %v874 = vmul.f32 %v829, %v866
    %v875 = vmul.f32 %v831, %v867
    %v876 = vmul.f32 %v833, %v868
    %v877 = vmul.f32 %v835, %v869
    %v878 = vmul.f32 %v837, %v870
    %v879 = vmul.f32 %v839, %v871
    %v881 = vsel %vm791, %v872, 0
    %v884 = vsel %vm791, %v873, 0
    %886 = vmatprep.subr.mxu0 0.0
    %887 = vmatpush1.msra.mxu0 0.0
    %888 = vmatprep.subr.mxu0 0.0
    %889 = vmatpush1.msra.mxu0 0.0
    %890 = vmatprep.subr.mxu0 0.0
    %891 = vmatpush1.msra.mxu0 0.0
    %892 = vmatprep.subr.mxu0 0.0
    %893 = vmatpush1.msra.mxu0 0.0
    %894 = vmatprep.subr.mxu0 0.0
    %895 = vmatpush1.msra.mxu0 0.0
    %896 = vmatprep.subr.mxu0 0.0
    %897 = vmatpush1.msra.mxu0 0.0
    %898 = vmatprep.subr.mxu0 0.0
    %899 = vmatpush1.msra.mxu0 0.0
    %900 = vmatprep.subr.mxu0 0.0
    %901 = vmatpush1.msra.mxu0 0.0
    %902 = vmatprep.subr.mxu0 0.0
    %903 = vmatpush1.msra.mxu0 0.0
    %904 = vmatprep.subr.mxu0 0.0
    %905 = vmatpush1.msra.mxu0 0.0
    %906 = vmatprep.subr.mxu0 0.0
    %907 = vmatpush1.msra.mxu0 0.0
    %908 = vmatprep.subr.mxu0 0.0
    %909 = vmatpush1.msra.mxu0 0.0
    %910 = vmatprep.subr.mxu0 0.0
    %911 = vmatpush1.msra.mxu0 0.0
    %912 = vmatprep.subr.mxu0 0.0
    %913 = vmatpush1.msra.mxu0 0.0
    %914 = vmatprep.subr.mxu0 0.0
    %915 = vmatpush1.msra.mxu0 %v407
    %916 = vmatprep.subr.mxu0 0.0
    %917 = vmatpush1.msra.mxu0 %v404
    %918 = vmatprep.subr.mxu0 0.0
    %919 = vmatpush2.msra.mxu0 0.0
    %920 = vmatprep.subr.mxu0 0.0
    %921 = vmatpush2.msra.mxu0 0.0
    %922 = vmatprep.subr.mxu0 0.0
    %923 = vmatpush2.msra.mxu0 0.0
    %924 = vmatprep.subr.mxu0 0.0
    %925 = vmatpush2.msra.mxu0 0.0
    %926 = vmatprep.subr.mxu0 0.0
    %927 = vmatpush2.msra.mxu0 0.0
    %928 = vmatprep.subr.mxu0 0.0
    %929 = vmatpush2.msra.mxu0 0.0
    %930 = vmatprep.subr.mxu0 0.0
    %931 = vmatpush2.msra.mxu0 0.0
    %932 = vmatprep.subr.mxu0 0.0
    %933 = vmatpush2.msra.mxu0 0.0
    %934 = vmatprep.subr.mxu0 0.0
    %935 = vmatpush2.msra.mxu0 0.0
    %936 = vmatprep.subr.mxu0 0.0
    %937 = vmatpush2.msra.mxu0 0.0
    %938 = vmatprep.subr.mxu0 0.0
    %939 = vmatpush2.msra.mxu0 0.0
    %940 = vmatprep.subr.mxu0 0.0
    %941 = vmatpush2.msra.mxu0 0.0
    %942 = vmatprep.subr.mxu0 0.0
    %943 = vmatpush2.msra.mxu0 0.0
    %944 = vmatprep.subr.mxu0 0.0
    %945 = vmatpush2.msra.mxu0 0.0
    %946 = vmatprep.subr.mxu0 0.0
    %947 = vmatpush2.msra.mxu0 0.0
    %948 = vmatprep.subr.mxu0 0.0
    %949 = vmatpush2.msra.mxu0 0.0
    %950 = vmatprep.mubr.f32.mxu0 0.0
    %951 = vmatmul.mubr.f32.gmra.mxu0 %v881
    %v952 = vpop.f32.mrf.mxu0
    %v953 = vadd.f32 0.0, %v952
    %v954 = vpop.f32.mrf.mxu0
    %955 = vmatprep.mubr.f32.mxu0 0.0
    %956 = vmatmul.mubr.f32.gmra.mxu0 %v884
    %v957 = vpop.f32.mrf.mxu0
    %v958 = vadd.f32 0.0, %v957
    %v959 = vpop.f32.mrf.mxu0
    %960 = vdwg.mxu0
    %v962 = vsel %vm791, %v874, 0
    %v965 = vsel %vm791, %v875, 0
    %967 = vmatprep.subr.mxu0 0.0
    %968 = vmatpush1.msra.mxu0 0.0
    %969 = vmatprep.subr.mxu0 0.0
    %970 = vmatpush1.msra.mxu0 0.0
    %971 = vmatprep.subr.mxu0 0.0
    %972 = vmatpush1.msra.mxu0 0.0
    %973 = vmatprep.subr.mxu0 0.0
    %974 = vmatpush1.msra.mxu0 0.0
    %975 = vmatprep.subr.mxu0 0.0
    %976 = vmatpush1.msra.mxu0 0.0
    %977 = vmatprep.subr.mxu0 0.0
    %978 = vmatpush1.msra.mxu0 0.0
    %979 = vmatprep.subr.mxu0 0.0
    %980 = vmatpush1.msra.mxu0 0.0
    %981 = vmatprep.subr.mxu0 0.0
    %982 = vmatpush1.msra.mxu0 0.0
    %983 = vmatprep.subr.mxu0 0.0
    %984 = vmatpush1.msra.mxu0 0.0
    %985 = vmatprep.subr.mxu0 0.0
    %986 = vmatpush1.msra.mxu0 0.0
    %987 = vmatprep.subr.mxu0 0.0
    %988 = vmatpush1.msra.mxu0 0.0
    %989 = vmatprep.subr.mxu0 0.0
    %990 = vmatpush1.msra.mxu0 0.0
    %991 = vmatprep.subr.mxu0 0.0
    %992 = vmatpush1.msra.mxu0 0.0
    %993 = vmatprep.subr.mxu0 0.0
    %994 = vmatpush1.msra.mxu0 0.0
    %995 = vmatprep.subr.mxu0 0.0
    %996 = vmatpush1.msra.mxu0 %v443
    %997 = vmatprep.subr.mxu0 0.0
    %998 = vmatpush1.msra.mxu0 %v441
    %999 = vmatprep.subr.mxu0 0.0
    %1000 = vmatpush2.msra.mxu0 0.0
    %1001 = vmatprep.subr.mxu0 0.0
    %1002 = vmatpush2.msra.mxu0 0.0
    %1003 = vmatprep.subr.mxu0 0.0
    %1004 = vmatpush2.msra.mxu0 0.0
    %1005 = vmatprep.subr.mxu0 0.0
    %1006 = vmatpush2.msra.mxu0 0.0
    %1007 = vmatprep.subr.mxu0 0.0
    %1008 = vmatpush2.msra.mxu0 0.0
    %1009 = vmatprep.subr.mxu0 0.0
    %1010 = vmatpush2.msra.mxu0 0.0
    %1011 = vmatprep.subr.mxu0 0.0
    %1012 = vmatpush2.msra.mxu0 0.0
    %1013 = vmatprep.subr.mxu0 0.0
    %1014 = vmatpush2.msra.mxu0 0.0
    %1015 = vmatprep.subr.mxu0 0.0
    %1016 = vmatpush2.msra.mxu0 0.0
    %1017 = vmatprep.subr.mxu0 0.0
    %1018 = vmatpush2.msra.mxu0 0.0
    %1019 = vmatprep.subr.mxu0 0.0
    %1020 = vmatpush2.msra.mxu0 0.0
    %1021 = vmatprep.subr.mxu0 0.0
    %1022 = vmatpush2.msra.mxu0 0.0
    %1023 = vmatprep.subr.mxu0 0.0
    %1024 = vmatpush2.msra.mxu0 0.0
    %1025 = vmatprep.subr.mxu0 0.0
    %1026 = vmatpush2.msra.mxu0 0.0
    %1027 = vmatprep.subr.mxu0 0.0
    %1028 = vmatpush2.msra.mxu0 0.0
    %1029 = vmatprep.subr.mxu0 0.0
    %1030 = vmatpush2.msra.mxu0 0.0
    %1031 = vmatprep.mubr.f32.mxu0 0.0
    %1032 = vmatmul.mubr.f32.gmra.mxu0 %v962
    %v1033 = vpop.f32.mrf.mxu0
    %v1034 = vadd.f32 0.0, %v1033
    %v1035 = vpop.f32.mrf.mxu0
    %1036 = vmatprep.mubr.f32.mxu0 0.0
    %1037 = vmatmul.mubr.f32.gmra.mxu0 %v965
    %v1038 = vpop.f32.mrf.mxu0
    %v1039 = vadd.f32 0.0, %v1038
    %v1040 = vpop.f32.mrf.mxu0
    %1041 = vdwg.mxu0
    %v1043 = vsel %vm791, %v876, 0
    %v1046 = vsel %vm791, %v877, 0
    %1048 = vmatprep.subr.mxu0 0.0
    %1049 = vmatpush1.msra.mxu0 0.0
    %1050 = vmatprep.subr.mxu0 0.0
    %1051 = vmatpush1.msra.mxu0 0.0
    %1052 = vmatprep.subr.mxu0 0.0
    %1053 = vmatpush1.msra.mxu0 0.0
    %1054 = vmatprep.subr.mxu0 0.0
    %1055 = vmatpush1.msra.mxu0 0.0
    %1056 = vmatprep.subr.mxu0 0.0
    %1057 = vmatpush1.msra.mxu0 0.0
    %1058 = vmatprep.subr.mxu0 0.0
    %1059 = vmatpush1.msra.mxu0 0.0
    %1060 = vmatprep.subr.mxu0 0.0
    %1061 = vmatpush1.msra.mxu0 0.0
    %1062 = vmatprep.subr.mxu0 0.0
    %1063 = vmatpush1.msra.mxu0 0.0
    %1064 = vmatprep.subr.mxu0 0.0
    %1065 = vmatpush1.msra.mxu0 0.0
    %1066 = vmatprep.subr.mxu0 0.0
    %1067 = vmatpush1.msra.mxu0 0.0
    %1068 = vmatprep.subr.mxu0 0.0
    %1069 = vmatpush1.msra.mxu0 0.0
    %1070 = vmatprep.subr.mxu0 0.0
    %1071 = vmatpush1.msra.mxu0 0.0
    %1072 = vmatprep.subr.mxu0 0.0
    %1073 = vmatpush1.msra.mxu0 0.0
    %1074 = vmatprep.subr.mxu0 0.0
    %1075 = vmatpush1.msra.mxu0 0.0
    %1076 = vmatprep.subr.mxu0 0.0
    %1077 = vmatpush1.msra.mxu0 %v449
    %1078 = vmatprep.subr.mxu0 0.0
    %1079 = vmatpush1.msra.mxu0 %v447
    %1080 = vmatprep.subr.mxu0 0.0
    %1081 = vmatpush2.msra.mxu0 0.0
    %1082 = vmatprep.subr.mxu0 0.0
    %1083 = vmatpush2.msra.mxu0 0.0
    %1084 = vmatprep.subr.mxu0 0.0
    %1085 = vmatpush2.msra.mxu0 0.0
    %1086 = vmatprep.subr.mxu0 0.0
    %1087 = vmatpush2.msra.mxu0 0.0
    %1088 = vmatprep.subr.mxu0 0.0
    %1089 = vmatpush2.msra.mxu0 0.0
    %1090 = vmatprep.subr.mxu0 0.0
    %1091 = vmatpush2.msra.mxu0 0.0
    %1092 = vmatprep.subr.mxu0 0.0
    %1093 = vmatpush2.msra.mxu0 0.0
    %1094 = vmatprep.subr.mxu0 0.0
    %1095 = vmatpush2.msra.mxu0 0.0
    %1096 = vmatprep.subr.mxu0 0.0
    %1097 = vmatpush2.msra.mxu0 0.0
    %1098 = vmatprep.subr.mxu0 0.0
    %1099 = vmatpush2.msra.mxu0 0.0
    %1100 = vmatprep.subr.mxu0 0.0
    %1101 = vmatpush2.msra.mxu0 0.0
    %1102 = vmatprep.subr.mxu0 0.0
    %1103 = vmatpush2.msra.mxu0 0.0
    %1104 = vmatprep.subr.mxu0 0.0
    %1105 = vmatpush2.msra.mxu0 0.0
    %1106 = vmatprep.subr.mxu0 0.0
    %1107 = vmatpush2.msra.mxu0 0.0
    %1108 = vmatprep.subr.mxu0 0.0
    %1109 = vmatpush2.msra.mxu0 0.0
    %1110 = vmatprep.subr.mxu0 0.0
    %1111 = vmatpush2.msra.mxu0 0.0
    %1112 = vmatprep.mubr.f32.mxu0 0.0
    %1113 = vmatmul.mubr.f32.gmra.mxu0 %v1043
    %v1114 = vpop.f32.mrf.mxu0
    %v1115 = vadd.f32 0.0, %v1114
    %v1116 = vpop.f32.mrf.mxu0
    %1117 = vmatprep.mubr.f32.mxu0 0.0
    %1118 = vmatmul.mubr.f32.gmra.mxu0 %v1046
    %v1119 = vpop.f32.mrf.mxu0
    %v1120 = vadd.f32 0.0, %v1119
    %v1121 = vpop.f32.mrf.mxu0
    %1122 = vdwg.mxu0
    %v1124 = vsel %vm791, %v878, 0
    %v1127 = vsel %vm791, %v879, 0
    %1129 = vmatprep.subr.mxu0 0.0
    %1130 = vmatpush1.msra.mxu0 0.0
    %1131 = vmatprep.subr.mxu0 0.0
    %1132 = vmatpush1.msra.mxu0 0.0
    %1133 = vmatprep.subr.mxu0 0.0
    %1134 = vmatpush1.msra.mxu0 0.0
    %1135 = vmatprep.subr.mxu0 0.0
    %1136 = vmatpush1.msra.mxu0 0.0
    %1137 = vmatprep.subr.mxu0 0.0
    %1138 = vmatpush1.msra.mxu0 0.0
    %1139 = vmatprep.subr.mxu0 0.0
    %1140 = vmatpush1.msra.mxu0 0.0
    %1141 = vmatprep.subr.mxu0 0.0
    %1142 = vmatpush1.msra.mxu0 0.0
    %1143 = vmatprep.subr.mxu0 0.0
    %1144 = vmatpush1.msra.mxu0 0.0
    %1145 = vmatprep.subr.mxu0 0.0
    %1146 = vmatpush1.msra.mxu0 0.0
    %1147 = vmatprep.subr.mxu0 0.0
    %1148 = vmatpush1.msra.mxu0 0.0
    %1149 = vmatprep.subr.mxu0 0.0
    %1150 = vmatpush1.msra.mxu0 0.0
    %1151 = vmatprep.subr.mxu0 0.0
    %1152 = vmatpush1.msra.mxu0 0.0
    %1153 = vmatprep.subr.mxu0 0.0
    %1154 = vmatpush1.msra.mxu0 0.0
    %1155 = vmatprep.subr.mxu0 0.0
    %1156 = vmatpush1.msra.mxu0 0.0
    %1157 = vmatprep.subr.mxu0 0.0
    %1158 = vmatpush1.msra.mxu0 %v455
    %1159 = vmatprep.subr.mxu0 0.0
    %1160 = vmatpush1.msra.mxu0 %v453
    %1161 = vmatprep.subr.mxu0 0.0
    %1162 = vmatpush2.msra.mxu0 0.0
    %1163 = vmatprep.subr.mxu0 0.0
    %1164 = vmatpush2.msra.mxu0 0.0
    %1165 = vmatprep.subr.mxu0 0.0
    %1166 = vmatpush2.msra.mxu0 0.0
    %1167 = vmatprep.subr.mxu0 0.0
    %1168 = vmatpush2.msra.mxu0 0.0
    %1169 = vmatprep.subr.mxu0 0.0
    %1170 = vmatpush2.msra.mxu0 0.0
    %1171 = vmatprep.subr.mxu0 0.0
    %1172 = vmatpush2.msra.mxu0 0.0
    %1173 = vmatprep.subr.mxu0 0.0
    %1174 = vmatpush2.msra.mxu0 0.0
    %1175 = vmatprep.subr.mxu0 0.0
    %1176 = vmatpush2.msra.mxu0 0.0
    %1177 = vmatprep.subr.mxu0 0.0
    %1178 = vmatpush2.msra.mxu0 0.0
    %1179 = vmatprep.subr.mxu0 0.0
    %1180 = vmatpush2.msra.mxu0 0.0
    %1181 = vmatprep.subr.mxu0 0.0
    %1182 = vmatpush2.msra.mxu0 0.0
    %1183 = vmatprep.subr.mxu0 0.0
    %1184 = vmatpush2.msra.mxu0 0.0
    %1185 = vmatprep.subr.mxu0 0.0
    %1186 = vmatpush2.msra.mxu0 0.0
    %1187 = vmatprep.subr.mxu0 0.0
    %1188 = vmatpush2.msra.mxu0 0.0
    %1189 = vmatprep.subr.mxu0 0.0
    %1190 = vmatpush2.msra.mxu0 0.0
    %1191 = vmatprep.subr.mxu0 0.0
    %1192 = vmatpush2.msra.mxu0 0.0
    %1193 = vmatprep.mubr.f32.mxu0 0.0
    %1194 = vmatmul.mubr.f32.gmra.mxu0 %v1124
    %v1195 = vpop.f32.mrf.mxu0
    %v1196 = vadd.f32 0.0, %v1195
    %v1197 = vpop.f32.mrf.mxu0
    %1198 = vmatprep.mubr.f32.mxu0 0.0
    %1199 = vmatmul.mubr.f32.gmra.mxu0 %v1127
    %v1200 = vpop.f32.mrf.mxu0
    %v1201 = vadd.f32 0.0, %v1200
    %v1202 = vpop.f32.mrf.mxu0
    %1203 = vdwg.mxu0
    %1206 = vrot.lane.b32.xlu0 %v1034, 32
    %v1207 = vpop.permute.xlu0 %1206
    %1208 = vrot.lane.b32.xlu0 %v1039, 32
    %v1209 = vpop.permute.xlu0 %1208
    %1214 = vrot.lane.b32.xlu0 %v1115, 64
    %v1215 = vpop.permute.xlu0 %1214
    %1216 = vrot.lane.b32.xlu0 %v1120, 64
    %v1217 = vpop.permute.xlu0 %1216
    %1222 = vrot.lane.b32.xlu0 %v1196, 96
    %v1223 = vpop.permute.xlu0 %1222
    %1224 = vrot.lane.b32.xlu0 %v1201, 96
    %v1225 = vpop.permute.xlu0 %1224
    %v1228 = vsel %vm458, %v953, %v1207
    %v1229 = vsel %vm458, %v958, %v1209
    %vm1230 = vcmask 523264
    %v1231 = vsel %vm1230, %v1228, %v1215
    %v1232 = vsel %vm1230, %v1229, %v1217
    %vm1233 = vcmask 785408
    %v1234 = vsel %vm1233, %v1231, %v1223
    %v1235 = vsel %vm1233, %v1232, %v1225
    %v1236 = vpack.c.bf16 %v1235, %v1234
    %v1237 = vld [vmem:[#allocation10] sm:$0xf]
    %v1238 = vld [vmem:[#allocation10 + $0x4] sm:$0xf]
    %v1239 = vld [vmem:[#allocation10 + $0x8] sm:$0xf]
    %v1240 = vld [vmem:[#allocation10 + $0xc] sm:$0xf]
    %v1241 = vld [vmem:[#allocation10 + $0x10] sm:$0xf]
    %v1242 = vld [vmem:[#allocation10 + $0x14] sm:$0xf]
    %v1243 = vld [vmem:[#allocation10 + $0x18] sm:$0xf]
    %v1244 = vld [vmem:[#allocation10 + $0x1c] sm:$0xf]
    %v1245 = vld [vmem:[#allocation10 + $0x20] sm:$0xf]
    %v1246 = vld [vmem:[#allocation10 + $0x24] sm:$0xf]
    %v1247 = vld [vmem:[#allocation10 + $0x28] sm:$0xf]
    %v1248 = vld [vmem:[#allocation10 + $0x2c] sm:$0xf]
    %v1249 = vld [vmem:[#allocation10 + $0x30] sm:$0xf]
    %v1250 = vld [vmem:[#allocation10 + $0x34] sm:$0xf]
    %v1251 = vld [vmem:[#allocation10 + $0x38] sm:$0xf]
    %v1252 = vld [vmem:[#allocation10 + $0x3c] sm:$0xf]
    %v1253 = vlaneseq
    %v1254 = vshrl.u32 %v1253, 7
    %v1255 = vsub.s32 0, %v1254
    %v1256 = vrot.slane %v147, %v1255
    %v1273 = vunpack.c.l.b16 %v1237
    %v1274 = vunpack.c.l.b16 %v1238
    %v1275 = vunpack.c.l.b16 %v1239
    %v1276 = vunpack.c.l.b16 %v1240
    %v1277 = vunpack.c.l.b16 %v1241
    %v1278 = vunpack.c.l.b16 %v1242
    %v1279 = vunpack.c.l.b16 %v1243
    %v1280 = vunpack.c.l.b16 %v1244
    %v1281 = vunpack.c.l.b16 %v1245
    %v1282 = vunpack.c.l.b16 %v1246
    %v1283 = vunpack.c.l.b16 %v1247
    %v1284 = vunpack.c.l.b16 %v1248
    %v1285 = vunpack.c.l.b16 %v1249
    %v1286 = vunpack.c.l.b16 %v1250
    %v1287 = vunpack.c.l.b16 %v1251
    %v1288 = vunpack.c.l.b16 %v1252
    %v1289 = vpack.c.b16 %v1274, %v1273
    %v1290 = vpack.c.b16 %v1276, %v1275
    %v1291 = vpack.c.b16 %v1278, %v1277
    %v1292 = vpack.c.b16 %v1280, %v1279
    %v1293 = vpack.c.b16 %v1282, %v1281
    %v1294 = vpack.c.b16 %v1284, %v1283
    %v1295 = vpack.c.b16 %v1286, %v1285
    %v1296 = vpack.c.b16 %v1288, %v1287
    %1305 = vmatprep.subr.bf16.mxu0 0
    %1306 = vmatpush1.bf16.msra.mxu0 %v1296
    %1307 = vmatprep.subr.bf16.mxu0 0
    %1308 = vmatpush1.bf16.msra.mxu0 %v1295
    %1309 = vmatprep.subr.bf16.mxu0 0
    %1310 = vmatpush1.bf16.msra.mxu0 %v1294
    %1311 = vmatprep.subr.bf16.mxu0 0
    %1312 = vmatpush1.bf16.msra.mxu0 %v1293
    %1313 = vmatprep.subr.bf16.mxu0 0
    %1314 = vmatpush1.bf16.msra.mxu0 %v1292
    %1315 = vmatprep.subr.bf16.mxu0 0
    %1316 = vmatpush1.bf16.msra.mxu0 %v1291
    %1317 = vmatprep.subr.bf16.mxu0 0
    %1318 = vmatpush1.bf16.msra.mxu0 %v1290
    %1319 = vmatprep.subr.bf16.mxu0 0
    %1320 = vmatpush1.bf16.msra.mxu0 %v1289
    %1321 = vmatprep.subr.bf16.mxu0 0
    %1322 = vmatpush2.bf16.msra.mxu0 0
    %1323 = vmatprep.subr.bf16.mxu0 0
    %1324 = vmatpush2.bf16.msra.mxu0 0
    %1325 = vmatprep.subr.bf16.mxu0 0
    %1326 = vmatpush2.bf16.msra.mxu0 0
    %1327 = vmatprep.subr.bf16.mxu0 0
    %1328 = vmatpush2.bf16.msra.mxu0 0
    %1329 = vmatprep.subr.bf16.mxu0 0
    %1330 = vmatpush2.bf16.msra.mxu0 0
    %1331 = vmatprep.subr.bf16.mxu0 0
    %1332 = vmatpush2.bf16.msra.mxu0 0
    %1333 = vmatprep.subr.bf16.mxu0 0
    %1334 = vmatpush2.bf16.msra.mxu0 0
    %1335 = vmatprep.subr.bf16.mxu0 0
    %1336 = vmatpush2.bf16.msra.mxu0 0
    %1337 = vmatprep.mubr.bf16.mxu0 0
    %1338 = vmatmul.mubr.bf16.gmra.mxu0 %v1236
    %v1339 = vpop.f32.mrf.mxu0
    %v1340 = vadd.f32 %v1256, %v1339
    %v1341 = vpop.f32.mrf.mxu0
    %v1342 = vpop.f32.mrf.mxu0
    %v1343 = vadd.f32 %v1256, %v1342
    %v1344 = vpop.f32.mrf.mxu0
    %1345 = vdwg.mxu0
    %v1346 = vadd.f32 %v143, %v1340
    %v1347 = vadd.f32 %v144, %v1343
    %1348 = vadd.xlane.f32.xlu0 %v1346
    %v1349 = vpop.xlane.xlu0 %1348
    %1350 = vadd.xlane.f32.xlu0 %v1347
    %v1351 = vpop.xlane.xlu0 %1350
    %v1352 = vrcp.pop 128.0
    %v1353 = vmul.f32 %v1349, %v1352
    %v1354 = vmul.f32 %v1351, %v1352
    %v1355 = vsub.f32 %v1346, %v1353
    %v1356 = vsub.f32 %v1347, %v1354
    %v1357 = vmul.f32 %v1355, %v1355
    %v1358 = vmul.f32 %v1356, %v1356
    %1359 = vadd.xlane.f32.xlu0 %v1357
    %v1360 = vpop.xlane.xlu0 %1359
    %1361 = vadd.xlane.f32.xlu0 %v1358
    %v1362 = vpop.xlane.xlu0 %1361
    %v1363 = vmul.f32 %v1360, %v1352
    %v1364 = vmul.f32 %v1362, %v1352
    %v1365 = vadd.f32 %v1363, 1e-12
    %v1366 = vadd.f32 %v1364, 1e-12
    %v1367 = vrsqrt.pop %v1365
    %v1368 = vrsqrt.pop %v1366
    %v1369 = vmul.f32 %v1355, %v1367
    %v1370 = vmul.f32 %v1356, %v1368
    %v1371 = vlaneseq
    %v1372 = vshrl.u32 %v1371, 7
    %v1373 = vsub.s32 1, %v1372
    %v1374 = vrot.slane %v147, %v1373
    %v1375 = vmul.f32 %v1369, %v1374
    %v1376 = vmul.f32 %v1370, %v1374
    %v1377 = vlaneseq
    %v1378 = vshrl.u32 %v1377, 7
    %v1379 = vsub.s32 2, %v1378
    %v1380 = vrot.slane %v147, %v1379
    %v1381 = vadd.f32 %v1375, %v1380
    %v1382 = vadd.f32 %v1376, %v1380
    %v1383 = vpack.c.bf16 %v1382, %v1381
    %v1384 = vld [vmem:[#allocation11] sm:$0xff]
    %v1385 = vld [vmem:[#allocation11 + $0x8] sm:$0xff]
    %v1386 = vld [vmem:[#allocation11 + $0x10] sm:$0xff]
    %v1387 = vld [vmem:[#allocation11 + $0x18] sm:$0xff]
    %v1388 = vld [vmem:[#allocation11 + $0x20] sm:$0xff]
    %v1389 = vld [vmem:[#allocation11 + $0x28] sm:$0xff]
    %v1390 = vld [vmem:[#allocation11 + $0x30] sm:$0xff]
    %v1391 = vld [vmem:[#allocation11 + $0x38] sm:$0xff]
    %v1392 = vld [vmem:[#allocation11 + $0x40] sm:$0xff]
    %v1393 = vld [vmem:[#allocation11 + $0x48] sm:$0xff]
    %v1394 = vld [vmem:[#allocation11 + $0x50] sm:$0xff]
    %v1395 = vld [vmem:[#allocation11 + $0x58] sm:$0xff]
    %v1396 = vld [vmem:[#allocation11 + $0x60] sm:$0xff]
    %v1397 = vld [vmem:[#allocation11 + $0x68] sm:$0xff]
    %v1398 = vld [vmem:[#allocation11 + $0x70] sm:$0xff]
    %v1399 = vld [vmem:[#allocation11 + $0x78] sm:$0xff]
    %v1400 = vld [vmem:[%s6] sm:$0x3]
    %v1402 = vlaneseq
    %v1403 = vshrl.u32 %v1402, 7
    %v1404 = vsub.s32 0, %v1403
    %v1405 = vrot.slane %v1400, %v1404
    %v1406 = vlaneseq
    %v1407 = vshrl.u32 %v1406, 7
    %v1408 = vsub.s32 1, %v1407
    %v1409 = vrot.slane %v1400, %v1408
    %v1428 = vunpack.c.l.b16 %v1384
    %v1429 = vunpack.c.h.b16 %v1384
    %v1430 = vunpack.c.l.b16 %v1385
    %v1431 = vunpack.c.h.b16 %v1385
    %v1432 = vunpack.c.l.b16 %v1386
    %v1433 = vunpack.c.h.b16 %v1386
    %v1434 = vunpack.c.l.b16 %v1387
    %v1435 = vunpack.c.h.b16 %v1387
    %v1436 = vunpack.c.l.b16 %v1388
    %v1437 = vunpack.c.h.b16 %v1388
    %v1438 = vunpack.c.l.b16 %v1389
    %v1439 = vunpack.c.h.b16 %v1389
    %v1440 = vunpack.c.l.b16 %v1390
    %v1441 = vunpack.c.h.b16 %v1390
    %v1442 = vunpack.c.l.b16 %v1391
    %v1443 = vunpack.c.h.b16 %v1391
    %v1444 = vunpack.c.l.b16 %v1392
    %v1445 = vunpack.c.h.b16 %v1392
    %v1446 = vunpack.c.l.b16 %v1393
    %v1447 = vunpack.c.h.b16 %v1393
    %v1448 = vunpack.c.l.b16 %v1394
    %v1449 = vunpack.c.h.b16 %v1394
    %v1450 = vunpack.c.l.b16 %v1395
    %v1451 = vunpack.c.h.b16 %v1395
    %v1452 = vunpack.c.l.b16 %v1396
    %v1453 = vunpack.c.h.b16 %v1396
    %v1454 = vunpack.c.l.b16 %v1397
    %v1455 = vunpack.c.h.b16 %v1397
    %v1456 = vunpack.c.l.b16 %v1398
    %v1457 = vunpack.c.h.b16 %v1398
    %v1458 = vunpack.c.l.b16 %v1399
    %v1459 = vunpack.c.h.b16 %v1399
    %v1460 = vpack.c.b16 %v1430, %v1428
    %v1461 = vpack.c.b16 %v1431, %v1429
    %v1462 = vpack.c.b16 %v1434, %v1432
    %v1463 = vpack.c.b16 %v1435, %v1433
    %v1464 = vpack.c.b16 %v1438, %v1436
    %v1465 = vpack.c.b16 %v1439, %v1437
    %v1466 = vpack.c.b16 %v1442, %v1440
    %v1467 = vpack.c.b16 %v1443, %v1441
    %v1468 = vpack.c.b16 %v1446, %v1444
    %v1469 = vpack.c.b16 %v1447, %v1445
    %v1470 = vpack.c.b16 %v1450, %v1448
    %v1471 = vpack.c.b16 %v1451, %v1449
    %v1472 = vpack.c.b16 %v1454, %v1452
    %v1473 = vpack.c.b16 %v1455, %v1453
    %v1474 = vpack.c.b16 %v1458, %v1456
    %v1475 = vpack.c.b16 %v1459, %v1457
    %1492 = vmatprep.subr.bf16.mxu0 %v1475
    %1493 = vmatpush1.bf16.msra.mxu0 %v1474
    %1494 = vmatprep.subr.bf16.mxu0 %v1473
    %1495 = vmatpush1.bf16.msra.mxu0 %v1472
    %1496 = vmatprep.subr.bf16.mxu0 %v1471
    %1497 = vmatpush1.bf16.msra.mxu0 %v1470
    %1498 = vmatprep.subr.bf16.mxu0 %v1469
    %1499 = vmatpush1.bf16.msra.mxu0 %v1468
    %1500 = vmatprep.subr.bf16.mxu0 %v1467
    %1501 = vmatpush1.bf16.msra.mxu0 %v1466
    %1502 = vmatprep.subr.bf16.mxu0 %v1465
    %1503 = vmatpush1.bf16.msra.mxu0 %v1464
    %1504 = vmatprep.subr.bf16.mxu0 %v1463
    %1505 = vmatpush1.bf16.msra.mxu0 %v1462
    %1506 = vmatprep.subr.bf16.mxu0 %v1461
    %1507 = vmatpush1.bf16.msra.mxu0 %v1460
    %1508 = vmatprep.subr.bf16.mxu0 0
    %1509 = vmatpush2.bf16.msra.mxu0 0
    %1510 = vmatprep.subr.bf16.mxu0 0
    %1511 = vmatpush2.bf16.msra.mxu0 0
    %1512 = vmatprep.subr.bf16.mxu0 0
    %1513 = vmatpush2.bf16.msra.mxu0 0
    %1514 = vmatprep.subr.bf16.mxu0 0
    %1515 = vmatpush2.bf16.msra.mxu0 0
    %1516 = vmatprep.subr.bf16.mxu0 0
    %1517 = vmatpush2.bf16.msra.mxu0 0
    %1518 = vmatprep.subr.bf16.mxu0 0
    %1519 = vmatpush2.bf16.msra.mxu0 0
    %1520 = vmatprep.subr.bf16.mxu0 0
    %1521 = vmatpush2.bf16.msra.mxu0 0
    %1522 = vmatprep.subr.bf16.mxu0 0
    %1523 = vmatpush2.bf16.msra.mxu0 0
    %1524 = vmatprep.mubr.bf16.mxu0 0
    %1525 = vmatmul.mubr.bf16.gmra.mxu0 %v1383
    %v1526 = vpop.f32.mrf.mxu0
    %v1527 = vadd.f32 %v1405, %v1526
    %v1528 = vpop.f32.mrf.mxu0
    %v1529 = vadd.f32 %v1409, %v1528
    %v1530 = vpop.f32.mrf.mxu0
    %v1531 = vadd.f32 %v1405, %v1530
    %v1532 = vpop.f32.mrf.mxu0
    %v1533 = vadd.f32 %v1409, %v1532
    %1534 = vdwg.mxu0
    %v1535 = vmul.f32 %v1527, %v1527
    %v1536 = vmul.f32 %v1529, %v1529
    %v1537 = vmul.f32 %v1531, %v1531
    %v1538 = vmul.f32 %v1533, %v1533
    %v1539 = vmul.f32 %v1527, %v1535
    %v1540 = vmul.f32 %v1529, %v1536
    %v1541 = vmul.f32 %v1531, %v1537
    %v1542 = vmul.f32 %v1533, %v1538
    %v1543 = vmul.f32 %v1539, 0.044715
    %v1544 = vmul.f32 %v1540, 0.044715
    %v1545 = vmul.f32 %v1541, 0.044715
    %v1546 = vmul.f32 %v1542, 0.044715
    %v1547 = vadd.f32 %v1527, %v1543
    %v1548 = vadd.f32 %v1529, %v1544
    %v1549 = vadd.f32 %v1531, %v1545
    %v1550 = vadd.f32 %v1533, %v1546
    %v1551 = vmul.f32 %v1547, 0.7978846
    %v1552 = vmul.f32 %v1548, 0.7978846
    %v1553 = vmul.f32 %v1549, 0.7978846
    %v1554 = vmul.f32 %v1550, 0.7978846
    %v1555 = vtanh.pop %v1551
    %v1556 = vtanh.pop %v1552
    %v1557 = vtanh.pop %v1553
    %v1558 = vtanh.pop %v1554
    %v1559 = vadd.f32 %v1555, 1.0
    %v1560 = vadd.f32 %v1556, 1.0
    %v1561 = vadd.f32 %v1557, 1.0
    %v1562 = vadd.f32 %v1558, 1.0
    %v1563 = vmul.f32 %v1559, 0.5
    %v1564 = vmul.f32 %v1560, 0.5
    %v1565 = vmul.f32 %v1561, 0.5
    %v1566 = vmul.f32 %v1562, 0.5
    %v1567 = vmul.f32 %v1527, %v1563
    %v1568 = vmul.f32 %v1529, %v1564
    %v1569 = vmul.f32 %v1531, %v1565
    %v1570 = vmul.f32 %v1533, %v1566
    %v1571 = vpack.c.bf16 %v1569, %v1567
    %v1572 = vpack.c.bf16 %v1570, %v1568
    %v1573 = vld [vmem:[#allocation13] sm:$0xf]
    %v1574 = vld [vmem:[#allocation13 + $0x4] sm:$0xf]
    %v1575 = vld [vmem:[#allocation13 + $0x8] sm:$0xf]
    %v1576 = vld [vmem:[#allocation13 + $0xc] sm:$0xf]
    %v1577 = vld [vmem:[#allocation13 + $0x10] sm:$0xf]
    %v1578 = vld [vmem:[#allocation13 + $0x14] sm:$0xf]
    %v1579 = vld [vmem:[#allocation13 + $0x18] sm:$0xf]
    %v1580 = vld [vmem:[#allocation13 + $0x1c] sm:$0xf]
    %v1581 = vld [vmem:[#allocation13 + $0x20] sm:$0xf]
    %v1582 = vld [vmem:[#allocation13 + $0x24] sm:$0xf]
    %v1583 = vld [vmem:[#allocation13 + $0x28] sm:$0xf]
    %v1584 = vld [vmem:[#allocation13 + $0x2c] sm:$0xf]
    %v1585 = vld [vmem:[#allocation13 + $0x30] sm:$0xf]
    %v1586 = vld [vmem:[#allocation13 + $0x34] sm:$0xf]
    %v1587 = vld [vmem:[#allocation13 + $0x38] sm:$0xf]
    %v1588 = vld [vmem:[#allocation13 + $0x3c] sm:$0xf]
    %v1589 = vld [vmem:[#allocation13 + $0x40] sm:$0xf]
    %v1590 = vld [vmem:[#allocation13 + $0x44] sm:$0xf]
    %v1591 = vld [vmem:[#allocation13 + $0x48] sm:$0xf]
    %v1592 = vld [vmem:[#allocation13 + $0x4c] sm:$0xf]
    %v1593 = vld [vmem:[#allocation13 + $0x50] sm:$0xf]
    %v1594 = vld [vmem:[#allocation13 + $0x54] sm:$0xf]
    %v1595 = vld [vmem:[#allocation13 + $0x58] sm:$0xf]
    %v1596 = vld [vmem:[#allocation13 + $0x5c] sm:$0xf]
    %v1597 = vld [vmem:[#allocation13 + $0x60] sm:$0xf]
    %v1598 = vld [vmem:[#allocation13 + $0x64] sm:$0xf]
    %v1599 = vld [vmem:[#allocation13 + $0x68] sm:$0xf]
    %v1600 = vld [vmem:[#allocation13 + $0x6c] sm:$0xf]
    %v1601 = vld [vmem:[#allocation13 + $0x70] sm:$0xf]
    %v1602 = vld [vmem:[#allocation13 + $0x74] sm:$0xf]
    %v1603 = vld [vmem:[#allocation13 + $0x78] sm:$0xf]
    %v1604 = vld [vmem:[#allocation13 + $0x7c] sm:$0xf]
    %v1605 = vlaneseq
    %v1606 = vshrl.u32 %v1605, 7
    %v1607 = vsub.s32 3, %v1606
    %v1608 = vrot.slane %v147, %v1607
    %v1641 = vunpack.c.l.b16 %v1573
    %v1642 = vunpack.c.l.b16 %v1574
    %v1643 = vunpack.c.l.b16 %v1575
    %v1644 = vunpack.c.l.b16 %v1576
    %v1645 = vunpack.c.l.b16 %v1577
    %v1646 = vunpack.c.l.b16 %v1578
    %v1647 = vunpack.c.l.b16 %v1579
    %v1648 = vunpack.c.l.b16 %v1580
    %v1649 = vunpack.c.l.b16 %v1581
    %v1650 = vunpack.c.l.b16 %v1582
    %v1651 = vunpack.c.l.b16 %v1583
    %v1652 = vunpack.c.l.b16 %v1584
    %v1653 = vunpack.c.l.b16 %v1585
    %v1654 = vunpack.c.l.b16 %v1586
    %v1655 = vunpack.c.l.b16 %v1587
    %v1656 = vunpack.c.l.b16 %v1588
    %v1657 = vunpack.c.l.b16 %v1589
    %v1658 = vunpack.c.l.b16 %v1590
    %v1659 = vunpack.c.l.b16 %v1591
    %v1660 = vunpack.c.l.b16 %v1592
    %v1661 = vunpack.c.l.b16 %v1593
    %v1662 = vunpack.c.l.b16 %v1594
    %v1663 = vunpack.c.l.b16 %v1595
    %v1664 = vunpack.c.l.b16 %v1596
    %v1665 = vunpack.c.l.b16 %v1597
    %v1666 = vunpack.c.l.b16 %v1598
    %v1667 = vunpack.c.l.b16 %v1599
    %v1668 = vunpack.c.l.b16 %v1600
    %v1669 = vunpack.c.l.b16 %v1601
    %v1670 = vunpack.c.l.b16 %v1602
    %v1671 = vunpack.c.l.b16 %v1603
    %v1672 = vunpack.c.l.b16 %v1604
    %v1673 = vpack.c.b16 %v1642, %v1641
    %v1674 = vpack.c.b16 %v1644, %v1643
    %v1675 = vpack.c.b16 %v1646, %v1645
    %v1676 = vpack.c.b16 %v1648, %v1647
    %v1677 = vpack.c.b16 %v1650, %v1649
    %v1678 = vpack.c.b16 %v1652, %v1651
    %v1679 = vpack.c.b16 %v1654, %v1653
    %v1680 = vpack.c.b16 %v1656, %v1655
    %v1681 = vpack.c.b16 %v1658, %v1657
    %v1682 = vpack.c.b16 %v1660, %v1659
    %v1683 = vpack.c.b16 %v1662, %v1661
    %v1684 = vpack.c.b16 %v1664, %v1663
    %v1685 = vpack.c.b16 %v1666, %v1665
    %v1686 = vpack.c.b16 %v1668, %v1667
    %v1687 = vpack.c.b16 %v1670, %v1669
    %v1688 = vpack.c.b16 %v1672, %v1671
    %1705 = vmatprep.subr.bf16.mxu0 0
    %1706 = vmatpush1.bf16.msra.mxu0 %v1680
    %1707 = vmatprep.subr.bf16.mxu0 0
    %1708 = vmatpush1.bf16.msra.mxu0 %v1679
    %1709 = vmatprep.subr.bf16.mxu0 0
    %1710 = vmatpush1.bf16.msra.mxu0 %v1678
    %1711 = vmatprep.subr.bf16.mxu0 0
    %1712 = vmatpush1.bf16.msra.mxu0 %v1677
    %1713 = vmatprep.subr.bf16.mxu0 0
    %1714 = vmatpush1.bf16.msra.mxu0 %v1676
    %1715 = vmatprep.subr.bf16.mxu0 0
    %1716 = vmatpush1.bf16.msra.mxu0 %v1675
    %1717 = vmatprep.subr.bf16.mxu0 0
    %1718 = vmatpush1.bf16.msra.mxu0 %v1674
    %1719 = vmatprep.subr.bf16.mxu0 0
    %1720 = vmatpush1.bf16.msra.mxu0 %v1673
    %1721 = vmatprep.subr.bf16.mxu0 0
    %1722 = vmatpush2.bf16.msra.mxu0 %v1688
    %1723 = vmatprep.subr.bf16.mxu0 0
    %1724 = vmatpush2.bf16.msra.mxu0 %v1687
    %1725 = vmatprep.subr.bf16.mxu0 0
    %1726 = vmatpush2.bf16.msra.mxu0 %v1686
    %1727 = vmatprep.subr.bf16.mxu0 0
    %1728 = vmatpush2.bf16.msra.mxu0 %v1685
    %1729 = vmatprep.subr.bf16.mxu0 0
    %1730 = vmatpush2.bf16.msra.mxu0 %v1684
    %1731 = vmatprep.subr.bf16.mxu0 0
    %1732 = vmatpush2.bf16.msra.mxu0 %v1683
    %1733 = vmatprep.subr.bf16.mxu0 0
    %1734 = vmatpush2.bf16.msra.mxu0 %v1682
    %1735 = vmatprep.subr.bf16.mxu0 0
    %1736 = vmatpush2.bf16.msra.mxu0 %v1681
    %1737 = vmatprep.mubr.bf16.mxu0 %v1572
    %1738 = vmatmul.mubr.bf16.gmra.mxu0 %v1571
    %v1739 = vpop.f32.mrf.mxu0
    %v1740 = vadd.f32 %v1608, %v1739
    %v1741 = vpop.f32.mrf.mxu0
    %v1742 = vpop.f32.mrf.mxu0
    %v1743 = vadd.f32 %v1608, %v1742
    %v1744 = vpop.f32.mrf.mxu0
    %1745 = vdwg.mxu0
    %v1746 = vadd.f32 %v1381, %v1740
    %v1747 = vadd.f32 %v1382, %v1743
    %1748 = vadd.xlane.f32.xlu0 %v1746
    %v1749 = vpop.xlane.xlu0 %1748
    %1750 = vadd.xlane.f32.xlu0 %v1747
    %v1751 = vpop.xlane.xlu0 %1750
    %v1752 = vmul.f32 %v1749, %v1352
    %v1753 = vmul.f32 %v1751, %v1352
    %v1754 = vsub.f32 %v1746, %v1752
    %v1755 = vsub.f32 %v1747, %v1753
    %v1756 = vmul.f32 %v1754, %v1754
    %v1757 = vmul.f32 %v1755, %v1755
    %1758 = vadd.xlane.f32.xlu0 %v1756
    %v1759 = vpop.xlane.xlu0 %1758
    %1760 = vadd.xlane.f32.xlu0 %v1757
    %v1761 = vpop.xlane.xlu0 %1760
    %v1762 = vmul.f32 %v1759, %v1352
    %v1763 = vmul.f32 %v1761, %v1352
    %v1764 = vadd.f32 %v1762, 1e-12
    %v1765 = vadd.f32 %v1763, 1e-12
    %v1766 = vrsqrt.pop %v1764
    %v1767 = vrsqrt.pop %v1765
    %v1768 = vmul.f32 %v1754, %v1766
    %v1769 = vmul.f32 %v1755, %v1767
    %v1770 = vlaneseq
    %v1771 = vshrl.u32 %v1770, 7
    %v1772 = vsub.s32 4, %v1771
    %v1773 = vrot.slane %v147, %v1772
    %v1774 = vmul.f32 %v1768, %v1773
    %v1775 = vmul.f32 %v1769, %v1773
    %v1776 = vlaneseq
    %v1777 = vshrl.u32 %v1776, 7
    %v1778 = vsub.s32 5, %v1777
    %v1779 = vrot.slane %v147, %v1778
    %v1780 = vadd.f32 %v1774, %v1779
    %v1781 = vadd.f32 %v1775, %v1779
    %s1782 = scalar_lea.vmem [#allocation14], 8
    %v1783 = vld [vmem:[%s1782] sm:$0xff]
    %v1784 = vpack.c.bf16 %v1781, %v1780
    %s1785 = scalar_lea.vmem [#allocation7], 192
    %v1786 = vld [vmem:[%s1785] sm:$0xff]
    %v1787 = vld [vmem:[%s1785 + $0x8] sm:$0xf]
    %v1788 = vld [vmem:[%s1785 + $0xc] sm:$0xff]
    %v1789 = vld [vmem:[%s1785 + $0x14] sm:$0xf]
    %v1790 = vld [vmem:[%s1785 + $0x18] sm:$0xff]
    %v1791 = vld [vmem:[%s1785 + $0x20] sm:$0xf]
    %v1792 = vld [vmem:[%s1785 + $0x24] sm:$0xff]
    %v1793 = vld [vmem:[%s1785 + $0x2c] sm:$0xf]
    %v1794 = vld [vmem:[%s1785 + $0x30] sm:$0xff]
    %v1795 = vld [vmem:[%s1785 + $0x38] sm:$0xf]
    %v1796 = vld [vmem:[%s1785 + $0x3c] sm:$0xff]
    %v1797 = vld [vmem:[%s1785 + $0x44] sm:$0xf]
    %v1798 = vld [vmem:[%s1785 + $0x48] sm:$0xff]
    %v1799 = vld [vmem:[%s1785 + $0x50] sm:$0xf]
    %v1800 = vld [vmem:[%s1785 + $0x54] sm:$0xff]
    %v1801 = vld [vmem:[%s1785 + $0x5c] sm:$0xf]
    %v1802 = vld [vmem:[%s1785 + $0x60] sm:$0xff]
    %v1803 = vld [vmem:[%s1785 + $0x68] sm:$0xf]
    %v1804 = vld [vmem:[%s1785 + $0x6c] sm:$0xff]
    %v1805 = vld [vmem:[%s1785 + $0x74] sm:$0xf]
    %v1806 = vld [vmem:[%s1785 + $0x78] sm:$0xff]
    %v1807 = vld [vmem:[%s1785 + $0x80] sm:$0xf]
    %v1808 = vld [vmem:[%s1785 + $0x84] sm:$0xff]
    %v1809 = vld [vmem:[%s1785 + $0x8c] sm:$0xf]
    %v1810 = vld [vmem:[%s1785 + $0x90] sm:$0xff]
    %v1811 = vld [vmem:[%s1785 + $0x98] sm:$0xf]
    %v1812 = vld [vmem:[%s1785 + $0x9c] sm:$0xff]
    %v1813 = vld [vmem:[%s1785 + $0xa4] sm:$0xf]
    %v1814 = vld [vmem:[%s1785 + $0xa8] sm:$0xff]
    %v1815 = vld [vmem:[%s1785 + $0xb0] sm:$0xf]
    %v1816 = vld [vmem:[%s1785 + $0xb4] sm:$0xff]
    %v1817 = vld [vmem:[%s1785 + $0xbc] sm:$0xf]
    %s1818 = scalar_lea.vmem [#allocation8], 3
    %v1819 = vld [vmem:[%s1818] sm:$0x7]
    %v1821 = vlaneseq
    %v1822 = vshrl.u32 %v1821, 7
    %v1823 = vsub.s32 0, %v1822
    %v1824 = vrot.slane %v1819, %v1823
    %v1825 = vlaneseq
    %v1826 = vshrl.u32 %v1825, 7
    %v1827 = vsub.s32 1, %v1826
    %v1828 = vrot.slane %v1819, %v1827
    %v1829 = vlaneseq
    %v1830 = vshrl.u32 %v1829, 7
    %v1831 = vsub.s32 2, %v1830
    %v1832 = vrot.slane %v1819, %v1831
    %v1868 = vunpack.c.l.b16 %v1786
    %v1869 = vunpack.c.h.b16 %v1786
    %v1870 = vunpack.c.l.b16 %v1787
    %v1871 = vunpack.c.l.b16 %v1788
    %v1872 = vunpack.c.h.b16 %v1788
    %v1873 = vunpack.c.l.b16 %v1789
    %v1874 = vunpack.c.l.b16 %v1790
    %v1875 = vunpack.c.h.b16 %v1790
    %v1876 = vunpack.c.l.b16 %v1791
    %v1877 = vunpack.c.l.b16 %v1792
    %v1878 = vunpack.c.h.b16 %v1792
    %v1879 = vunpack.c.l.b16 %v1793
    %v1880 = vunpack.c.l.b16 %v1794
    %v1881 = vunpack.c.h.b16 %v1794
    %v1882 = vunpack.c.l.b16 %v1795
    %v1883 = vunpack.c.l.b16 %v1796
    %v1884 = vunpack.c.h.b16 %v1796
    %v1885 = vunpack.c.l.b16 %v1797
    %v1886 = vunpack.c.l.b16 %v1798
    %v1887 = vunpack.c.h.b16 %v1798
    %v1888 = vunpack.c.l.b16 %v1799
    %v1889 = vunpack.c.l.b16 %v1800
    %v1890 = vunpack.c.h.b16 %v1800
    %v1891 = vunpack.c.l.b16 %v1801
    %v1892 = vunpack.c.l.b16 %v1802
    %v1893 = vunpack.c.h.b16 %v1802
    %v1894 = vunpack.c.l.b16 %v1803
    %v1895 = vunpack.c.l.b16 %v1804
    %v1896 = vunpack.c.h.b16 %v1804
    %v1897 = vunpack.c.l.b16 %v1805
    %v1898 = vunpack.c.l.b16 %v1806
    %v1899 = vunpack.c.h.b16 %v1806
    %v1900 = vunpack.c.l.b16 %v1807
    %v1901 = vunpack.c.l.b16 %v1808
    %v1902 = vunpack.c.h.b16 %v1808
    %v1903 = vunpack.c.l.b16 %v1809
    %v1904 = vunpack.c.l.b16 %v1810
    %v1905 = vunpack.c.h.b16 %v1810
    %v1906 = vunpack.c.l.b16 %v1811
    %v1907 = vunpack.c.l.b16 %v1812
    %v1908 = vunpack.c.h.b16 %v1812
    %v1909 = vunpack.c.l.b16 %v1813
    %v1910 = vunpack.c.l.b16 %v1814
    %v1911 = vunpack.c.h.b16 %v1814
    %v1912 = vunpack.c.l.b16 %v1815
    %v1913 = vunpack.c.l.b16 %v1816
    %v1914 = vunpack.c.h.b16 %v1816
    %v1915 = vunpack.c.l.b16 %v1817
    %v1916 = vpack.c.b16 %v1871, %v1868
    %v1917 = vpack.c.b16 %v1872, %v1869
    %v1918 = vpack.c.b16 %v1873, %v1870
    %v1919 = vpack.c.b16 %v1877, %v1874
    %v1920 = vpack.c.b16 %v1878, %v1875
    %v1921 = vpack.c.b16 %v1879, %v1876
    %v1922 = vpack.c.b16 %v1883, %v1880
    %v1923 = vpack.c.b16 %v1884, %v1881
    %v1924 = vpack.c.b16 %v1885, %v1882
    %v1925 = vpack.c.b16 %v1889, %v1886
    %v1926 = vpack.c.b16 %v1890, %v1887
    %v1927 = vpack.c.b16 %v1891, %v1888
    %v1928 = vpack.c.b16 %v1895, %v1892
    %v1929 = vpack.c.b16 %v1896, %v1893
    %v1930 = vpack.c.b16 %v1897, %v1894
    %v1931 = vpack.c.b16 %v1901, %v1898
    %v1932 = vpack.c.b16 %v1902, %v1899
    %v1933 = vpack.c.b16 %v1903, %v1900
    %v1934 = vpack.c.b16 %v1907, %v1904
    %v1935 = vpack.c.b16 %v1908, %v1905
    %v1936 = vpack.c.b16 %v1909, %v1906
    %v1937 = vpack.c.b16 %v1913, %v1910
    %v1938 = vpack.c.b16 %v1914, %v1911
    %v1939 = vpack.c.b16 %v1915, %v1912
    %1964 = vmatprep.subr.bf16.mxu0 %v1938
    %1965 = vmatpush1.bf16.msra.mxu0 %v1937
    %1966 = vmatprep.subr.bf16.mxu0 %v1935
    %1967 = vmatpush1.bf16.msra.mxu0 %v1934
    %1968 = vmatprep.subr.bf16.mxu0 %v1932
    %1969 = vmatpush1.bf16.msra.mxu0 %v1931
    %1970 = vmatprep.subr.bf16.mxu0 %v1929
    %1971 = vmatpush1.bf16.msra.mxu0 %v1928
    %1972 = vmatprep.subr.bf16.mxu0 %v1926
    %1973 = vmatpush1.bf16.msra.mxu0 %v1925
    %1974 = vmatprep.subr.bf16.mxu0 %v1923
    %1975 = vmatpush1.bf16.msra.mxu0 %v1922
    %1976 = vmatprep.subr.bf16.mxu0 %v1920
    %1977 = vmatpush1.bf16.msra.mxu0 %v1919
    %1978 = vmatprep.subr.bf16.mxu0 %v1917
    %1979 = vmatpush1.bf16.msra.mxu0 %v1916
    %1980 = vmatprep.subr.bf16.mxu0 0
    %1981 = vmatpush2.bf16.msra.mxu0 0
    %1982 = vmatprep.subr.bf16.mxu0 0
    %1983 = vmatpush2.bf16.msra.mxu0 0
    %1984 = vmatprep.subr.bf16.mxu0 0
    %1985 = vmatpush2.bf16.msra.mxu0 0
    %1986 = vmatprep.subr.bf16.mxu0 0
    %1987 = vmatpush2.bf16.msra.mxu0 0
    %1988 = vmatprep.subr.bf16.mxu0 0
    %1989 = vmatpush2.bf16.msra.mxu0 0
    %1990 = vmatprep.subr.bf16.mxu0 0
    %1991 = vmatpush2.bf16.msra.mxu0 0
    %1992 = vmatprep.subr.bf16.mxu0 0
    %1993 = vmatpush2.bf16.msra.mxu0 0
    %1994 = vmatprep.subr.bf16.mxu0 0
    %1995 = vmatpush2.bf16.msra.mxu0 0
    %1996 = vmatprep.mubr.bf16.mxu0 0
    %1997 = vmatmul.mubr.bf16.gmra.mxu0 %v1784
    %v1998 = vpop.f32.mrf.mxu0
    %v1999 = vadd.f32 %v1824, %v1998
    %v2000 = vpop.f32.mrf.mxu0
    %v2001 = vadd.f32 %v1828, %v2000
    %v2002 = vpop.f32.mrf.mxu0
    %v2003 = vadd.f32 %v1824, %v2002
    %v2004 = vpop.f32.mrf.mxu0
    %v2005 = vadd.f32 %v1828, %v2004
    %2006 = vdwg.mxu0
    %2007 = vmatprep.subr.bf16.mxu0 0
    %2008 = vmatpush1.bf16.msra.mxu0 %v1939
    %2009 = vmatprep.subr.bf16.mxu0 0
    %2010 = vmatpush1.bf16.msra.mxu0 %v1936
    %2011 = vmatprep.subr.bf16.mxu0 0
    %2012 = vmatpush1.bf16.msra.mxu0 %v1933
    %2013 = vmatprep.subr.bf16.mxu0 0
    %2014 = vmatpush1.bf16.msra.mxu0 %v1930
    %2015 = vmatprep.subr.bf16.mxu0 0
    %2016 = vmatpush1.bf16.msra.mxu0 %v1927
    %2017 = vmatprep.subr.bf16.mxu0 0
    %2018 = vmatpush1.bf16.msra.mxu0 %v1924
    %2019 = vmatprep.subr.bf16.mxu0 0
    %2020 = vmatpush1.bf16.msra.mxu0 %v1921
    %2021 = vmatprep.subr.bf16.mxu0 0
    %2022 = vmatpush1.bf16.msra.mxu0 %v1918
    %2023 = vmatprep.subr.bf16.mxu0 0
    %2024 = vmatpush2.bf16.msra.mxu0 0
    %2025 = vmatprep.subr.bf16.mxu0 0
    %2026 = vmatpush2.bf16.msra.mxu0 0
    %2027 = vmatprep.subr.bf16.mxu0 0
    %2028 = vmatpush2.bf16.msra.mxu0 0
    %2029 = vmatprep.subr.bf16.mxu0 0
    %2030 = vmatpush2.bf16.msra.mxu0 0
    %2031 = vmatprep.subr.bf16.mxu0 0
    %2032 = vmatpush2.bf16.msra.mxu0 0
    %2033 = vmatprep.subr.bf16.mxu0 0
    %2034 = vmatpush2.bf16.msra.mxu0 0
    %2035 = vmatprep.subr.bf16.mxu0 0
    %2036 = vmatpush2.bf16.msra.mxu0 0
    %2037 = vmatprep.subr.bf16.mxu0 0
    %2038 = vmatpush2.bf16.msra.mxu0 0
    %2039 = vmatprep.mubr.bf16.mxu0 0
    %2040 = vmatmul.mubr.bf16.gmra.mxu0 %v1784
    %v2041 = vpop.f32.mrf.mxu0
    %v2042 = vadd.f32 %v1832, %v2041
    %v2043 = vpop.f32.mrf.mxu0
    %v2044 = vpop.f32.mrf.mxu0
    %v2045 = vadd.f32 %v1832, %v2044
    %v2046 = vpop.f32.mrf.mxu0
    %2047 = vdwg.mxu0
    %2050 = vrot.lane.b32.xlu0 %v1999, 96
    %v2051 = vpop.permute.xlu0 %2050
    %2052 = vrot.lane.b32.xlu0 %v2003, 96
    %v2053 = vpop.permute.xlu0 %2052
    %2054 = vrot.lane.b32.xlu0 %v1999, 64
    %v2055 = vpop.permute.xlu0 %2054
    %2056 = vrot.lane.b32.xlu0 %v2003, 64
    %v2057 = vpop.permute.xlu0 %2056
    %2058 = vrot.lane.b32.xlu0 %v1999, 32
    %v2059 = vpop.permute.xlu0 %2058
    %2060 = vrot.lane.b32.xlu0 %v2003, 32
    %v2061 = vpop.permute.xlu0 %2060
    %2064 = vrot.lane.b32.xlu0 %v2001, 96
    %v2065 = vpop.permute.xlu0 %2064
    %2066 = vrot.lane.b32.xlu0 %v2005, 96
    %v2067 = vpop.permute.xlu0 %2066
    %2068 = vrot.lane.b32.xlu0 %v2001, 64
    %v2069 = vpop.permute.xlu0 %2068
    %2070 = vrot.lane.b32.xlu0 %v2005, 64
    %v2071 = vpop.permute.xlu0 %2070
    %2072 = vrot.lane.b32.xlu0 %v2001, 32
    %v2073 = vpop.permute.xlu0 %2072
    %2074 = vrot.lane.b32.xlu0 %v2005, 32
    %v2075 = vpop.permute.xlu0 %2074
    %2078 = vrot.lane.b32.xlu0 %v2042, 96
    %v2079 = vpop.permute.xlu0 %2078
    %2080 = vrot.lane.b32.xlu0 %v2045, 96
    %v2081 = vpop.permute.xlu0 %2080
    %2084 = vrot.lane.b32.xlu0 %v2042, 64
    %v2085 = vpop.permute.xlu0 %2084
    %2086 = vrot.lane.b32.xlu0 %v2045, 64
    %v2087 = vpop.permute.xlu0 %2086
    %2090 = vrot.lane.b32.xlu0 %v2042, 32
    %v2091 = vpop.permute.xlu0 %2090
    %2092 = vrot.lane.b32.xlu0 %v2045, 32
    %v2093 = vpop.permute.xlu0 %2092
    %v2096 = vsel %vm458, %v1999, 0
    %v2098 = vsel %vm458, %v2003, 0
    %v2100 = vsel %vm458, %v2001, 0
    %v2102 = vsel %vm458, %v2005, 0
    %2104 = vmatprep.subr.mxu0 0.0
    %2105 = vmatpush1.xpose.msra.mxu0 0.0
    %2106 = vmatprep.subr.mxu0 0.0
    %2107 = vmatpush1.xpose.msra.mxu0 0.0
    %2108 = vmatprep.subr.mxu0 0.0
    %2109 = vmatpush1.xpose.msra.mxu0 0.0
    %2110 = vmatprep.subr.mxu0 0.0
    %2111 = vmatpush1.xpose.msra.mxu0 0.0
    %2112 = vmatprep.subr.mxu0 0.0
    %2113 = vmatpush1.xpose.msra.mxu0 0.0
    %2114 = vmatprep.subr.mxu0 0.0
    %2115 = vmatpush1.xpose.msra.mxu0 0.0
    %2116 = vmatprep.subr.mxu0 0.0
    %2117 = vmatpush1.xpose.msra.mxu0 0.0
    %2118 = vmatprep.subr.mxu0 0.0
    %2119 = vmatpush1.xpose.msra.mxu0 0.0
    %2120 = vmatprep.subr.mxu0 0.0
    %2121 = vmatpush1.xpose.msra.mxu0 0.0
    %2122 = vmatprep.subr.mxu0 0.0
    %2123 = vmatpush1.xpose.msra.mxu0 0.0
    %2124 = vmatprep.subr.mxu0 0.0
    %2125 = vmatpush1.xpose.msra.mxu0 0.0
    %2126 = vmatprep.subr.mxu0 0.0
    %2127 = vmatpush1.xpose.msra.mxu0 0.0
    %2128 = vmatprep.subr.mxu0 0.0
    %2129 = vmatpush1.xpose.msra.mxu0 0.0
    %2130 = vmatprep.subr.mxu0 0.0
    %2131 = vmatpush1.xpose.msra.mxu0 0.0
    %2132 = vmatprep.subr.mxu0 0.0
    %2133 = vmatpush1.xpose.msra.mxu0 %v2102
    %2134 = vmatprep.subr.mxu0 0.0
    %2135 = vmatpush1.xpose.msra.mxu0 %v2100
    %2136 = vmatprep.subr.mxu0 0.0
    %2137 = vmatpush2.xpose.msra.mxu0 0.0
    %2138 = vmatprep.subr.mxu0 0.0
    %2139 = vmatpush2.xpose.msra.mxu0 0.0
    %2140 = vmatprep.subr.mxu0 0.0
    %2141 = vmatpush2.xpose.msra.mxu0 0.0
    %2142 = vmatprep.subr.mxu0 0.0
    %2143 = vmatpush2.xpose.msra.mxu0 0.0
    %2144 = vmatprep.subr.mxu0 0.0
    %2145 = vmatpush2.xpose.msra.mxu0 0.0
    %2146 = vmatprep.subr.mxu0 0.0
    %2147 = vmatpush2.xpose.msra.mxu0 0.0
    %2148 = vmatprep.subr.mxu0 0.0
    %2149 = vmatpush2.xpose.msra.mxu0 0.0
    %2150 = vmatprep.subr.mxu0 0.0
    %2151 = vmatpush2.xpose.msra.mxu0 0.0
    %2152 = vmatprep.subr.mxu0 0.0
    %2153 = vmatpush2.xpose.msra.mxu0 0.0
    %2154 = vmatprep.subr.mxu0 0.0
    %2155 = vmatpush2.xpose.msra.mxu0 0.0
    %2156 = vmatprep.subr.mxu0 0.0
    %2157 = vmatpush2.xpose.msra.mxu0 0.0
    %2158 = vmatprep.subr.mxu0 0.0
    %2159 = vmatpush2.xpose.msra.mxu0 0.0
    %2160 = vmatprep.subr.mxu0 0.0
    %2161 = vmatpush2.xpose.msra.mxu0 0.0
    %2162 = vmatprep.subr.mxu0 0.0
    %2163 = vmatpush2.xpose.msra.mxu0 0.0
    %2164 = vmatprep.subr.mxu0 0.0
    %2165 = vmatpush2.xpose.msra.mxu0 0.0
    %2166 = vmatprep.subr.mxu0 0.0
    %2167 = vmatpush2.xpose.msra.mxu0 0.0
    %2168 = vmatprep.mubr.f32.mxu0 0.0
    %2169 = vmatmul.mubr.f32.gmra.mxu0 %v2096
    %v2170 = vpop.f32.mrf.mxu0
    %v2171 = vadd.f32 %v145, %v2170
    %v2172 = vpop.f32.mrf.mxu0
    %2173 = vmatprep.mubr.f32.mxu0 0.0
    %2174 = vmatmul.mubr.f32.gmra.mxu0 %v2098
    %v2175 = vpop.f32.mrf.mxu0
    %v2176 = vadd.f32 %v146, %v2175
    %v2177 = vpop.f32.mrf.mxu0
    %2178 = vdwg.mxu0
    %v2179 = vsel %vm458, %v2051, 0
    %v2181 = vsel %vm458, %v2053, 0
    %v2183 = vsel %vm458, %v2065, 0
    %v2185 = vsel %vm458, %v2067, 0
    %2187 = vmatprep.subr.mxu0 0.0
    %2188 = vmatpush1.xpose.msra.mxu0 0.0
    %2189 = vmatprep.subr.mxu0 0.0
    %2190 = vmatpush1.xpose.msra.mxu0 0.0
    %2191 = vmatprep.subr.mxu0 0.0
    %2192 = vmatpush1.xpose.msra.mxu0 0.0
    %2193 = vmatprep.subr.mxu0 0.0
    %2194 = vmatpush1.xpose.msra.mxu0 0.0
    %2195 = vmatprep.subr.mxu0 0.0
    %2196 = vmatpush1.xpose.msra.mxu0 0.0
    %2197 = vmatprep.subr.mxu0 0.0
    %2198 = vmatpush1.xpose.msra.mxu0 0.0
    %2199 = vmatprep.subr.mxu0 0.0
    %2200 = vmatpush1.xpose.msra.mxu0 0.0
    %2201 = vmatprep.subr.mxu0 0.0
    %2202 = vmatpush1.xpose.msra.mxu0 0.0
    %2203 = vmatprep.subr.mxu0 0.0
    %2204 = vmatpush1.xpose.msra.mxu0 0.0
    %2205 = vmatprep.subr.mxu0 0.0
    %2206 = vmatpush1.xpose.msra.mxu0 0.0
    %2207 = vmatprep.subr.mxu0 0.0
    %2208 = vmatpush1.xpose.msra.mxu0 0.0
    %2209 = vmatprep.subr.mxu0 0.0
    %2210 = vmatpush1.xpose.msra.mxu0 0.0
    %2211 = vmatprep.subr.mxu0 0.0
    %2212 = vmatpush1.xpose.msra.mxu0 0.0
    %2213 = vmatprep.subr.mxu0 0.0
    %2214 = vmatpush1.xpose.msra.mxu0 0.0
    %2215 = vmatprep.subr.mxu0 0.0
    %2216 = vmatpush1.xpose.msra.mxu0 %v2185
    %2217 = vmatprep.subr.mxu0 0.0
    %2218 = vmatpush1.xpose.msra.mxu0 %v2183
    %2219 = vmatprep.subr.mxu0 0.0
    %2220 = vmatpush2.xpose.msra.mxu0 0.0
    %2221 = vmatprep.subr.mxu0 0.0
    %2222 = vmatpush2.xpose.msra.mxu0 0.0
    %2223 = vmatprep.subr.mxu0 0.0
    %2224 = vmatpush2.xpose.msra.mxu0 0.0
    %2225 = vmatprep.subr.mxu0 0.0
    %2226 = vmatpush2.xpose.msra.mxu0 0.0
    %2227 = vmatprep.subr.mxu0 0.0
    %2228 = vmatpush2.xpose.msra.mxu0 0.0
    %2229 = vmatprep.subr.mxu0 0.0
    %2230 = vmatpush2.xpose.msra.mxu0 0.0
    %2231 = vmatprep.subr.mxu0 0.0
    %2232 = vmatpush2.xpose.msra.mxu0 0.0
    %2233 = vmatprep.subr.mxu0 0.0
    %2234 = vmatpush2.xpose.msra.mxu0 0.0
    %2235 = vmatprep.subr.mxu0 0.0
    %2236 = vmatpush2.xpose.msra.mxu0 0.0
    %2237 = vmatprep.subr.mxu0 0.0
    %2238 = vmatpush2.xpose.msra.mxu0 0.0
    %2239 = vmatprep.subr.mxu0 0.0
    %2240 = vmatpush2.xpose.msra.mxu0 0.0
    %2241 = vmatprep.subr.mxu0 0.0
    %2242 = vmatpush2.xpose.msra.mxu0 0.0
    %2243 = vmatprep.subr.mxu0 0.0
    %2244 = vmatpush2.xpose.msra.mxu0 0.0
    %2245 = vmatprep.subr.mxu0 0.0
    %2246 = vmatpush2.xpose.msra.mxu0 0.0
    %2247 = vmatprep.subr.mxu0 0.0
    %2248 = vmatpush2.xpose.msra.mxu0 0.0
    %2249 = vmatprep.subr.mxu0 0.0
    %2250 = vmatpush2.xpose.msra.mxu0 0.0
    %2251 = vmatprep.mubr.f32.mxu0 0.0
    %2252 = vmatmul.mubr.f32.gmra.mxu0 %v2179
    %v2253 = vpop.f32.mrf.mxu0
    %v2254 = vadd.f32 %v145, %v2253
    %v2255 = vpop.f32.mrf.mxu0
    %2256 = vmatprep.mubr.f32.mxu0 0.0
    %2257 = vmatmul.mubr.f32.gmra.mxu0 %v2181
    %v2258 = vpop.f32.mrf.mxu0
    %v2259 = vadd.f32 %v146, %v2258
    %v2260 = vpop.f32.mrf.mxu0
    %2261 = vdwg.mxu0
    %v2262 = vsel %vm458, %v2055, 0
    %v2264 = vsel %vm458, %v2057, 0
    %v2266 = vsel %vm458, %v2069, 0
    %v2268 = vsel %vm458, %v2071, 0
    %2270 = vmatprep.subr.mxu0 0.0
    %2271 = vmatpush1.xpose.msra.mxu0 0.0
    %2272 = vmatprep.subr.mxu0 0.0
    %2273 = vmatpush1.xpose.msra.mxu0 0.0
    %2274 = vmatprep.subr.mxu0 0.0
    %2275 = vmatpush1.xpose.msra.mxu0 0.0
    %2276 = vmatprep.subr.mxu0 0.0
    %2277 = vmatpush1.xpose.msra.mxu0 0.0
    %2278 = vmatprep.subr.mxu0 0.0
    %2279 = vmatpush1.xpose.msra.mxu0 0.0
    %2280 = vmatprep.subr.mxu0 0.0
    %2281 = vmatpush1.xpose.msra.mxu0 0.0
    %2282 = vmatprep.subr.mxu0 0.0
    %2283 = vmatpush1.xpose.msra.mxu0 0.0
    %2284 = vmatprep.subr.mxu0 0.0
    %2285 = vmatpush1.xpose.msra.mxu0 0.0
    %2286 = vmatprep.subr.mxu0 0.0
    %2287 = vmatpush1.xpose.msra.mxu0 0.0
    %2288 = vmatprep.subr.mxu0 0.0
    %2289 = vmatpush1.xpose.msra.mxu0 0.0
    %2290 = vmatprep.subr.mxu0 0.0
    %2291 = vmatpush1.xpose.msra.mxu0 0.0
    %2292 = vmatprep.subr.mxu0 0.0
    %2293 = vmatpush1.xpose.msra.mxu0 0.0
    %2294 = vmatprep.subr.mxu0 0.0
    %2295 = vmatpush1.xpose.msra.mxu0 0.0
    %2296 = vmatprep.subr.mxu0 0.0
    %2297 = vmatpush1.xpose.msra.mxu0 0.0
    %2298 = vmatprep.subr.mxu0 0.0
    %2299 = vmatpush1.xpose.msra.mxu0 %v2268
    %2300 = vmatprep.subr.mxu0 0.0
    %2301 = vmatpush1.xpose.msra.mxu0 %v2266
    %2302 = vmatprep.subr.mxu0 0.0
    %2303 = vmatpush2.xpose.msra.mxu0 0.0
    %2304 = vmatprep.subr.mxu0 0.0
    %2305 = vmatpush2.xpose.msra.mxu0 0.0
    %2306 = vmatprep.subr.mxu0 0.0
    %2307 = vmatpush2.xpose.msra.mxu0 0.0
    %2308 = vmatprep.subr.mxu0 0.0
    %2309 = vmatpush2.xpose.msra.mxu0 0.0
    %2310 = vmatprep.subr.mxu0 0.0
    %2311 = vmatpush2.xpose.msra.mxu0 0.0
    %2312 = vmatprep.subr.mxu0 0.0
    %2313 = vmatpush2.xpose.msra.mxu0 0.0
    %2314 = vmatprep.subr.mxu0 0.0
    %2315 = vmatpush2.xpose.msra.mxu0 0.0
    %2316 = vmatprep.subr.mxu0 0.0
    %2317 = vmatpush2.xpose.msra.mxu0 0.0
    %2318 = vmatprep.subr.mxu0 0.0
    %2319 = vmatpush2.xpose.msra.mxu0 0.0
    %2320 = vmatprep.subr.mxu0 0.0
    %2321 = vmatpush2.xpose.msra.mxu0 0.0
    %2322 = vmatprep.subr.mxu0 0.0
    %2323 = vmatpush2.xpose.msra.mxu0 0.0
    %2324 = vmatprep.subr.mxu0 0.0
    %2325 = vmatpush2.xpose.msra.mxu0 0.0
    %2326 = vmatprep.subr.mxu0 0.0
    %2327 = vmatpush2.xpose.msra.mxu0 0.0
    %2328 = vmatprep.subr.mxu0 0.0
    %2329 = vmatpush2.xpose.msra.mxu0 0.0
    %2330 = vmatprep.subr.mxu0 0.0
    %2331 = vmatpush2.xpose.msra.mxu0 0.0
    %2332 = vmatprep.subr.mxu0 0.0
    %2333 = vmatpush2.xpose.msra.mxu0 0.0
    %2334 = vmatprep.mubr.f32.mxu0 0.0
    %2335 = vmatmul.mubr.f32.gmra.mxu0 %v2262
    %v2336 = vpop.f32.mrf.mxu0
    %v2337 = vadd.f32 %v145, %v2336
    %v2338 = vpop.f32.mrf.mxu0
    %2339 = vmatprep.mubr.f32.mxu0 0.0
    %2340 = vmatmul.mubr.f32.gmra.mxu0 %v2264
    %v2341 = vpop.f32.mrf.mxu0
    %v2342 = vadd.f32 %v146, %v2341
    %v2343 = vpop.f32.mrf.mxu0
    %2344 = vdwg.mxu0
    %v2345 = vsel %vm458, %v2059, 0
    %v2347 = vsel %vm458, %v2061, 0
    %v2349 = vsel %vm458, %v2073, 0
    %v2351 = vsel %vm458, %v2075, 0
    %2353 = vmatprep.subr.mxu0 0.0
    %2354 = vmatpush1.xpose.msra.mxu0 0.0
    %2355 = vmatprep.subr.mxu0 0.0
    %2356 = vmatpush1.xpose.msra.mxu0 0.0
    %2357 = vmatprep.subr.mxu0 0.0
    %2358 = vmatpush1.xpose.msra.mxu0 0.0
    %2359 = vmatprep.subr.mxu0 0.0
    %2360 = vmatpush1.xpose.msra.mxu0 0.0
    %2361 = vmatprep.subr.mxu0 0.0
    %2362 = vmatpush1.xpose.msra.mxu0 0.0
    %2363 = vmatprep.subr.mxu0 0.0
    %2364 = vmatpush1.xpose.msra.mxu0 0.0
    %2365 = vmatprep.subr.mxu0 0.0
    %2366 = vmatpush1.xpose.msra.mxu0 0.0
    %2367 = vmatprep.subr.mxu0 0.0
    %2368 = vmatpush1.xpose.msra.mxu0 0.0
    %2369 = vmatprep.subr.mxu0 0.0
    %2370 = vmatpush1.xpose.msra.mxu0 0.0
    %2371 = vmatprep.subr.mxu0 0.0
    %2372 = vmatpush1.xpose.msra.mxu0 0.0
    %2373 = vmatprep.subr.mxu0 0.0
    %2374 = vmatpush1.xpose.msra.mxu0 0.0
    %2375 = vmatprep.subr.mxu0 0.0
    %2376 = vmatpush1.xpose.msra.mxu0 0.0
    %2377 = vmatprep.subr.mxu0 0.0
    %2378 = vmatpush1.xpose.msra.mxu0 0.0
    %2379 = vmatprep.subr.mxu0 0.0
    %2380 = vmatpush1.xpose.msra.mxu0 0.0
    %2381 = vmatprep.subr.mxu0 0.0
    %2382 = vmatpush1.xpose.msra.mxu0 %v2351
    %2383 = vmatprep.subr.mxu0 0.0
    %2384 = vmatpush1.xpose.msra.mxu0 %v2349
    %2385 = vmatprep.subr.mxu0 0.0
    %2386 = vmatpush2.xpose.msra.mxu0 0.0
    %2387 = vmatprep.subr.mxu0 0.0
    %2388 = vmatpush2.xpose.msra.mxu0 0.0
    %2389 = vmatprep.subr.mxu0 0.0
    %2390 = vmatpush2.xpose.msra.mxu0 0.0
    %2391 = vmatprep.subr.mxu0 0.0
    %2392 = vmatpush2.xpose.msra.mxu0 0.0
    %2393 = vmatprep.subr.mxu0 0.0
    %2394 = vmatpush2.xpose.msra.mxu0 0.0
    %2395 = vmatprep.subr.mxu0 0.0
    %2396 = vmatpush2.xpose.msra.mxu0 0.0
    %2397 = vmatprep.subr.mxu0 0.0
    %2398 = vmatpush2.xpose.msra.mxu0 0.0
    %2399 = vmatprep.subr.mxu0 0.0
    %2400 = vmatpush2.xpose.msra.mxu0 0.0
    %2401 = vmatprep.subr.mxu0 0.0
    %2402 = vmatpush2.xpose.msra.mxu0 0.0
    %2403 = vmatprep.subr.mxu0 0.0
    %2404 = vmatpush2.xpose.msra.mxu0 0.0
    %2405 = vmatprep.subr.mxu0 0.0
    %2406 = vmatpush2.xpose.msra.mxu0 0.0
    %2407 = vmatprep.subr.mxu0 0.0
    %2408 = vmatpush2.xpose.msra.mxu0 0.0
    %2409 = vmatprep.subr.mxu0 0.0
    %2410 = vmatpush2.xpose.msra.mxu0 0.0
    %2411 = vmatprep.subr.mxu0 0.0
    %2412 = vmatpush2.xpose.msra.mxu0 0.0
    %2413 = vmatprep.subr.mxu0 0.0
    %2414 = vmatpush2.xpose.msra.mxu0 0.0
    %2415 = vmatprep.subr.mxu0 0.0
    %2416 = vmatpush2.xpose.msra.mxu0 0.0
    %2417 = vmatprep.mubr.f32.mxu0 0.0
    %2418 = vmatmul.mubr.f32.gmra.mxu0 %v2345
    %v2419 = vpop.f32.mrf.mxu0
    %v2420 = vadd.f32 %v145, %v2419
    %v2421 = vpop.f32.mrf.mxu0
    %2422 = vmatprep.mubr.f32.mxu0 0.0
    %2423 = vmatmul.mubr.f32.gmra.mxu0 %v2347
    %v2424 = vpop.f32.mrf.mxu0
    %v2425 = vadd.f32 %v146, %v2424
    %v2426 = vpop.f32.mrf.mxu0
    %2427 = vdwg.mxu0
    %v2428 = vsel %vm791, %v2171, -inf
    %2429 = vmax.xlane.f32.xlu0 %v2428
    %v2430 = vpop.xlane.xlu0 %2429
    %v2431 = vsel %vm791, %v2176, -inf
    %2432 = vmax.xlane.f32.xlu0 %v2431
    %v2433 = vpop.xlane.xlu0 %2432
    %v2434 = vsel %vm791, %v2254, -inf
    %2435 = vmax.xlane.f32.xlu0 %v2434
    %v2436 = vpop.xlane.xlu0 %2435
    %v2437 = vsel %vm791, %v2259, -inf
    %2438 = vmax.xlane.f32.xlu0 %v2437
    %v2439 = vpop.xlane.xlu0 %2438
    %v2440 = vsel %vm791, %v2337, -inf
    %2441 = vmax.xlane.f32.xlu0 %v2440
    %v2442 = vpop.xlane.xlu0 %2441
    %v2443 = vsel %vm791, %v2342, -inf
    %2444 = vmax.xlane.f32.xlu0 %v2443
    %v2445 = vpop.xlane.xlu0 %2444
    %v2446 = vsel %vm791, %v2420, -inf
    %2447 = vmax.xlane.f32.xlu0 %v2446
    %v2448 = vpop.xlane.xlu0 %2447
    %v2449 = vsel %vm791, %v2425, -inf
    %2450 = vmax.xlane.f32.xlu0 %v2449
    %v2451 = vpop.xlane.xlu0 %2450
    %v2452 = vsub.f32 %v2171, %v2430
    %v2453 = vsub.f32 %v2176, %v2433
    %v2454 = vsub.f32 %v2254, %v2436
    %v2455 = vsub.f32 %v2259, %v2439
    %v2456 = vsub.f32 %v2337, %v2442
    %v2457 = vsub.f32 %v2342, %v2445
    %v2458 = vsub.f32 %v2420, %v2448
    %v2459 = vsub.f32 %v2425, %v2451
    %v2460 = vmul.f32 %v2452, 1.442695
    %v2461 = vpow.pop %v2460
    %v2462 = vmul.f32 %v2453, 1.442695
    %v2463 = vpow.pop %v2462
    %v2464 = vmul.f32 %v2454, 1.442695
    %v2465 = vpow.pop %v2464
    %v2466 = vmul.f32 %v2455, 1.442695
    %v2467 = vpow.pop %v2466
    %v2468 = vmul.f32 %v2456, 1.442695
    %v2469 = vpow.pop %v2468
    %v2470 = vmul.f32 %v2457, 1.442695
    %v2471 = vpow.pop %v2470
    %v2472 = vmul.f32 %v2458, 1.442695
    %v2473 = vpow.pop %v2472
    %v2474 = vmul.f32 %v2459, 1.442695
    %v2475 = vpow.pop %v2474
    %v2476 = vsel %vm791, %v2461, 0.0
    %2477 = vadd.xlane.f32.xlu0 %v2476
    %v2478 = vpop.xlane.xlu0 %2477
    %v2479 = vsel %vm791, %v2463, 0.0
    %2480 = vadd.xlane.f32.xlu0 %v2479
    %v2481 = vpop.xlane.xlu0 %2480
    %v2482 = vsel %vm791, %v2465, 0.0
    %2483 = vadd.xlane.f32.xlu0 %v2482
    %v2484 = vpop.xlane.xlu0 %2483
    %v2485 = vsel %vm791, %v2467, 0.0
    %2486 = vadd.xlane.f32.xlu0 %v2485
    %v2487 = vpop.xlane.xlu0 %2486
    %v2488 = vsel %vm791, %v2469, 0.0
    %2489 = vadd.xlane.f32.xlu0 %v2488
    %v2490 = vpop.xlane.xlu0 %2489
    %v2491 = vsel %vm791, %v2471, 0.0
    %2492 = vadd.xlane.f32.xlu0 %v2491
    %v2493 = vpop.xlane.xlu0 %2492
    %v2494 = vsel %vm791, %v2473, 0.0
    %2495 = vadd.xlane.f32.xlu0 %v2494
    %v2496 = vpop.xlane.xlu0 %2495
    %v2497 = vsel %vm791, %v2475, 0.0
    %2498 = vadd.xlane.f32.xlu0 %v2497
    %v2499 = vpop.xlane.xlu0 %2498
    %v2500 = vrcp.pop %v2478
    %v2501 = vrcp.pop %v2481
    %v2502 = vrcp.pop %v2484
    %v2503 = vrcp.pop %v2487
    %v2504 = vrcp.pop %v2490
    %v2505 = vrcp.pop %v2493
    %v2506 = vrcp.pop %v2496
    %v2507 = vrcp.pop %v2499
    %v2508 = vmul.f32 %v2461, %v2500
    %v2509 = vmul.f32 %v2463, %v2501
    %v2510 = vmul.f32 %v2465, %v2502
    %v2511 = vmul.f32 %v2467, %v2503
    %v2512 = vmul.f32 %v2469, %v2504
    %v2513 = vmul.f32 %v2471, %v2505
    %v2514 = vmul.f32 %v2473, %v2506
    %v2515 = vmul.f32 %v2475, %v2507
    %v2517 = vsel %vm791, %v2508, 0
    %v2520 = vsel %vm791, %v2509, 0
    %2522 = vmatprep.subr.mxu0 0.0
    %2523 = vmatpush1.msra.mxu0 0.0
    %2524 = vmatprep.subr.mxu0 0.0
    %2525 = vmatpush1.msra.mxu0 0.0
    %2526 = vmatprep.subr.mxu0 0.0
    %2527 = vmatpush1.msra.mxu0 0.0
    %2528 = vmatprep.subr.mxu0 0.0
    %2529 = vmatpush1.msra.mxu0 0.0
    %2530 = vmatprep.subr.mxu0 0.0
    %2531 = vmatpush1.msra.mxu0 0.0
    %2532 = vmatprep.subr.mxu0 0.0
    %2533 = vmatpush1.msra.mxu0 0.0
    %2534 = vmatprep.subr.mxu0 0.0
    %2535 = vmatpush1.msra.mxu0 0.0
    %2536 = vmatprep.subr.mxu0 0.0
    %2537 = vmatpush1.msra.mxu0 0.0
    %2538 = vmatprep.subr.mxu0 0.0
    %2539 = vmatpush1.msra.mxu0 0.0
    %2540 = vmatprep.subr.mxu0 0.0
    %2541 = vmatpush1.msra.mxu0 0.0
    %2542 = vmatprep.subr.mxu0 0.0
    %2543 = vmatpush1.msra.mxu0 0.0
    %2544 = vmatprep.subr.mxu0 0.0
    %2545 = vmatpush1.msra.mxu0 0.0
    %2546 = vmatprep.subr.mxu0 0.0
    %2547 = vmatpush1.msra.mxu0 0.0
    %2548 = vmatprep.subr.mxu0 0.0
    %2549 = vmatpush1.msra.mxu0 0.0
    %2550 = vmatprep.subr.mxu0 0.0
    %2551 = vmatpush1.msra.mxu0 %v2045
    %2552 = vmatprep.subr.mxu0 0.0
    %2553 = vmatpush1.msra.mxu0 %v2042
    %2554 = vmatprep.subr.mxu0 0.0
    %2555 = vmatpush2.msra.mxu0 0.0
    %2556 = vmatprep.subr.mxu0 0.0
    %2557 = vmatpush2.msra.mxu0 0.0
    %2558 = vmatprep.subr.mxu0 0.0
    %2559 = vmatpush2.msra.mxu0 0.0
    %2560 = vmatprep.subr.mxu0 0.0
    %2561 = vmatpush2.msra.mxu0 0.0
    %2562 = vmatprep.subr.mxu0 0.0
    %2563 = vmatpush2.msra.mxu0 0.0
    %2564 = vmatprep.subr.mxu0 0.0
    %2565 = vmatpush2.msra.mxu0 0.0
    %2566 = vmatprep.subr.mxu0 0.0
    %2567 = vmatpush2.msra.mxu0 0.0
    %2568 = vmatprep.subr.mxu0 0.0
    %2569 = vmatpush2.msra.mxu0 0.0
    %2570 = vmatprep.subr.mxu0 0.0
    %2571 = vmatpush2.msra.mxu0 0.0
    %2572 = vmatprep.subr.mxu0 0.0
    %2573 = vmatpush2.msra.mxu0 0.0
    %2574 = vmatprep.subr.mxu0 0.0
    %2575 = vmatpush2.msra.mxu0 0.0
    %2576 = vmatprep.subr.mxu0 0.0
    %2577 = vmatpush2.msra.mxu0 0.0
    %2578 = vmatprep.subr.mxu0 0.0
    %2579 = vmatpush2.msra.mxu0 0.0
    %2580 = vmatprep.subr.mxu0 0.0
    %2581 = vmatpush2.msra.mxu0 0.0
    %2582 = vmatprep.subr.mxu0 0.0
    %2583 = vmatpush2.msra.mxu0 0.0
    %2584 = vmatprep.subr.mxu0 0.0
    %2585 = vmatpush2.msra.mxu0 0.0
    %2586 = vmatprep.mubr.f32.mxu0 0.0
    %2587 = vmatmul.mubr.f32.gmra.mxu0 %v2517
    %v2588 = vpop.f32.mrf.mxu0
    %v2589 = vadd.f32 0.0, %v2588
    %v2590 = vpop.f32.mrf.mxu0
    %2591 = vmatprep.mubr.f32.mxu0 0.0
    %2592 = vmatmul.mubr.f32.gmra.mxu0 %v2520
    %v2593 = vpop.f32.mrf.mxu0
    %v2594 = vadd.f32 0.0, %v2593
    %v2595 = vpop.f32.mrf.mxu0
    %2596 = vdwg.mxu0
    %v2598 = vsel %vm791, %v2510, 0
    %v2601 = vsel %vm791, %v2511, 0
    %2603 = vmatprep.subr.mxu0 0.0
    %2604 = vmatpush1.msra.mxu0 0.0
    %2605 = vmatprep.subr.mxu0 0.0
    %2606 = vmatpush1.msra.mxu0 0.0
    %2607 = vmatprep.subr.mxu0 0.0
    %2608 = vmatpush1.msra.mxu0 0.0
    %2609 = vmatprep.subr.mxu0 0.0
    %2610 = vmatpush1.msra.mxu0 0.0
    %2611 = vmatprep.subr.mxu0 0.0
    %2612 = vmatpush1.msra.mxu0 0.0
    %2613 = vmatprep.subr.mxu0 0.0
    %2614 = vmatpush1.msra.mxu0 0.0
    %2615 = vmatprep.subr.mxu0 0.0
    %2616 = vmatpush1.msra.mxu0 0.0
    %2617 = vmatprep.subr.mxu0 0.0
    %2618 = vmatpush1.msra.mxu0 0.0
    %2619 = vmatprep.subr.mxu0 0.0
    %2620 = vmatpush1.msra.mxu0 0.0
    %2621 = vmatprep.subr.mxu0 0.0
    %2622 = vmatpush1.msra.mxu0 0.0
    %2623 = vmatprep.subr.mxu0 0.0
    %2624 = vmatpush1.msra.mxu0 0.0
    %2625 = vmatprep.subr.mxu0 0.0
    %2626 = vmatpush1.msra.mxu0 0.0
    %2627 = vmatprep.subr.mxu0 0.0
    %2628 = vmatpush1.msra.mxu0 0.0
    %2629 = vmatprep.subr.mxu0 0.0
    %2630 = vmatpush1.msra.mxu0 0.0
    %2631 = vmatprep.subr.mxu0 0.0
    %2632 = vmatpush1.msra.mxu0 %v2081
    %2633 = vmatprep.subr.mxu0 0.0
    %2634 = vmatpush1.msra.mxu0 %v2079
    %2635 = vmatprep.subr.mxu0 0.0
    %2636 = vmatpush2.msra.mxu0 0.0
    %2637 = vmatprep.subr.mxu0 0.0
    %2638 = vmatpush2.msra.mxu0 0.0
    %2639 = vmatprep.subr.mxu0 0.0
    %2640 = vmatpush2.msra.mxu0 0.0
    %2641 = vmatprep.subr.mxu0 0.0
    %2642 = vmatpush2.msra.mxu0 0.0
    %2643 = vmatprep.subr.mxu0 0.0
    %2644 = vmatpush2.msra.mxu0 0.0
    %2645 = vmatprep.subr.mxu0 0.0
    %2646 = vmatpush2.msra.mxu0 0.0
    %2647 = vmatprep.subr.mxu0 0.0
    %2648 = vmatpush2.msra.mxu0 0.0
    %2649 = vmatprep.subr.mxu0 0.0
    %2650 = vmatpush2.msra.mxu0 0.0
    %2651 = vmatprep.subr.mxu0 0.0
    %2652 = vmatpush2.msra.mxu0 0.0
    %2653 = vmatprep.subr.mxu0 0.0
    %2654 = vmatpush2.msra.mxu0 0.0
    %2655 = vmatprep.subr.mxu0 0.0
    %2656 = vmatpush2.msra.mxu0 0.0
    %2657 = vmatprep.subr.mxu0 0.0
    %2658 = vmatpush2.msra.mxu0 0.0
    %2659 = vmatprep.subr.mxu0 0.0
    %2660 = vmatpush2.msra.mxu0 0.0
    %2661 = vmatprep.subr.mxu0 0.0
    %2662 = vmatpush2.msra.mxu0 0.0
    %2663 = vmatprep.subr.mxu0 0.0
    %2664 = vmatpush2.msra.mxu0 0.0
    %2665 = vmatprep.subr.mxu0 0.0
    %2666 = vmatpush2.msra.mxu0 0.0
    %2667 = vmatprep.mubr.f32.mxu0 0.0
    %2668 = vmatmul.mubr.f32.gmra.mxu0 %v2598
    %v2669 = vpop.f32.mrf.mxu0
    %v2670 = vadd.f32 0.0, %v2669
    %v2671 = vpop.f32.mrf.mxu0
    %2672 = vmatprep.mubr.f32.mxu0 0.0
    %2673 = vmatmul.mubr.f32.gmra.mxu0 %v2601
    %v2674 = vpop.f32.mrf.mxu0
    %v2675 = vadd.f32 0.0, %v2674
    %v2676 = vpop.f32.mrf.mxu0
    %2677 = vdwg.mxu0
    %v2679 = vsel %vm791, %v2512, 0
    %v2682 = vsel %vm791, %v2513, 0
    %2684 = vmatprep.subr.mxu0 0.0
    %2685 = vmatpush1.msra.mxu0 0.0
    %2686 = vmatprep.subr.mxu0 0.0
    %2687 = vmatpush1.msra.mxu0 0.0
    %2688 = vmatprep.subr.mxu0 0.0
    %2689 = vmatpush1.msra.mxu0 0.0
    %2690 = vmatprep.subr.mxu0 0.0
    %2691 = vmatpush1.msra.mxu0 0.0
    %2692 = vmatprep.subr.mxu0 0.0
    %2693 = vmatpush1.msra.mxu0 0.0
    %2694 = vmatprep.subr.mxu0 0.0
    %2695 = vmatpush1.msra.mxu0 0.0
    %2696 = vmatprep.subr.mxu0 0.0
    %2697 = vmatpush1.msra.mxu0 0.0
    %2698 = vmatprep.subr.mxu0 0.0
    %2699 = vmatpush1.msra.mxu0 0.0
    %2700 = vmatprep.subr.mxu0 0.0
    %2701 = vmatpush1.msra.mxu0 0.0
    %2702 = vmatprep.subr.mxu0 0.0
    %2703 = vmatpush1.msra.mxu0 0.0
    %2704 = vmatprep.subr.mxu0 0.0
    %2705 = vmatpush1.msra.mxu0 0.0
    %2706 = vmatprep.subr.mxu0 0.0
    %2707 = vmatpush1.msra.mxu0 0.0
    %2708 = vmatprep.subr.mxu0 0.0
    %2709 = vmatpush1.msra.mxu0 0.0
    %2710 = vmatprep.subr.mxu0 0.0
    %2711 = vmatpush1.msra.mxu0 0.0
    %2712 = vmatprep.subr.mxu0 0.0
    %2713 = vmatpush1.msra.mxu0 %v2087
    %2714 = vmatprep.subr.mxu0 0.0
    %2715 = vmatpush1.msra.mxu0 %v2085
    %2716 = vmatprep.subr.mxu0 0.0
    %2717 = vmatpush2.msra.mxu0 0.0
    %2718 = vmatprep.subr.mxu0 0.0
    %2719 = vmatpush2.msra.mxu0 0.0
    %2720 = vmatprep.subr.mxu0 0.0
    %2721 = vmatpush2.msra.mxu0 0.0
    %2722 = vmatprep.subr.mxu0 0.0
    %2723 = vmatpush2.msra.mxu0 0.0
    %2724 = vmatprep.subr.mxu0 0.0
    %2725 = vmatpush2.msra.mxu0 0.0
    %2726 = vmatprep.subr.mxu0 0.0
    %2727 = vmatpush2.msra.mxu0 0.0
    %2728 = vmatprep.subr.mxu0 0.0
    %2729 = vmatpush2.msra.mxu0 0.0
    %2730 = vmatprep.subr.mxu0 0.0
    %2731 = vmatpush2.msra.mxu0 0.0
    %2732 = vmatprep.subr.mxu0 0.0
    %2733 = vmatpush2.msra.mxu0 0.0
    %2734 = vmatprep.subr.mxu0 0.0
    %2735 = vmatpush2.msra.mxu0 0.0
    %2736 = vmatprep.subr.mxu0 0.0
    %2737 = vmatpush2.msra.mxu0 0.0
    %2738 = vmatprep.subr.mxu0 0.0
    %2739 = vmatpush2.msra.mxu0 0.0
    %2740 = vmatprep.subr.mxu0 0.0
    %2741 = vmatpush2.msra.mxu0 0.0
    %2742 = vmatprep.subr.mxu0 0.0
    %2743 = vmatpush2.msra.mxu0 0.0
    %2744 = vmatprep.subr.mxu0 0.0
    %2745 = vmatpush2.msra.mxu0 0.0
    %2746 = vmatprep.subr.mxu0 0.0
    %2747 = vmatpush2.msra.mxu0 0.0
    %2748 = vmatprep.mubr.f32.mxu0 0.0
    %2749 = vmatmul.mubr.f32.gmra.mxu0 %v2679
    %v2750 = vpop.f32.mrf.mxu0
    %v2751 = vadd.f32 0.0, %v2750
    %v2752 = vpop.f32.mrf.mxu0
    %2753 = vmatprep.mubr.f32.mxu0 0.0
    %2754 = vmatmul.mubr.f32.gmra.mxu0 %v2682
    %v2755 = vpop.f32.mrf.mxu0
    %v2756 = vadd.f32 0.0, %v2755
    %v2757 = vpop.f32.mrf.mxu0
    %2758 = vdwg.mxu0
    %v2760 = vsel %vm791, %v2514, 0
    %v2763 = vsel %vm791, %v2515, 0
    %2765 = vmatprep.subr.mxu0 0.0
    %2766 = vmatpush1.msra.mxu0 0.0
    %2767 = vmatprep.subr.mxu0 0.0
    %2768 = vmatpush1.msra.mxu0 0.0
    %2769 = vmatprep.subr.mxu0 0.0
    %2770 = vmatpush1.msra.mxu0 0.0
    %2771 = vmatprep.subr.mxu0 0.0
    %2772 = vmatpush1.msra.mxu0 0.0
    %2773 = vmatprep.subr.mxu0 0.0
    %2774 = vmatpush1.msra.mxu0 0.0
    %2775 = vmatprep.subr.mxu0 0.0
    %2776 = vmatpush1.msra.mxu0 0.0
    %2777 = vmatprep.subr.mxu0 0.0
    %2778 = vmatpush1.msra.mxu0 0.0
    %2779 = vmatprep.subr.mxu0 0.0
    %2780 = vmatpush1.msra.mxu0 0.0
    %2781 = vmatprep.subr.mxu0 0.0
    %2782 = vmatpush1.msra.mxu0 0.0
    %2783 = vmatprep.subr.mxu0 0.0
    %2784 = vmatpush1.msra.mxu0 0.0
    %2785 = vmatprep.subr.mxu0 0.0
    %2786 = vmatpush1.msra.mxu0 0.0
    %2787 = vmatprep.subr.mxu0 0.0
    %2788 = vmatpush1.msra.mxu0 0.0
    %2789 = vmatprep.subr.mxu0 0.0
    %2790 = vmatpush1.msra.mxu0 0.0
    %2791 = vmatprep.subr.mxu0 0.0
    %2792 = vmatpush1.msra.mxu0 0.0
    %2793 = vmatprep.subr.mxu0 0.0
    %2794 = vmatpush1.msra.mxu0 %v2093
    %2795 = vmatprep.subr.mxu0 0.0
    %2796 = vmatpush1.msra.mxu0 %v2091
    %2797 = vmatprep.subr.mxu0 0.0
    %2798 = vmatpush2.msra.mxu0 0.0
    %2799 = vmatprep.subr.mxu0 0.0
    %2800 = vmatpush2.msra.mxu0 0.0
    %2801 = vmatprep.subr.mxu0 0.0
    %2802 = vmatpush2.msra.mxu0 0.0
    %2803 = vmatprep.subr.mxu0 0.0
    %2804 = vmatpush2.msra.mxu0 0.0
    %2805 = vmatprep.subr.mxu0 0.0
    %2806 = vmatpush2.msra.mxu0 0.0
    %2807 = vmatprep.subr.mxu0 0.0
    %2808 = vmatpush2.msra.mxu0 0.0
    %2809 = vmatprep.subr.mxu0 0.0
    %2810 = vmatpush2.msra.mxu0 0.0
    %2811 = vmatprep.subr.mxu0 0.0
    %2812 = vmatpush2.msra.mxu0 0.0
    %2813 = vmatprep.subr.mxu0 0.0
    %2814 = vmatpush2.msra.mxu0 0.0
    %2815 = vmatprep.subr.mxu0 0.0
    %2816 = vmatpush2.msra.mxu0 0.0
    %2817 = vmatprep.subr.mxu0 0.0
    %2818 = vmatpush2.msra.mxu0 0.0
    %2819 = vmatprep.subr.mxu0 0.0
    %2820 = vmatpush2.msra.mxu0 0.0
    %2821 = vmatprep.subr.mxu0 0.0
    %2822 = vmatpush2.msra.mxu0 0.0
    %2823 = vmatprep.subr.mxu0 0.0
    %2824 = vmatpush2.msra.mxu0 0.0
    %2825 = vmatprep.subr.mxu0 0.0
    %2826 = vmatpush2.msra.mxu0 0.0
    %2827 = vmatprep.subr.mxu0 0.0
    %2828 = vmatpush2.msra.mxu0 0.0
    %2829 = vmatprep.mubr.f32.mxu0 0.0
    %2830 = vmatmul.mubr.f32.gmra.mxu0 %v2760
    %v2831 = vpop.f32.mrf.mxu0
    %v2832 = vadd.f32 0.0, %v2831
    %v2833 = vpop.f32.mrf.mxu0
    %2834 = vmatprep.mubr.f32.mxu0 0.0
    %2835 = vmatmul.mubr.f32.gmra.mxu0 %v2763
    %v2836 = vpop.f32.mrf.mxu0
    %v2837 = vadd.f32 0.0, %v2836
    %v2838 = vpop.f32.mrf.mxu0
    %2839 = vdwg.mxu0
    %2842 = vrot.lane.b32.xlu0 %v2670, 32
    %v2843 = vpop.permute.xlu0 %2842
    %2844 = vrot.lane.b32.xlu0 %v2675, 32
    %v2845 = vpop.permute.xlu0 %2844
    %2850 = vrot.lane.b32.xlu0 %v2751, 64
    %v2851 = vpop.permute.xlu0 %2850
    %2852 = vrot.lane.b32.xlu0 %v2756, 64
    %v2853 = vpop.permute.xlu0 %2852
    %2858 = vrot.lane.b32.xlu0 %v2832, 96
    %v2859 = vpop.permute.xlu0 %2858
    %2860 = vrot.lane.b32.xlu0 %v2837, 96
    %v2861 = vpop.permute.xlu0 %2860
    %v2864 = vsel %vm458, %v2589, %v2843
    %v2865 = vsel %vm458, %v2594, %v2845
    %v2866 = vsel %vm1230, %v2864, %v2851
    %v2867 = vsel %vm1230, %v2865, %v2853
    %v2868 = vsel %vm1233, %v2866, %v2859
    %v2869 = vsel %vm1233, %v2867, %v2861
    %v2870 = vpack.c.bf16 %v2869, %v2868
    %s2871 = scalar_lea.vmem [#allocation10], 64
    %v2872 = vld [vmem:[%s2871] sm:$0xf]
    %v2873 = vld [vmem:[%s2871 + $0x4] sm:$0xf]
    %v2874 = vld [vmem:[%s2871 + $0x8] sm:$0xf]
    %v2875 = vld [vmem:[%s2871 + $0xc] sm:$0xf]
    %v2876 = vld [vmem:[%s2871 + $0x10] sm:$0xf]
    %v2877 = vld [vmem:[%s2871 + $0x14] sm:$0xf]
    %v2878 = vld [vmem:[%s2871 + $0x18] sm:$0xf]
    %v2879 = vld [vmem:[%s2871 + $0x1c] sm:$0xf]
    %v2880 = vld [vmem:[%s2871 + $0x20] sm:$0xf]
    %v2881 = vld [vmem:[%s2871 + $0x24] sm:$0xf]
    %v2882 = vld [vmem:[%s2871 + $0x28] sm:$0xf]
    %v2883 = vld [vmem:[%s2871 + $0x2c] sm:$0xf]
    %v2884 = vld [vmem:[%s2871 + $0x30] sm:$0xf]
    %v2885 = vld [vmem:[%s2871 + $0x34] sm:$0xf]
    %v2886 = vld [vmem:[%s2871 + $0x38] sm:$0xf]
    %v2887 = vld [vmem:[%s2871 + $0x3c] sm:$0xf]
    %v2888 = vlaneseq
    %v2889 = vshrl.u32 %v2888, 7
    %v2890 = vsub.s32 0, %v2889
    %v2891 = vrot.slane %v1783, %v2890
    %v2908 = vunpack.c.l.b16 %v2872
    %v2909 = vunpack.c.l.b16 %v2873
    %v2910 = vunpack.c.l.b16 %v2874
    %v2911 = vunpack.c.l.b16 %v2875
    %v2912 = vunpack.c.l.b16 %v2876
    %v2913 = vunpack.c.l.b16 %v2877
    %v2914 = vunpack.c.l.b16 %v2878
    %v2915 = vunpack.c.l.b16 %v2879
    %v2916 = vunpack.c.l.b16 %v2880
    %v2917 = vunpack.c.l.b16 %v2881
    %v2918 = vunpack.c.l.b16 %v2882
    %v2919 = vunpack.c.l.b16 %v2883
    %v2920 = vunpack.c.l.b16 %v2884
    %v2921 = vunpack.c.l.b16 %v2885
    %v2922 = vunpack.c.l.b16 %v2886
    %v2923 = vunpack.c.l.b16 %v2887
    %v2924 = vpack.c.b16 %v2909, %v2908
    %v2925 = vpack.c.b16 %v2911, %v2910
    %v2926 = vpack.c.b16 %v2913, %v2912
    %v2927 = vpack.c.b16 %v2915, %v2914
    %v2928 = vpack.c.b16 %v2917, %v2916
    %v2929 = vpack.c.b16 %v2919, %v2918
    %v2930 = vpack.c.b16 %v2921, %v2920
    %v2931 = vpack.c.b16 %v2923, %v2922
    %2940 = vmatprep.subr.bf16.mxu0 0
    %2941 = vmatpush1.bf16.msra.mxu0 %v2931
    %2942 = vmatprep.subr.bf16.mxu0 0
    %2943 = vmatpush1.bf16.msra.mxu0 %v2930
    %2944 = vmatprep.subr.bf16.mxu0 0
    %2945 = vmatpush1.bf16.msra.mxu0 %v2929
    %2946 = vmatprep.subr.bf16.mxu0 0
    %2947 = vmatpush1.bf16.msra.mxu0 %v2928
    %2948 = vmatprep.subr.bf16.mxu0 0
    %2949 = vmatpush1.bf16.msra.mxu0 %v2927
    %2950 = vmatprep.subr.bf16.mxu0 0
    %2951 = vmatpush1.bf16.msra.mxu0 %v2926
    %2952 = vmatprep.subr.bf16.mxu0 0
    %2953 = vmatpush1.bf16.msra.mxu0 %v2925
    %2954 = vmatprep.subr.bf16.mxu0 0
    %2955 = vmatpush1.bf16.msra.mxu0 %v2924
    %2956 = vmatprep.subr.bf16.mxu0 0
    %2957 = vmatpush2.bf16.msra.mxu0 0
    %2958 = vmatprep.subr.bf16.mxu0 0
    %2959 = vmatpush2.bf16.msra.mxu0 0
    %2960 = vmatprep.subr.bf16.mxu0 0
    %2961 = vmatpush2.bf16.msra.mxu0 0
    %2962 = vmatprep.subr.bf16.mxu0 0
    %2963 = vmatpush2.bf16.msra.mxu0 0
    %2964 = vmatprep.subr.bf16.mxu0 0
    %2965 = vmatpush2.bf16.msra.mxu0 0
    %2966 = vmatprep.subr.bf16.mxu0 0
    %2967 = vmatpush2.bf16.msra.mxu0 0
    %2968 = vmatprep.subr.bf16.mxu0 0
    %2969 = vmatpush2.bf16.msra.mxu0 0
    %2970 = vmatprep.subr.bf16.mxu0 0
    %2971 = vmatpush2.bf16.msra.mxu0 0
    %2972 = vmatprep.mubr.bf16.mxu0 0
    %2973 = vmatmul.mubr.bf16.gmra.mxu0 %v2870
    %v2974 = vpop.f32.mrf.mxu0
    %v2975 = vadd.f32 %v2891, %v2974
    %v2976 = vpop.f32.mrf.mxu0
    %v2977 = vpop.f32.mrf.mxu0
    %v2978 = vadd.f32 %v2891, %v2977
    %v2979 = vpop.f32.mrf.mxu0
    %2980 = vdwg.mxu0
    %v2981 = vadd.f32 %v1780, %v2975
    %v2982 = vadd.f32 %v1781, %v2978
    %2983 = vadd.xlane.f32.xlu0 %v2981
    %v2984 = vpop.xlane.xlu0 %2983
    %2985 = vadd.xlane.f32.xlu0 %v2982
    %v2986 = vpop.xlane.xlu0 %2985
    %v2987 = vmul.f32 %v2984, %v1352
    %v2988 = vmul.f32 %v2986, %v1352
    %v2989 = vsub.f32 %v2981, %v2987
    %v2990 = vsub.f32 %v2982, %v2988
    %v2991 = vmul.f32 %v2989, %v2989
    %v2992 = vmul.f32 %v2990, %v2990
    %2993 = vadd.xlane.f32.xlu0 %v2991
    %v2994 = vpop.xlane.xlu0 %2993
    %2995 = vadd.xlane.f32.xlu0 %v2992
    %v2996 = vpop.xlane.xlu0 %2995
    %v2997 = vmul.f32 %v2994, %v1352
    %v2998 = vmul.f32 %v2996, %v1352
    %v2999 = vadd.f32 %v2997, 1e-12
    %v3000 = vadd.f32 %v2998, 1e-12
    %v3001 = vrsqrt.pop %v2999
    %v3002 = vrsqrt.pop %v3000
    %v3003 = vmul.f32 %v2989, %v3001
    %v3004 = vmul.f32 %v2990, %v3002
    %v3005 = vlaneseq
    %v3006 = vshrl.u32 %v3005, 7
    %v3007 = vsub.s32 1, %v3006
    %v3008 = vrot.slane %v1783, %v3007
    %v3009 = vmul.f32 %v3003, %v3008
    %v3010 = vmul.f32 %v3004, %v3008
    %v3011 = vlaneseq
    %v3012 = vshrl.u32 %v3011, 7
    %v3013 = vsub.s32 2, %v3012
    %v3014 = vrot.slane %v1783, %v3013
    %v3015 = vadd.f32 %v3009, %v3014
    %v3016 = vadd.f32 %v3010, %v3014
    %v3017 = vpack.c.bf16 %v3016, %v3015
    %s3018 = scalar_lea.vmem [#allocation11], 128
    %v3019 = vld [vmem:[%s3018] sm:$0xff]
    %v3020 = vld [vmem:[%s3018 + $0x8] sm:$0xff]
    %v3021 = vld [vmem:[%s3018 + $0x10] sm:$0xff]
    %v3022 = vld [vmem:[%s3018 + $0x18] sm:$0xff]
    %v3023 = vld [vmem:[%s3018 + $0x20] sm:$0xff]
    %v3024 = vld [vmem:[%s3018 + $0x28] sm:$0xff]
    %v3025 = vld [vmem:[%s3018 + $0x30] sm:$0xff]
    %v3026 = vld [vmem:[%s3018 + $0x38] sm:$0xff]
    %v3027 = vld [vmem:[%s3018 + $0x40] sm:$0xff]
    %v3028 = vld [vmem:[%s3018 + $0x48] sm:$0xff]
    %v3029 = vld [vmem:[%s3018 + $0x50] sm:$0xff]
    %v3030 = vld [vmem:[%s3018 + $0x58] sm:$0xff]
    %v3031 = vld [vmem:[%s3018 + $0x60] sm:$0xff]
    %v3032 = vld [vmem:[%s3018 + $0x68] sm:$0xff]
    %v3033 = vld [vmem:[%s3018 + $0x70] sm:$0xff]
    %v3034 = vld [vmem:[%s3018 + $0x78] sm:$0xff]
    %s3035 = scalar_lea.vmem %s6, 2
    %v3036 = vld [vmem:[%s3035] sm:$0x3]
    %v3038 = vlaneseq
    %v3039 = vshrl.u32 %v3038, 7
    %v3040 = vsub.s32 0, %v3039
    %v3041 = vrot.slane %v3036, %v3040
    %v3042 = vlaneseq
    %v3043 = vshrl.u32 %v3042, 7
    %v3044 = vsub.s32 1, %v3043
    %v3045 = vrot.slane %v3036, %v3044
    %v3064 = vunpack.c.l.b16 %v3019
    %v3065 = vunpack.c.h.b16 %v3019
    %v3066 = vunpack.c.l.b16 %v3020
    %v3067 = vunpack.c.h.b16 %v3020
    %v3068 = vunpack.c.l.b16 %v3021
    %v3069 = vunpack.c.h.b16 %v3021
    %v3070 = vunpack.c.l.b16 %v3022
    %v3071 = vunpack.c.h.b16 %v3022
    %v3072 = vunpack.c.l.b16 %v3023
    %v3073 = vunpack.c.h.b16 %v3023
    %v3074 = vunpack.c.l.b16 %v3024
    %v3075 = vunpack.c.h.b16 %v3024
    %v3076 = vunpack.c.l.b16 %v3025
    %v3077 = vunpack.c.h.b16 %v3025
    %v3078 = vunpack.c.l.b16 %v3026
    %v3079 = vunpack.c.h.b16 %v3026
    %v3080 = vunpack.c.l.b16 %v3027
    %v3081 = vunpack.c.h.b16 %v3027
    %v3082 = vunpack.c.l.b16 %v3028
    %v3083 = vunpack.c.h.b16 %v3028
    %v3084 = vunpack.c.l.b16 %v3029
    %v3085 = vunpack.c.h.b16 %v3029
    %v3086 = vunpack.c.l.b16 %v3030
    %v3087 = vunpack.c.h.b16 %v3030
    %v3088 = vunpack.c.l.b16 %v3031
    %v3089 = vunpack.c.h.b16 %v3031
    %v3090 = vunpack.c.l.b16 %v3032
    %v3091 = vunpack.c.h.b16 %v3032
    %v3092 = vunpack.c.l.b16 %v3033
    %v3093 = vunpack.c.h.b16 %v3033
    %v3094 = vunpack.c.l.b16 %v3034
    %v3095 = vunpack.c.h.b16 %v3034
    %v3096 = vpack.c.b16 %v3066, %v3064
    %v3097 = vpack.c.b16 %v3067, %v3065
    %v3098 = vpack.c.b16 %v3070, %v3068
    %v3099 = vpack.c.b16 %v3071, %v3069
    %v3100 = vpack.c.b16 %v3074, %v3072
    %v3101 = vpack.c.b16 %v3075, %v3073
    %v3102 = vpack.c.b16 %v3078, %v3076
    %v3103 = vpack.c.b16 %v3079, %v3077
    %v3104 = vpack.c.b16 %v3082, %v3080
    %v3105 = vpack.c.b16 %v3083, %v3081
    %v3106 = vpack.c.b16 %v3086, %v3084
    %v3107 = vpack.c.b16 %v3087, %v3085
    %v3108 = vpack.c.b16 %v3090, %v3088
    %v3109 = vpack.c.b16 %v3091, %v3089
    %v3110 = vpack.c.b16 %v3094, %v3092
    %v3111 = vpack.c.b16 %v3095, %v3093
    %3128 = vmatprep.subr.bf16.mxu0 %v3111
    %3129 = vmatpush1.bf16.msra.mxu0 %v3110
    %3130 = vmatprep.subr.bf16.mxu0 %v3109
    %3131 = vmatpush1.bf16.msra.mxu0 %v3108
    %3132 = vmatprep.subr.bf16.mxu0 %v3107
    %3133 = vmatpush1.bf16.msra.mxu0 %v3106
    %3134 = vmatprep.subr.bf16.mxu0 %v3105
    %3135 = vmatpush1.bf16.msra.mxu0 %v3104
    %3136 = vmatprep.subr.bf16.mxu0 %v3103
    %3137 = vmatpush1.bf16.msra.mxu0 %v3102
    %3138 = vmatprep.subr.bf16.mxu0 %v3101
    %3139 = vmatpush1.bf16.msra.mxu0 %v3100
    %3140 = vmatprep.subr.bf16.mxu0 %v3099
    %3141 = vmatpush1.bf16.msra.mxu0 %v3098
    %3142 = vmatprep.subr.bf16.mxu0 %v3097
    %3143 = vmatpush1.bf16.msra.mxu0 %v3096
    %3144 = vmatprep.subr.bf16.mxu0 0
    %3145 = vmatpush2.bf16.msra.mxu0 0
    %3146 = vmatprep.subr.bf16.mxu0 0
    %3147 = vmatpush2.bf16.msra.mxu0 0
    %3148 = vmatprep.subr.bf16.mxu0 0
    %3149 = vmatpush2.bf16.msra.mxu0 0
    %3150 = vmatprep.subr.bf16.mxu0 0
    %3151 = vmatpush2.bf16.msra.mxu0 0
    %3152 = vmatprep.subr.bf16.mxu0 0
    %3153 = vmatpush2.bf16.msra.mxu0 0
    %3154 = vmatprep.subr.bf16.mxu0 0
    %3155 = vmatpush2.bf16.msra.mxu0 0
    %3156 = vmatprep.subr.bf16.mxu0 0
    %3157 = vmatpush2.bf16.msra.mxu0 0
    %3158 = vmatprep.subr.bf16.mxu0 0
    %3159 = vmatpush2.bf16.msra.mxu0 0
    %3160 = vmatprep.mubr.bf16.mxu0 0
    %3161 = vmatmul.mubr.bf16.gmra.mxu0 %v3017
    %v3162 = vpop.f32.mrf.mxu0
    %v3163 = vadd.f32 %v3041, %v3162
    %v3164 = vpop.f32.mrf.mxu0
    %v3165 = vadd.f32 %v3045, %v3164
    %v3166 = vpop.f32.mrf.mxu0
    %v3167 = vadd.f32 %v3041, %v3166
    %v3168 = vpop.f32.mrf.mxu0
    %v3169 = vadd.f32 %v3045, %v3168
    %3170 = vdwg.mxu0
    %v3171 = vmul.f32 %v3163, %v3163
    %v3172 = vmul.f32 %v3165, %v3165
    %v3173 = vmul.f32 %v3167, %v3167
    %v3174 = vmul.f32 %v3169, %v3169
    %v3175 = vmul.f32 %v3163, %v3171
    %v3176 = vmul.f32 %v3165, %v3172
    %v3177 = vmul.f32 %v3167, %v3173
    %v3178 = vmul.f32 %v3169, %v3174
    %v3179 = vmul.f32 %v3175, 0.044715
    %v3180 = vmul.f32 %v3176, 0.044715
    %v3181 = vmul.f32 %v3177, 0.044715
    %v3182 = vmul.f32 %v3178, 0.044715
    %v3183 = vadd.f32 %v3163, %v3179
    %v3184 = vadd.f32 %v3165, %v3180
    %v3185 = vadd.f32 %v3167, %v3181
    %v3186 = vadd.f32 %v3169, %v3182
    %v3187 = vmul.f32 %v3183, 0.7978846
    %v3188 = vmul.f32 %v3184, 0.7978846
    %v3189 = vmul.f32 %v3185, 0.7978846
    %v3190 = vmul.f32 %v3186, 0.7978846
    %v3191 = vtanh.pop %v3187
    %v3192 = vtanh.pop %v3188
    %v3193 = vtanh.pop %v3189
    %v3194 = vtanh.pop %v3190
    %v3195 = vadd.f32 %v3191, 1.0
    %v3196 = vadd.f32 %v3192, 1.0
    %v3197 = vadd.f32 %v3193, 1.0
    %v3198 = vadd.f32 %v3194, 1.0
    %v3199 = vmul.f32 %v3195, 0.5
    %v3200 = vmul.f32 %v3196, 0.5
    %v3201 = vmul.f32 %v3197, 0.5
    %v3202 = vmul.f32 %v3198, 0.5
    %v3203 = vmul.f32 %v3163, %v3199
    %v3204 = vmul.f32 %v3165, %v3200
    %v3205 = vmul.f32 %v3167, %v3201
    %v3206 = vmul.f32 %v3169, %v3202
    %v3207 = vpack.c.bf16 %v3205, %v3203
    %v3208 = vpack.c.bf16 %v3206, %v3204
    %s3209 = scalar_lea.vmem [#allocation13], 128
    %v3210 = vld [vmem:[%s3209] sm:$0xf]
    %v3211 = vld [vmem:[%s3209 + $0x4] sm:$0xf]
    %v3212 = vld [vmem:[%s3209 + $0x8] sm:$0xf]
    %v3213 = vld [vmem:[%s3209 + $0xc] sm:$0xf]
    %v3214 = vld [vmem:[%s3209 + $0x10] sm:$0xf]
    %v3215 = vld [vmem:[%s3209 + $0x14] sm:$0xf]
    %v3216 = vld [vmem:[%s3209 + $0x18] sm:$0xf]
    %v3217 = vld [vmem:[%s3209 + $0x1c] sm:$0xf]
    %v3218 = vld [vmem:[%s3209 + $0x20] sm:$0xf]
    %v3219 = vld [vmem:[%s3209 + $0x24] sm:$0xf]
    %v3220 = vld [vmem:[%s3209 + $0x28] sm:$0xf]
    %v3221 = vld [vmem:[%s3209 + $0x2c] sm:$0xf]
    %v3222 = vld [vmem:[%s3209 + $0x30] sm:$0xf]
    %v3223 = vld [vmem:[%s3209 + $0x34] sm:$0xf]
    %v3224 = vld [vmem:[%s3209 + $0x38] sm:$0xf]
    %v3225 = vld [vmem:[%s3209 + $0x3c] sm:$0xf]
    %v3226 = vld [vmem:[%s3209 + $0x40] sm:$0xf]
    %v3227 = vld [vmem:[%s3209 + $0x44] sm:$0xf]
    %v3228 = vld [vmem:[%s3209 + $0x48] sm:$0xf]
    %v3229 = vld [vmem:[%s3209 + $0x4c] sm:$0xf]
    %v3230 = vld [vmem:[%s3209 + $0x50] sm:$0xf]
    %v3231 = vld [vmem:[%s3209 + $0x54] sm:$0xf]
    %v3232 = vld [vmem:[%s3209 + $0x58] sm:$0xf]
    %v3233 = vld [vmem:[%s3209 + $0x5c] sm:$0xf]
    %v3234 = vld [vmem:[%s3209 + $0x60] sm:$0xf]
    %v3235 = vld [vmem:[%s3209 + $0x64] sm:$0xf]
    %v3236 = vld [vmem:[%s3209 + $0x68] sm:$0xf]
    %v3237 = vld [vmem:[%s3209 + $0x6c] sm:$0xf]
    %v3238 = vld [vmem:[%s3209 + $0x70] sm:$0xf]
    %v3239 = vld [vmem:[%s3209 + $0x74] sm:$0xf]
    %v3240 = vld [vmem:[%s3209 + $0x78] sm:$0xf]
    %v3241 = vld [vmem:[%s3209 + $0x7c] sm:$0xf]
    %v3242 = vlaneseq
    %v3243 = vshrl.u32 %v3242, 7
    %v3244 = vsub.s32 3, %v3243
    %v3245 = vrot.slane %v1783, %v3244
    %v3278 = vunpack.c.l.b16 %v3210
    %v3279 = vunpack.c.l.b16 %v3211
    %v3280 = vunpack.c.l.b16 %v3212
    %v3281 = vunpack.c.l.b16 %v3213
    %v3282 = vunpack.c.l.b16 %v3214
    %v3283 = vunpack.c.l.b16 %v3215
    %v3284 = vunpack.c.l.b16 %v3216
    %v3285 = vunpack.c.l.b16 %v3217
    %v3286 = vunpack.c.l.b16 %v3218
    %v3287 = vunpack.c.l.b16 %v3219
    %v3288 = vunpack.c.l.b16 %v3220
    %v3289 = vunpack.c.l.b16 %v3221
    %v3290 = vunpack.c.l.b16 %v3222
    %v3291 = vunpack.c.l.b16 %v3223
    %v3292 = vunpack.c.l.b16 %v3224
    %v3293 = vunpack.c.l.b16 %v3225
    %v3294 = vunpack.c.l.b16 %v3226
    %v3295 = vunpack.c.l.b16 %v3227
    %v3296 = vunpack.c.l.b16 %v3228
    %v3297 = vunpack.c.l.b16 %v3229
    %v3298 = vunpack.c.l.b16 %v3230
    %v3299 = vunpack.c.l.b16 %v3231
    %v3300 = vunpack.c.l.b16 %v3232
    %v3301 = vunpack.c.l.b16 %v3233
    %v3302 = vunpack.c.l.b16 %v3234
    %v3303 = vunpack.c.l.b16 %v3235
    %v3304 = vunpack.c.l.b16 %v3236
    %v3305 = vunpack.c.l.b16 %v3237
    %v3306 = vunpack.c.l.b16 %v3238
    %v3307 = vunpack.c.l.b16 %v3239
    %v3308 = vunpack.c.l.b16 %v3240
    %v3309 = vunpack.c.l.b16 %v3241
    %v3310 = vpack.c.b16 %v3279, %v3278
    %v3311 = vpack.c.b16 %v3281, %v3280
    %v3312 = vpack.c.b16 %v3283, %v3282
    %v3313 = vpack.c.b16 %v3285, %v3284
    %v3314 = vpack.c.b16 %v3287, %v3286
    %v3315 = vpack.c.b16 %v3289, %v3288
    %v3316 = vpack.c.b16 %v3291, %v3290
    %v3317 = vpack.c.b16 %v3293, %v3292
    %v3318 = vpack.c.b16 %v3295, %v3294
    %v3319 = vpack.c.b16 %v3297, %v3296
    %v3320 = vpack.c.b16 %v3299, %v3298
    %v3321 = vpack.c.b16 %v3301, %v3300
    %v3322 = vpack.c.b16 %v3303, %v3302
    %v3323 = vpack.c.b16 %v3305, %v3304
    %v3324 = vpack.c.b16 %v3307, %v3306
    %v3325 = vpack.c.b16 %v3309, %v3308
    %3342 = vmatprep.subr.bf16.mxu0 0
    %3343 = vmatpush1.bf16.msra.mxu0 %v3317
    %3344 = vmatprep.subr.bf16.mxu0 0
    %3345 = vmatpush1.bf16.msra.mxu0 %v3316
    %3346 = vmatprep.subr.bf16.mxu0 0
    %3347 = vmatpush1.bf16.msra.mxu0 %v3315
    %3348 = vmatprep.subr.bf16.mxu0 0
    %3349 = vmatpush1.bf16.msra.mxu0 %v3314
    %3350 = vmatprep.subr.bf16.mxu0 0
    %3351 = vmatpush1.bf16.msra.mxu0 %v3313
    %3352 = vmatprep.subr.bf16.mxu0 0
    %3353 = vmatpush1.bf16.msra.mxu0 %v3312
    %3354 = vmatprep.subr.bf16.mxu0 0
    %3355 = vmatpush1.bf16.msra.mxu0 %v3311
    %3356 = vmatprep.subr.bf16.mxu0 0
    %3357 = vmatpush1.bf16.msra.mxu0 %v3310
    %3358 = vmatprep.subr.bf16.mxu0 0
    %3359 = vmatpush2.bf16.msra.mxu0 %v3325
    %3360 = vmatprep.subr.bf16.mxu0 0
    %3361 = vmatpush2.bf16.msra.mxu0 %v3324
    %3362 = vmatprep.subr.bf16.mxu0 0
    %3363 = vmatpush2.bf16.msra.mxu0 %v3323
    %3364 = vmatprep.subr.bf16.mxu0 0
    %3365 = vmatpush2.bf16.msra.mxu0 %v3322
    %3366 = vmatprep.subr.bf16.mxu0 0
    %3367 = vmatpush2.bf16.msra.mxu0 %v3321
    %3368 = vmatprep.subr.bf16.mxu0 0
    %3369 = vmatpush2.bf16.msra.mxu0 %v3320
    %3370 = vmatprep.subr.bf16.mxu0 0
    %3371 = vmatpush2.bf16.msra.mxu0 %v3319
    %3372 = vmatprep.subr.bf16.mxu0 0
    %3373 = vmatpush2.bf16.msra.mxu0 %v3318
    %3374 = vmatprep.mubr.bf16.mxu0 %v3208
    %3375 = vmatmul.mubr.bf16.gmra.mxu0 %v3207
    %v3376 = vpop.f32.mrf.mxu0
    %v3377 = vadd.f32 %v3245, %v3376
    %v3378 = vpop.f32.mrf.mxu0
    %v3379 = vpop.f32.mrf.mxu0
    %v3380 = vadd.f32 %v3245, %v3379
    %v3381 = vpop.f32.mrf.mxu0
    %3382 = vdwg.mxu0
    %v3383 = vadd.f32 %v3015, %v3377
    %v3384 = vadd.f32 %v3016, %v3380
    %3385 = vadd.xlane.f32.xlu0 %v3383
    %v3386 = vpop.xlane.xlu0 %3385
    %3387 = vadd.xlane.f32.xlu0 %v3384
    %v3388 = vpop.xlane.xlu0 %3387
    %v3389 = vmul.f32 %v3386, %v1352
    %v3390 = vmul.f32 %v3388, %v1352
    %v3391 = vsub.f32 %v3383, %v3389
    %v3392 = vsub.f32 %v3384, %v3390
    %v3393 = vmul.f32 %v3391, %v3391
    %v3394 = vmul.f32 %v3392, %v3392
    %3395 = vadd.xlane.f32.xlu0 %v3393
    %v3396 = vpop.xlane.xlu0 %3395
    %3397 = vadd.xlane.f32.xlu0 %v3394
    %v3398 = vpop.xlane.xlu0 %3397
    %v3399 = vmul.f32 %v3396, %v1352
    %v3400 = vmul.f32 %v3398, %v1352
    %v3401 = vadd.f32 %v3399, 1e-12
    %v3402 = vadd.f32 %v3400, 1e-12
    %v3403 = vrsqrt.pop %v3401
    %v3404 = vrsqrt.pop %v3402
    %v3405 = vmul.f32 %v3391, %v3403
    %v3406 = vmul.f32 %v3392, %v3404
    %v3407 = vlaneseq
    %v3408 = vshrl.u32 %v3407, 7
    %v3409 = vsub.s32 4, %v3408
    %v3410 = vrot.slane %v1783, %v3409
    %v3411 = vmul.f32 %v3405, %v3410
    %v3412 = vmul.f32 %v3406, %v3410
    %v3413 = vlaneseq
    %v3414 = vshrl.u32 %v3413, 7
    %v3415 = vsub.s32 5, %v3414
    %v3416 = vrot.slane %v1783, %v3415
    %v3417 = vadd.f32 %v3411, %v3416
    %v3418 = vadd.f32 %v3412, %v3416
    %3419 = vst [vmem:[#allocation16] sm:$0xff] %v3417
    %3420 = vst [vmem:[#allocation16 + $0x8] sm:$0xff] %v3418
    // Predicated region
    $region70: #{tpu_custom_call.1} parent=1 // pred_check
      _
    $region71: #{tpu_custom_call.1} parent=1 // pred_check_branch
      %3422 = sbr.rel (0) target = $region73
    $region72: #{tpu_custom_call.1} parent=1 // pred_region
      %s3424 = ssub.s32 256, 256
      %3425 = vsyncadd [#allocation4], %s3424
      %s3426 = sshll.u32 [#allocation16], 4
      %s3427 = int_to_ptr.vmem [resolvable:$true] %s3426
      %3432 = dma.vmem_to_hbm [thread:$0]  %s3427, 256, %s9, [#allocation4], 128, 128, 8
    $region73: #{tpu_custom_call.1} parent=1 // pred_fallthru
      _
    // Predicated region
    $region74: #{tpu_custom_call.1} parent=1 // pred_check
      _
    $region75: #{tpu_custom_call.1} parent=1 // pred_check_branch
      %3434 = sbr.rel (0) target = $region77
    $region76: #{tpu_custom_call.1} parent=1 // pred_region
      %3435 = dma.done [#allocation4], 256
    $region77: #{tpu_custom_call.1} parent=1 // pred_fallthru
      _
    %3436 = vsyncpa [#allocation3], 1
    %3437 = vsyncpa [#allocation6], 1
    %3438 = vsyncpa [#allocation9], 1
    %3439 = vsyncpa [#allocation12], 1
    %3440 = vsyncpa [#allocation15], 1
    %3441 = vsyncpa [#allocation4], 1

</llo_original>
